<compile_context>
chip_gen: v7x
topology: tpu7x:2x2x1
jax: 0.10.0
libtpu: 0.0.40
codegen_flags: <defaults>
</compile_context>

<pallas_src>
import functools

import jax
import jax.numpy as jnp
from jax.experimental import pallas as pl
from jax.experimental.pallas import tpu as pltpu


# ----------------------------------------------------------------------------
# Fused forward kernel: everything stays in VMEM
# ----------------------------------------------------------------------------
def _fused_forward_kernel(
    # node features
    x_op_ref, x_tab_ref, x_col_ref,
    # dense adjacencies A[dst, src]
    adj_cb_ref, adj_sb_ref, adj_ob_ref, adj_ts_ref, adj_cs_ref,
    # global_mean_pool matrix P[graph, node]
    pool_ref,
    # input projection weights / biases
    w_in_op_ref, b_in_op_ref, w_in_tab_ref, b_in_tab_ref, w_in_col_ref, b_in_col_ref,
    # GraphConv weights: W_cat = [[W_root],[W_rel]] (2H, H), bias (1, H)
    w_cb_ref, b_cb_ref, w_sb_ref, b_sb_ref, w_ob_ref, b_ob_ref,
    w_ts_ref, b_ts_ref, w_cs_ref, b_cs_ref,
    # packed heads: columns [0:C] = lin_mem, [C:2C] = lin_time, rest zero
    w_head_ref, b_head_ref,
    # output
    out_ref,
    # VMEM scratch (persist across the layer loop)
    h_op_ref, h_tab_ref, h_col_ref,
    *, num_layers):
    f32 = jnp.float32

    def dot(a, b):
        return jnp.dot(a, b, preferred_element_type=f32)

    # ---- input node-type Linear projections -------------------------------
    h_op_ref[...] = dot(x_op_ref[...], w_in_op_ref[...]) + b_in_op_ref[...]
    h_tab_ref[...] = dot(x_tab_ref[...], w_in_tab_ref[...]) + b_in_tab_ref[...]
    h_col_ref[...] = dot(x_col_ref[...], w_in_col_ref[...]) + b_in_col_ref[...]

    # ---- one GraphConv relation, fused as a single K-concat matmul --------
    def graph_conv(adj_ref, h_src, h_dst, w_cat_ref, b_ref):
        agg = dot(adj_ref[...], h_src)                       # sum_{j->i} h_src_j
        cat = jnp.concatenate([h_dst, agg], axis=-1)         # [h_dst | agg]
        return dot(cat, w_cat_ref[...]) + b_ref[...]         # @ [[W_root],[W_rel]] + b

    # ---- num_layers of HeteroConv(aggr='sum') + ReLU (same weights reused) -
    def layer(_, carry):
        h_op = h_op_ref[...]
        h_tab = h_tab_ref[...]
        h_col = h_col_ref[...]
        # destination = operator: sum of three relations
        op_out = graph_conv(adj_cb_ref, h_op, h_op, w_cb_ref, b_cb_ref)
        op_out = op_out + graph_conv(adj_sb_ref, h_tab, h_op, w_sb_ref, b_sb_ref)
        op_out = op_out + graph_conv(adj_ob_ref, h_col, h_op, w_ob_ref, b_ob_ref)
        # destination = table / column: self-loop relations
        tab_out = graph_conv(adj_ts_ref, h_tab, h_tab, w_ts_ref, b_ts_ref)
        col_out = graph_conv(adj_cs_ref, h_col, h_col, w_cs_ref, b_cs_ref)
        # ReLU applied after the HeteroConv sum (matches the PyTorch module)
        h_op_ref[...] = jnp.maximum(op_out, 0.0)
        h_tab_ref[...] = jnp.maximum(tab_out, 0.0)
        h_col_ref[...] = jnp.maximum(col_out, 0.0)
        return carry

    jax.lax.fori_loop(0, num_layers, layer, 0, unroll=True)

    # ---- global_mean_pool + both heads in one lane-dense matmul ------------
    emb = dot(pool_ref[...], h_op_ref[...])                  # (G, H)
    out_ref[...] = dot(emb, w_head_ref[...]) + b_head_ref[...]


# ----------------------------------------------------------------------------
# Host-side wrapper: pad to TPU-friendly shapes, pack weights, one pallas_call
# ----------------------------------------------------------------------------
def _ru(x, m):
    return ((x + m - 1) // m) * m


def _pad_to(a, rows, cols):
    a = a.astype(jnp.float32)
    return jnp.pad(a, ((0, rows - a.shape[0]), (0, cols - a.shape[1])))


def hetero_forward(params, x_dict, adj_dict, pool_mat, num_layers):
    # TODO(synk): the PyTorch module's empty-node-type branch (shape[0] == 0)
    # is not handled; this dense-padded formulation assumes non-empty types.
    f32 = jnp.float32
    hidden = params["conv_calledby"]["w_rel"].shape[0]
    out_c = params["lin_mem"]["w"].shape[1]

    n_op, f_op = x_dict["operator"].shape
    n_tab, f_tab = x_dict["table"].shape
    n_col, f_col = x_dict["column"].shape
    n_g = pool_mat.shape[0]

    LANE, SUB = 128, 8
    H = _ru(hidden, LANE)
    NOP, NTAB, NCOL = _ru(n_op, SUB), _ru(n_tab, SUB), _ru(n_col, SUB)
    NG = _ru(n_g, SUB)
    FOP, FTAB, FCOL = _ru(f_op, LANE), _ru(f_tab, LANE), _ru(f_col, LANE)
    HEADW = _ru(2 * out_c, LANE)

    # node features (zero-padded rows/cols are inert)
    x_op = _pad_to(x_dict["operator"], NOP, FOP)
    x_tab = _pad_to(x_dict["table"], NTAB, FTAB)
    x_col = _pad_to(x_dict["column"], NCOL, FCOL)

    # dense adjacencies A[dst, src] and pool matrix P[graph, node]
    adj_cb = _pad_to(adj_dict["calledby"], NOP, NOP)
    adj_sb = _pad_to(adj_dict["scannedby"], NOP, NTAB)
    adj_ob = _pad_to(adj_dict["outputby"], NOP, NCOL)
    adj_ts = _pad_to(adj_dict["tab_selfloop"], NTAB, NTAB)
    adj_cs = _pad_to(adj_dict["col_selfloop"], NCOL, NCOL)
    pool = _pad_to(pool_mat, NG, NOP)

    # input projection weights
    def lin_w(p, k_pad):
        return (_pad_to(p["w"], k_pad, H),
                _pad_to(p["b"].reshape(1, -1), 1, H))

    w_in_op, b_in_op = lin_w(params["lin_operator"], FOP)
    w_in_tab, b_in_tab = lin_w(params["lin_table"], FTAB)
    w_in_col, b_in_col = lin_w(params["lin_column"], FCOL)

    # GraphConv weights packed for the K-concat matmul: rows [W_root ; W_rel]
    def conv_w(p):
        w_root = _pad_to(p["w_root"], H, H)
        w_rel = _pad_to(p["w_rel"], H, H)
        w_cat = jnp.concatenate([w_root, w_rel], axis=0)     # (2H, H)
        b = _pad_to(p["b_rel"].reshape(1, -1), 1, H)
        return w_cat, b

    w_cb, b_cb = conv_w(params["conv_calledby"])
    w_sb, b_sb = conv_w(params["conv_scannedby"])
    w_ob, b_ob = conv_w(params["conv_outputby"])
    w_ts, b_ts = conv_w(params["conv_tab_selfloop"])
    w_cs, b_cs = conv_w(params["conv_col_selfloop"])

    # both heads packed into one lane-dense weight/bias
    w_head = jnp.zeros((H, HEADW), f32)
    w_head = w_head.at[:hidden, :out_c].set(params["lin_mem"]["w"].astype(f32))
    w_head = w_head.at[:hidden, out_c:2 * out_c].set(params["lin_time"]["w"].astype(f32))
    b_head = jnp.zeros((1, HEADW), f32)
    b_head = b_head.at[0, :out_c].set(params["lin_mem"]["b"].astype(f32))
    b_head = b_head.at[0, out_c:2 * out_c].set(params["lin_time"]["b"].astype(f32))

    inputs = (x_op, x_tab, x_col,
              adj_cb, adj_sb, adj_ob, adj_ts, adj_cs,
              pool,
              w_in_op, b_in_op, w_in_tab, b_in_tab, w_in_col, b_in_col,
              w_cb, b_cb, w_sb, b_sb, w_ob, b_ob, w_ts, b_ts, w_cs, b_cs,
              w_head, b_head)

    out = pl.pallas_call(
        functools.partial(_fused_forward_kernel, num_layers=num_layers),
        out_shape=jax.ShapeDtypeStruct((NG, HEADW), f32),
        in_specs=[pl.BlockSpec(memory_space=pltpu.MemorySpace.VMEM)
                  for _ in inputs],
        out_specs=pl.BlockSpec(memory_space=pltpu.MemorySpace.VMEM),
        scratch_shapes=[
            pltpu.VMEM((NOP, H), f32),
            pltpu.VMEM((NTAB, H), f32),
            pltpu.VMEM((NCOL, H), f32),
        ],
    )(*inputs)

    mem_pred = out[:n_g, :out_c]
    time_pred = out[:n_g, out_c:2 * out_c]
    return jnp.squeeze(mem_pred), jnp.squeeze(time_pred)


# ----------------------------------------------------------------------------
# Pure-JAX reference (for numerical sanity check)
# ----------------------------------------------------------------------------
def ref_forward(params, x_dict, adj_dict, pool_mat, num_layers):
    def lin(x, p):
        return x @ p["w"] + p["b"]

    def gc(adj, xs, xd, p):
        return (adj @ xs) @ p["w_rel"] + p["b_rel"] + xd @ p["w_root"]

    h_op = lin(x_dict["operator"], params["lin_operator"])
    h_tab = lin(x_dict["table"], params["lin_table"])
    h_col = lin(x_dict["column"], params["lin_column"])
    for _ in range(num_layers):
        op_out = (gc(adj_dict["calledby"], h_op, h_op, params["conv_calledby"])
                  + gc(adj_dict["scannedby"], h_tab, h_op, params["conv_scannedby"])
                  + gc(adj_dict["outputby"], h_col, h_op, params["conv_outputby"]))
        tab_out = gc(adj_dict["tab_selfloop"], h_tab, h_tab, params["conv_tab_selfloop"])
        col_out = gc(adj_dict["col_selfloop"], h_col, h_col, params["conv_col_selfloop"])
        h_op = jax.nn.relu(op_out)
        h_tab = jax.nn.relu(tab_out)
        h_col = jax.nn.relu(col_out)
    emb = pool_mat @ h_op
    return (jnp.squeeze(emb @ params["lin_mem"]["w"] + params["lin_mem"]["b"]),
            jnp.squeeze(emb @ params["lin_time"]["w"] + params["lin_time"]["b"]))


# ----------------------------------------------------------------------------
# Deterministic parameter / input construction
# ----------------------------------------------------------------------------
def init_linear(key, fan_in, fan_out):
    k1, k2 = jax.random.split(key)
    bound = 1.0 / (fan_in ** 0.5)
    w = jax.random.uniform(k1, (fan_in, fan_out), jnp.float32, -bound, bound)
    b = jax.random.uniform(k2, (fan_out,), jnp.float32, -bound, bound)
    return {"w": w, "b": b}


def init_graphconv(key, hidden):
    k1, k2 = jax.random.split(key)
    rel = init_linear(k1, hidden, hidden)          # lin_rel (with bias)
    bound = 1.0 / (hidden ** 0.5)
    w_root = jax.random.uniform(k2, (hidden, hidden), jnp.float32, -bound, bound)
    return {"w_rel": rel["w"], "b_rel": rel["b"], "w_root": w_root}


def dense_adj(src, dst, n_src, n_dst):
    a = jnp.zeros((n_dst, n_src), jnp.float32)
    return a.at[dst, src].add(1.0)


if __name__ == "__main__":
    # Small synthetic problem (encode_table_column=True)
    num_operator_features, num_table_features, num_column_features = 12, 6, 5
    hidden_channels, out_channels, num_layers = 32, 1, 2
    n_op, n_tab, n_col, num_graphs = 16, 8, 12, 2

    key = jax.random.PRNGKey(0)
    keys = jax.random.split(key, 16)

    params = {
        "lin_operator": init_linear(keys[0], num_operator_features, hidden_channels),
        "lin_table": init_linear(keys[1], num_table_features, hidden_channels),
        "lin_column": init_linear(keys[2], num_column_features, hidden_channels),
        "conv_calledby": init_graphconv(keys[3], hidden_channels),
        "conv_scannedby": init_graphconv(keys[4], hidden_channels),
        "conv_outputby": init_graphconv(keys[5], hidden_channels),
        "conv_tab_selfloop": init_graphconv(keys[6], hidden_channels),
        "conv_col_selfloop": init_graphconv(keys[7], hidden_channels),
        "lin_mem": init_linear(keys[8], hidden_channels, out_channels),
        "lin_time": init_linear(keys[9], hidden_channels, out_channels),
    }

    x_dict = {
        "operator": jax.random.normal(keys[10], (n_op, num_operator_features), jnp.float32),
        "table": jax.random.normal(keys[11], (n_tab, num_table_features), jnp.float32),
        "column": jax.random.normal(keys[12], (n_col, num_column_features), jnp.float32),
    }

    # Deterministic edge_index_dict, turned into dense adjacencies A[dst, src]
    op_chain_src = jnp.arange(n_op - 1)
    op_chain_dst = jnp.arange(1, n_op)
    tab_src = jnp.arange(n_tab)
    tab_dst = (jnp.arange(n_tab) * 2) % n_op
    col_src = jnp.arange(n_col)
    col_dst = jnp.arange(n_col) % n_op
    adj_dict = {
        "calledby": dense_adj(op_chain_src, op_chain_dst, n_op, n_op),
        "scannedby": dense_adj(tab_src, tab_dst, n_tab, n_op),
        "outputby": dense_adj(col_src, col_dst, n_col, n_op),
        "tab_selfloop": dense_adj(jnp.arange(n_tab), jnp.arange(n_tab), n_tab, n_tab),
        "col_selfloop": dense_adj(jnp.arange(n_col), jnp.arange(n_col), n_col, n_col),
    }

    # batch_operator -> global_mean_pool matrix P[graph, node] = 1/count
    batch_operator = jnp.concatenate(
        [jnp.zeros(n_op // 2, jnp.int32), jnp.ones(n_op - n_op // 2, jnp.int32)])
    onehot = (batch_operator[None, :] == jnp.arange(num_graphs)[:, None]).astype(jnp.float32)
    counts = jnp.maximum(onehot.sum(axis=1, keepdims=True), 1.0)
    pool_mat = onehot / counts

    fwd = jax.jit(functools.partial(hetero_forward, num_layers=num_layers))
    mem_pred, time_pred = fwd(params, x_dict, adj_dict, pool_mat)
    mem_pred = jax.block_until_ready(mem_pred)
    time_pred = jax.block_until_ready(time_pred)

    # sanity check against pure-JAX reference
    mem_ref, time_ref = ref_forward(params, x_dict, adj_dict, pool_mat, num_layers)
    assert mem_pred.shape == (num_graphs,) and time_pred.shape == (num_graphs,)
    assert jnp.allclose(mem_pred, mem_ref, atol=1e-4, rtol=1e-4)
    assert jnp.allclose(time_pred, time_ref, atol=1e-4, rtol=1e-4)

    print("KERNEL_OK")
</pallas_src>

<mosaic_0001>
module attributes {stable_mosaic.version = 11 : i64} {
  func.func @_fused_forward_kernel(%arg0: memref<16x128xf32, #tpu.memory_space<vmem>>, %arg1: memref<8x128xf32, #tpu.memory_space<vmem>>, %arg2: memref<16x128xf32, #tpu.memory_space<vmem>>, %arg3: memref<16x16xf32, #tpu.memory_space<vmem>>, %arg4: memref<16x8xf32, #tpu.memory_space<vmem>>, %arg5: memref<16x16xf32, #tpu.memory_space<vmem>>, %arg6: memref<8x8xf32, #tpu.memory_space<vmem>>, %arg7: memref<16x16xf32, #tpu.memory_space<vmem>>, %arg8: memref<8x16xf32, #tpu.memory_space<vmem>>, %arg9: memref<128x128xf32, #tpu.memory_space<vmem>>, %arg10: memref<1x128xf32, #tpu.memory_space<vmem>>, %arg11: memref<128x128xf32, #tpu.memory_space<vmem>>, %arg12: memref<1x128xf32, #tpu.memory_space<vmem>>, %arg13: memref<128x128xf32, #tpu.memory_space<vmem>>, %arg14: memref<1x128xf32, #tpu.memory_space<vmem>>, %arg15: memref<256x128xf32, #tpu.memory_space<vmem>>, %arg16: memref<1x128xf32, #tpu.memory_space<vmem>>, %arg17: memref<256x128xf32, #tpu.memory_space<vmem>>, %arg18: memref<1x128xf32, #tpu.memory_space<vmem>>, %arg19: memref<256x128xf32, #tpu.memory_space<vmem>>, %arg20: memref<1x128xf32, #tpu.memory_space<vmem>>, %arg21: memref<256x128xf32, #tpu.memory_space<vmem>>, %arg22: memref<1x128xf32, #tpu.memory_space<vmem>>, %arg23: memref<256x128xf32, #tpu.memory_space<vmem>>, %arg24: memref<1x128xf32, #tpu.memory_space<vmem>>, %arg25: memref<128x128xf32, #tpu.memory_space<vmem>>, %arg26: memref<1x128xf32, #tpu.memory_space<vmem>>, %arg27: memref<8x128xf32, #tpu.memory_space<vmem>>, %arg28: memref<16x128xf32, #tpu.memory_space<vmem>>, %arg29: memref<8x128xf32, #tpu.memory_space<vmem>>, %arg30: memref<16x128xf32, #tpu.memory_space<vmem>>) attributes {dimension_semantics = [], scalar_prefetch = 0 : i64, scratch_operands = 3 : i64, tpu.core_type = #tpu.core_type<tc>} {
    %c0 = arith.constant 0 : index
    %c0_0 = arith.constant 0 : index
    %0 = vector.load %arg0[%c0, %c0_0] : memref<16x128xf32, #tpu.memory_space<vmem>>, vector<16x128xf32>
    %c0_1 = arith.constant 0 : index
    %c0_2 = arith.constant 0 : index
    %1 = vector.load %arg9[%c0_1, %c0_2] : memref<128x128xf32, #tpu.memory_space<vmem>>, vector<128x128xf32>
    %cst = arith.constant dense<0.000000e+00> : vector<16x128xf32>
    %2 = tpu.matmul %0, %1, %cst {dimension_numbers = #tpu.dot_dimension_numbers<[1], [0], [0], [1], [0, 0, 1, 1], [], []>} : vector<16x128xf32>, vector<128x128xf32>, vector<16x128xf32> -> vector<16x128xf32>
    %c0_3 = arith.constant 0 : index
    %c0_4 = arith.constant 0 : index
    %3 = vector.load %arg10[%c0_3, %c0_4] : memref<1x128xf32, #tpu.memory_space<vmem>>, vector<1x128xf32>
    %4 = vector.broadcast %3 : vector<1x128xf32> to vector<16x128xf32>
    %5 = arith.addf %2, %4 : vector<16x128xf32>
    %c0_5 = arith.constant 0 : index
    %c0_6 = arith.constant 0 : index
    %6 = vector.load %arg28[%c0_5, %c0_6] : memref<16x128xf32, #tpu.memory_space<vmem>>, vector<16x128xf32>
    tpu.vector_store %arg28[%c0_5, %c0_6], %5 {strides = array<i32>} : memref<16x128xf32, #tpu.memory_space<vmem>>, vector<16x128xf32>,
    %c0_7 = arith.constant 0 : index
    %c0_8 = arith.constant 0 : index
    %7 = vector.load %arg1[%c0_7, %c0_8] : memref<8x128xf32, #tpu.memory_space<vmem>>, vector<8x128xf32>
    %c0_9 = arith.constant 0 : index
    %c0_10 = arith.constant 0 : index
    %8 = vector.load %arg11[%c0_9, %c0_10] : memref<128x128xf32, #tpu.memory_space<vmem>>, vector<128x128xf32>
    %cst_11 = arith.constant dense<0.000000e+00> : vector<8x128xf32>
    %9 = tpu.matmul %7, %8, %cst_11 {dimension_numbers = #tpu.dot_dimension_numbers<[1], [0], [0], [1], [0, 0, 1, 1], [], []>} : vector<8x128xf32>, vector<128x128xf32>, vector<8x128xf32> -> vector<8x128xf32>
    %c0_12 = arith.constant 0 : index
    %c0_13 = arith.constant 0 : index
    %10 = vector.load %arg12[%c0_12, %c0_13] : memref<1x128xf32, #tpu.memory_space<vmem>>, vector<1x128xf32>
    %11 = vector.broadcast %10 : vector<1x128xf32> to vector<8x128xf32>
    %12 = arith.addf %9, %11 : vector<8x128xf32>
    %c0_14 = arith.constant 0 : index
    %c0_15 = arith.constant 0 : index
    %13 = vector.load %arg29[%c0_14, %c0_15] : memref<8x128xf32, #tpu.memory_space<vmem>>, vector<8x128xf32>
    tpu.vector_store %arg29[%c0_14, %c0_15], %12 {strides = array<i32>} : memref<8x128xf32, #tpu.memory_space<vmem>>, vector<8x128xf32>,
    %c0_16 = arith.constant 0 : index
    %c0_17 = arith.constant 0 : index
    %14 = vector.load %arg2[%c0_16, %c0_17] : memref<16x128xf32, #tpu.memory_space<vmem>>, vector<16x128xf32>
    %c0_18 = arith.constant 0 : index
    %c0_19 = arith.constant 0 : index
    %15 = vector.load %arg13[%c0_18, %c0_19] : memref<128x128xf32, #tpu.memory_space<vmem>>, vector<128x128xf32>
    %cst_20 = arith.constant dense<0.000000e+00> : vector<16x128xf32>
    %16 = tpu.matmul %14, %15, %cst_20 {dimension_numbers = #tpu.dot_dimension_numbers<[1], [0], [0], [1], [0, 0, 1, 1], [], []>} : vector<16x128xf32>, vector<128x128xf32>, vector<16x128xf32> -> vector<16x128xf32>
    %c0_21 = arith.constant 0 : index
    %c0_22 = arith.constant 0 : index
    %17 = vector.load %arg14[%c0_21, %c0_22] : memref<1x128xf32, #tpu.memory_space<vmem>>, vector<1x128xf32>
    %18 = vector.broadcast %17 : vector<1x128xf32> to vector<16x128xf32>
    %19 = arith.addf %16, %18 : vector<16x128xf32>
    %c0_23 = arith.constant 0 : index
    %c0_24 = arith.constant 0 : index
    %20 = vector.load %arg30[%c0_23, %c0_24] : memref<16x128xf32, #tpu.memory_space<vmem>>, vector<16x128xf32>
    tpu.vector_store %arg30[%c0_23, %c0_24], %19 {strides = array<i32>} : memref<16x128xf32, #tpu.memory_space<vmem>>, vector<16x128xf32>,
    %c0_i32 = arith.constant 0 : i32
    %c0_25 = arith.constant 0 : index
    %c0_26 = arith.constant 0 : index
    %21 = vector.load %arg28[%c0_25, %c0_26] : memref<16x128xf32, #tpu.memory_space<vmem>>, vector<16x128xf32>
    %c0_27 = arith.constant 0 : index
    %c0_28 = arith.constant 0 : index
    %22 = vector.load %arg29[%c0_27, %c0_28] : memref<8x128xf32, #tpu.memory_space<vmem>>, vector<8x128xf32>
    %c0_29 = arith.constant 0 : index
    %c0_30 = arith.constant 0 : index
    %23 = vector.load %arg30[%c0_29, %c0_30] : memref<16x128xf32, #tpu.memory_space<vmem>>, vector<16x128xf32>
    %c0_31 = arith.constant 0 : index
    %c0_32 = arith.constant 0 : index
    %24 = vector.load %arg3[%c0_31, %c0_32] : memref<16x16xf32, #tpu.memory_space<vmem>>, vector<16x16xf32>
    %cst_33 = arith.constant dense<0.000000e+00> : vector<16x128xf32>
    %25 = tpu.matmul %24, %21, %cst_33 {dimension_numbers = #tpu.dot_dimension_numbers<[1], [0], [0], [1], [0, 0, 1, 1], [], []>} : vector<16x16xf32>, vector<16x128xf32>, vector<16x128xf32> -> vector<16x128xf32>
    %26 = tpu.concatenate %21, %25 in 1 : vector<16x128xf32>, vector<16x128xf32> -> vector<16x256xf32>
    %c0_34 = arith.constant 0 : index
    %c0_35 = arith.constant 0 : index
    %27 = vector.load %arg15[%c0_34, %c0_35] : memref<256x128xf32, #tpu.memory_space<vmem>>, vector<256x128xf32>
    %cst_36 = arith.constant dense<0.000000e+00> : vector<16x128xf32>
    %28 = tpu.matmul %26, %27, %cst_36 {dimension_numbers = #tpu.dot_dimension_numbers<[1], [0], [0], [1], [0, 0, 1, 1], [], []>} : vector<16x256xf32>, vector<256x128xf32>, vector<16x128xf32> -> vector<16x128xf32>
    %c0_37 = arith.constant 0 : index
    %c0_38 = arith.constant 0 : index
    %29 = vector.load %arg16[%c0_37, %c0_38] : memref<1x128xf32, #tpu.memory_space<vmem>>, vector<1x128xf32>
    %30 = vector.broadcast %29 : vector<1x128xf32> to vector<16x128xf32>
    %31 = arith.addf %28, %30 : vector<16x128xf32>
    %c0_39 = arith.constant 0 : index
    %c0_40 = arith.constant 0 : index
    %32 = vector.load %arg4[%c0_39, %c0_40] : memref<16x8xf32, #tpu.memory_space<vmem>>, vector<16x8xf32>
    %cst_41 = arith.constant dense<0.000000e+00> : vector<16x128xf32>
    %33 = tpu.matmul %32, %22, %cst_41 {dimension_numbers = #tpu.dot_dimension_numbers<[1], [0], [0], [1], [0, 0, 1, 1], [], []>} : vector<16x8xf32>, vector<8x128xf32>, vector<16x128xf32> -> vector<16x128xf32>
    %34 = tpu.concatenate %21, %33 in 1 : vector<16x128xf32>, vector<16x128xf32> -> vector<16x256xf32>
    %c0_42 = arith.constant 0 : index
    %c0_43 = arith.constant 0 : index
    %35 = vector.load %arg17[%c0_42, %c0_43] : memref<256x128xf32, #tpu.memory_space<vmem>>, vector<256x128xf32>
    %cst_44 = arith.constant dense<0.000000e+00> : vector<16x128xf32>
    %36 = tpu.matmul %34, %35, %cst_44 {dimension_numbers = #tpu.dot_dimension_numbers<[1], [0], [0], [1], [0, 0, 1, 1], [], []>} : vector<16x256xf32>, vector<256x128xf32>, vector<16x128xf32> -> vector<16x128xf32>
    %c0_45 = arith.constant 0 : index
    %c0_46 = arith.constant 0 : index
    %37 = vector.load %arg18[%c0_45, %c0_46] : memref<1x128xf32, #tpu.memory_space<vmem>>, vector<1x128xf32>
    %38 = vector.broadcast %37 : vector<1x128xf32> to vector<16x128xf32>
    %39 = arith.addf %36, %38 : vector<16x128xf32>
    %40 = arith.addf %31, %39 : vector<16x128xf32>
    %c0_47 = arith.constant 0 : index
    %c0_48 = arith.constant 0 : index
    %41 = vector.load %arg5[%c0_47, %c0_48] : memref<16x16xf32, #tpu.memory_space<vmem>>, vector<16x16xf32>
    %cst_49 = arith.constant dense<0.000000e+00> : vector<16x128xf32>
    %42 = tpu.matmul %41, %23, %cst_49 {dimension_numbers = #tpu.dot_dimension_numbers<[1], [0], [0], [1], [0, 0, 1, 1], [], []>} : vector<16x16xf32>, vector<16x128xf32>, vector<16x128xf32> -> vector<16x128xf32>
    %43 = tpu.concatenate %21, %42 in 1 : vector<16x128xf32>, vector<16x128xf32> -> vector<16x256xf32>
    %c0_50 = arith.constant 0 : index
    %c0_51 = arith.constant 0 : index
    %44 = vector.load %arg19[%c0_50, %c0_51] : memref<256x128xf32, #tpu.memory_space<vmem>>, vector<256x128xf32>
    %cst_52 = arith.constant dense<0.000000e+00> : vector<16x128xf32>
    %45 = tpu.matmul %43, %44, %cst_52 {dimension_numbers = #tpu.dot_dimension_numbers<[1], [0], [0], [1], [0, 0, 1, 1], [], []>} : vector<16x256xf32>, vector<256x128xf32>, vector<16x128xf32> -> vector<16x128xf32>
    %c0_53 = arith.constant 0 : index
    %c0_54 = arith.constant 0 : index
    %46 = vector.load %arg20[%c0_53, %c0_54] : memref<1x128xf32, #tpu.memory_space<vmem>>, vector<1x128xf32>
    %47 = vector.broadcast %46 : vector<1x128xf32> to vector<16x128xf32>
    %48 = arith.addf %45, %47 : vector<16x128xf32>
    %49 = arith.addf %40, %48 : vector<16x128xf32>
    %c0_55 = arith.constant 0 : index
    %c0_56 = arith.constant 0 : index
    %50 = vector.load %arg6[%c0_55, %c0_56] : memref<8x8xf32, #tpu.memory_space<vmem>>, vector<8x8xf32>
    %cst_57 = arith.constant dense<0.000000e+00> : vector<8x128xf32>
    %51 = tpu.matmul %50, %22, %cst_57 {dimension_numbers = #tpu.dot_dimension_numbers<[1], [0], [0], [1], [0, 0, 1, 1], [], []>} : vector<8x8xf32>, vector<8x128xf32>, vector<8x128xf32> -> vector<8x128xf32>
    %52 = tpu.concatenate %22, %51 in 1 : vector<8x128xf32>, vector<8x128xf32> -> vector<8x256xf32>
    %c0_58 = arith.constant 0 : index
    %c0_59 = arith.constant 0 : index
    %53 = vector.load %arg21[%c0_58, %c0_59] : memref<256x128xf32, #tpu.memory_space<vmem>>, vector<256x128xf32>
    %cst_60 = arith.constant dense<0.000000e+00> : vector<8x128xf32>
    %54 = tpu.matmul %52, %53, %cst_60 {dimension_numbers = #tpu.dot_dimension_numbers<[1], [0], [0], [1], [0, 0, 1, 1], [], []>} : vector<8x256xf32>, vector<256x128xf32>, vector<8x128xf32> -> vector<8x128xf32>
    %c0_61 = arith.constant 0 : index
    %c0_62 = arith.constant 0 : index
    %55 = vector.load %arg22[%c0_61, %c0_62] : memref<1x128xf32, #tpu.memory_space<vmem>>, vector<1x128xf32>
    %56 = vector.broadcast %55 : vector<1x128xf32> to vector<8x128xf32>
    %57 = arith.addf %54, %56 : vector<8x128xf32>
    %c0_63 = arith.constant 0 : index
    %c0_64 = arith.constant 0 : index
    %58 = vector.load %arg7[%c0_63, %c0_64] : memref<16x16xf32, #tpu.memory_space<vmem>>, vector<16x16xf32>
    %cst_65 = arith.constant dense<0.000000e+00> : vector<16x128xf32>
    %59 = tpu.matmul %58, %23, %cst_65 {dimension_numbers = #tpu.dot_dimension_numbers<[1], [0], [0], [1], [0, 0, 1, 1], [], []>} : vector<16x16xf32>, vector<16x128xf32>, vector<16x128xf32> -> vector<16x128xf32>
    %60 = tpu.concatenate %23, %59 in 1 : vector<16x128xf32>, vector<16x128xf32> -> vector<16x256xf32>
    %c0_66 = arith.constant 0 : index
    %c0_67 = arith.constant 0 : index
    %61 = vector.load %arg23[%c0_66, %c0_67] : memref<256x128xf32, #tpu.memory_space<vmem>>, vector<256x128xf32>
    %cst_68 = arith.constant dense<0.000000e+00> : vector<16x128xf32>
    %62 = tpu.matmul %60, %61, %cst_68 {dimension_numbers = #tpu.dot_dimension_numbers<[1], [0], [0], [1], [0, 0, 1, 1], [], []>} : vector<16x256xf32>, vector<256x128xf32>, vector<16x128xf32> -> vector<16x128xf32>
    %c0_69 = arith.constant 0 : index
    %c0_70 = arith.constant 0 : index
    %63 = vector.load %arg24[%c0_69, %c0_70] : memref<1x128xf32, #tpu.memory_space<vmem>>, vector<1x128xf32>
    %64 = vector.broadcast %63 : vector<1x128xf32> to vector<16x128xf32>
    %65 = arith.addf %62, %64 : vector<16x128xf32>
    %cst_71 = arith.constant 0.000000e+00 : f32
    %66 = vector.broadcast %cst_71 : f32 to vector<16x128xf32>
    %67 = arith.maximumf %49, %66 : vector<16x128xf32>
    %c0_72 = arith.constant 0 : index
    %c0_73 = arith.constant 0 : index
    %68 = vector.load %arg28[%c0_72, %c0_73] : memref<16x128xf32, #tpu.memory_space<vmem>>, vector<16x128xf32>
    tpu.vector_store %arg28[%c0_72, %c0_73], %67 {strides = array<i32>} : memref<16x128xf32, #tpu.memory_space<vmem>>, vector<16x128xf32>,
    %cst_74 = arith.constant 0.000000e+00 : f32
    %69 = vector.broadcast %cst_74 : f32 to vector<8x128xf32>
    %70 = arith.maximumf %57, %69 : vector<8x128xf32>
    %c0_75 = arith.constant 0 : index
    %c0_76 = arith.constant 0 : index
    %71 = vector.load %arg29[%c0_75, %c0_76] : memref<8x128xf32, #tpu.memory_space<vmem>>, vector<8x128xf32>
    tpu.vector_store %arg29[%c0_75, %c0_76], %70 {strides = array<i32>} : memref<8x128xf32, #tpu.memory_space<vmem>>, vector<8x128xf32>,
    %cst_77 = arith.constant 0.000000e+00 : f32
    %72 = vector.broadcast %cst_77 : f32 to vector<16x128xf32>
    %73 = arith.maximumf %65, %72 : vector<16x128xf32>
    %c0_78 = arith.constant 0 : index
    %c0_79 = arith.constant 0 : index
    %74 = vector.load %arg30[%c0_78, %c0_79] : memref<16x128xf32, #tpu.memory_space<vmem>>, vector<16x128xf32>
    tpu.vector_store %arg30[%c0_78, %c0_79], %73 {strides = array<i32>} : memref<16x128xf32, #tpu.memory_space<vmem>>, vector<16x128xf32>,
    %c1_i32 = arith.constant 1 : i32
    %c0_80 = arith.constant 0 : index
    %c0_81 = arith.constant 0 : index
    %75 = vector.load %arg28[%c0_80, %c0_81] : memref<16x128xf32, #tpu.memory_space<vmem>>, vector<16x128xf32>
    %c0_82 = arith.constant 0 : index
    %c0_83 = arith.constant 0 : index
    %76 = vector.load %arg29[%c0_82, %c0_83] : memref<8x128xf32, #tpu.memory_space<vmem>>, vector<8x128xf32>
    %c0_84 = arith.constant 0 : index
    %c0_85 = arith.constant 0 : index
    %77 = vector.load %arg30[%c0_84, %c0_85] : memref<16x128xf32, #tpu.memory_space<vmem>>, vector<16x128xf32>
    %c0_86 = arith.constant 0 : index
    %c0_87 = arith.constant 0 : index
    %78 = vector.load %arg3[%c0_86, %c0_87] : memref<16x16xf32, #tpu.memory_space<vmem>>, vector<16x16xf32>
    %cst_88 = arith.constant dense<0.000000e+00> : vector<16x128xf32>
    %79 = tpu.matmul %78, %75, %cst_88 {dimension_numbers = #tpu.dot_dimension_numbers<[1], [0], [0], [1], [0, 0, 1, 1], [], []>} : vector<16x16xf32>, vector<16x128xf32>, vector<16x128xf32> -> vector<16x128xf32>
    %80 = tpu.concatenate %75, %79 in 1 : vector<16x128xf32>, vector<16x128xf32> -> vector<16x256xf32>
    %c0_89 = arith.constant 0 : index
    %c0_90 = arith.constant 0 : index
    %81 = vector.load %arg15[%c0_89, %c0_90] : memref<256x128xf32, #tpu.memory_space<vmem>>, vector<256x128xf32>
    %cst_91 = arith.constant dense<0.000000e+00> : vector<16x128xf32>
    %82 = tpu.matmul %80, %81, %cst_91 {dimension_numbers = #tpu.dot_dimension_numbers<[1], [0], [0], [1], [0, 0, 1, 1], [], []>} : vector<16x256xf32>, vector<256x128xf32>, vector<16x128xf32> -> vector<16x128xf32>
    %c0_92 = arith.constant 0 : index
    %c0_93 = arith.constant 0 : index
    %83 = vector.load %arg16[%c0_92, %c0_93] : memref<1x128xf32, #tpu.memory_space<vmem>>, vector<1x128xf32>
    %84 = vector.broadcast %83 : vector<1x128xf32> to vector<16x128xf32>
    %85 = arith.addf %82, %84 : vector<16x128xf32>
    %c0_94 = arith.constant 0 : index
    %c0_95 = arith.constant 0 : index
    %86 = vector.load %arg4[%c0_94, %c0_95] : memref<16x8xf32, #tpu.memory_space<vmem>>, vector<16x8xf32>
    %cst_96 = arith.constant dense<0.000000e+00> : vector<16x128xf32>
    %87 = tpu.matmul %86, %76, %cst_96 {dimension_numbers = #tpu.dot_dimension_numbers<[1], [0], [0], [1], [0, 0, 1, 1], [], []>} : vector<16x8xf32>, vector<8x128xf32>, vector<16x128xf32> -> vector<16x128xf32>
    %88 = tpu.concatenate %75, %87 in 1 : vector<16x128xf32>, vector<16x128xf32> -> vector<16x256xf32>
    %c0_97 = arith.constant 0 : index
    %c0_98 = arith.constant 0 : index
    %89 = vector.load %arg17[%c0_97, %c0_98] : memref<256x128xf32, #tpu.memory_space<vmem>>, vector<256x128xf32>
    %cst_99 = arith.constant dense<0.000000e+00> : vector<16x128xf32>
    %90 = tpu.matmul %88, %89, %cst_99 {dimension_numbers = #tpu.dot_dimension_numbers<[1], [0], [0], [1], [0, 0, 1, 1], [], []>} : vector<16x256xf32>, vector<256x128xf32>, vector<16x128xf32> -> vector<16x128xf32>
    %c0_100 = arith.constant 0 : index
    %c0_101 = arith.constant 0 : index
    %91 = vector.load %arg18[%c0_100, %c0_101] : memref<1x128xf32, #tpu.memory_space<vmem>>, vector<1x128xf32>
    %92 = vector.broadcast %91 : vector<1x128xf32> to vector<16x128xf32>
    %93 = arith.addf %90, %92 : vector<16x128xf32>
    %94 = arith.addf %85, %93 : vector<16x128xf32>
    %c0_102 = arith.constant 0 : index
    %c0_103 = arith.constant 0 : index
    %95 = vector.load %arg5[%c0_102, %c0_103] : memref<16x16xf32, #tpu.memory_space<vmem>>, vector<16x16xf32>
    %cst_104 = arith.constant dense<0.000000e+00> : vector<16x128xf32>
    %96 = tpu.matmul %95, %77, %cst_104 {dimension_numbers = #tpu.dot_dimension_numbers<[1], [0], [0], [1], [0, 0, 1, 1], [], []>} : vector<16x16xf32>, vector<16x128xf32>, vector<16x128xf32> -> vector<16x128xf32>
    %97 = tpu.concatenate %75, %96 in 1 : vector<16x128xf32>, vector<16x128xf32> -> vector<16x256xf32>
    %c0_105 = arith.constant 0 : index
    %c0_106 = arith.constant 0 : index
    %98 = vector.load %arg19[%c0_105, %c0_106] : memref<256x128xf32, #tpu.memory_space<vmem>>, vector<256x128xf32>
    %cst_107 = arith.constant dense<0.000000e+00> : vector<16x128xf32>
    %99 = tpu.matmul %97, %98, %cst_107 {dimension_numbers = #tpu.dot_dimension_numbers<[1], [0], [0], [1], [0, 0, 1, 1], [], []>} : vector<16x256xf32>, vector<256x128xf32>, vector<16x128xf32> -> vector<16x128xf32>
    %c0_108 = arith.constant 0 : index
    %c0_109 = arith.constant 0 : index
    %100 = vector.load %arg20[%c0_108, %c0_109] : memref<1x128xf32, #tpu.memory_space<vmem>>, vector<1x128xf32>
    %101 = vector.broadcast %100 : vector<1x128xf32> to vector<16x128xf32>
    %102 = arith.addf %99, %101 : vector<16x128xf32>
    %103 = arith.addf %94, %102 : vector<16x128xf32>
    %c0_110 = arith.constant 0 : index
    %c0_111 = arith.constant 0 : index
    %104 = vector.load %arg6[%c0_110, %c0_111] : memref<8x8xf32, #tpu.memory_space<vmem>>, vector<8x8xf32>
    %cst_112 = arith.constant dense<0.000000e+00> : vector<8x128xf32>
    %105 = tpu.matmul %104, %76, %cst_112 {dimension_numbers = #tpu.dot_dimension_numbers<[1], [0], [0], [1], [0, 0, 1, 1], [], []>} : vector<8x8xf32>, vector<8x128xf32>, vector<8x128xf32> -> vector<8x128xf32>
    %106 = tpu.concatenate %76, %105 in 1 : vector<8x128xf32>, vector<8x128xf32> -> vector<8x256xf32>
    %c0_113 = arith.constant 0 : index
    %c0_114 = arith.constant 0 : index
    %107 = vector.load %arg21[%c0_113, %c0_114] : memref<256x128xf32, #tpu.memory_space<vmem>>, vector<256x128xf32>
    %cst_115 = arith.constant dense<0.000000e+00> : vector<8x128xf32>
    %108 = tpu.matmul %106, %107, %cst_115 {dimension_numbers = #tpu.dot_dimension_numbers<[1], [0], [0], [1], [0, 0, 1, 1], [], []>} : vector<8x256xf32>, vector<256x128xf32>, vector<8x128xf32> -> vector<8x128xf32>
    %c0_116 = arith.constant 0 : index
    %c0_117 = arith.constant 0 : index
    %109 = vector.load %arg22[%c0_116, %c0_117] : memref<1x128xf32, #tpu.memory_space<vmem>>, vector<1x128xf32>
    %110 = vector.broadcast %109 : vector<1x128xf32> to vector<8x128xf32>
    %111 = arith.addf %108, %110 : vector<8x128xf32>
    %c0_118 = arith.constant 0 : index
    %c0_119 = arith.constant 0 : index
    %112 = vector.load %arg7[%c0_118, %c0_119] : memref<16x16xf32, #tpu.memory_space<vmem>>, vector<16x16xf32>
    %cst_120 = arith.constant dense<0.000000e+00> : vector<16x128xf32>
    %113 = tpu.matmul %112, %77, %cst_120 {dimension_numbers = #tpu.dot_dimension_numbers<[1], [0], [0], [1], [0, 0, 1, 1], [], []>} : vector<16x16xf32>, vector<16x128xf32>, vector<16x128xf32> -> vector<16x128xf32>
    %114 = tpu.concatenate %77, %113 in 1 : vector<16x128xf32>, vector<16x128xf32> -> vector<16x256xf32>
    %c0_121 = arith.constant 0 : index
    %c0_122 = arith.constant 0 : index
    %115 = vector.load %arg23[%c0_121, %c0_122] : memref<256x128xf32, #tpu.memory_space<vmem>>, vector<256x128xf32>
    %cst_123 = arith.constant dense<0.000000e+00> : vector<16x128xf32>
    %116 = tpu.matmul %114, %115, %cst_123 {dimension_numbers = #tpu.dot_dimension_numbers<[1], [0], [0], [1], [0, 0, 1, 1], [], []>} : vector<16x256xf32>, vector<256x128xf32>, vector<16x128xf32> -> vector<16x128xf32>
    %c0_124 = arith.constant 0 : index
    %c0_125 = arith.constant 0 : index
    %117 = vector.load %arg24[%c0_124, %c0_125] : memref<1x128xf32, #tpu.memory_space<vmem>>, vector<1x128xf32>
    %118 = vector.broadcast %117 : vector<1x128xf32> to vector<16x128xf32>
    %119 = arith.addf %116, %118 : vector<16x128xf32>
    %cst_126 = arith.constant 0.000000e+00 : f32
    %120 = vector.broadcast %cst_126 : f32 to vector<16x128xf32>
    %121 = arith.maximumf %103, %120 : vector<16x128xf32>
    %c0_127 = arith.constant 0 : index
    %c0_128 = arith.constant 0 : index
    %122 = vector.load %arg28[%c0_127, %c0_128] : memref<16x128xf32, #tpu.memory_space<vmem>>, vector<16x128xf32>
    tpu.vector_store %arg28[%c0_127, %c0_128], %121 {strides = array<i32>} : memref<16x128xf32, #tpu.memory_space<vmem>>, vector<16x128xf32>,
    %cst_129 = arith.constant 0.000000e+00 : f32
    %123 = vector.broadcast %cst_129 : f32 to vector<8x128xf32>
    %124 = arith.maximumf %111, %123 : vector<8x128xf32>
    %c0_130 = arith.constant 0 : index
    %c0_131 = arith.constant 0 : index
    %125 = vector.load %arg29[%c0_130, %c0_131] : memref<8x128xf32, #tpu.memory_space<vmem>>, vector<8x128xf32>
    tpu.vector_store %arg29[%c0_130, %c0_131], %124 {strides = array<i32>} : memref<8x128xf32, #tpu.memory_space<vmem>>, vector<8x128xf32>,
    %cst_132 = arith.constant 0.000000e+00 : f32
    %126 = vector.broadcast %cst_132 : f32 to vector<16x128xf32>
    %127 = arith.maximumf %119, %126 : vector<16x128xf32>
    %c0_133 = arith.constant 0 : index
    %c0_134 = arith.constant 0 : index
    %128 = vector.load %arg30[%c0_133, %c0_134] : memref<16x128xf32, #tpu.memory_space<vmem>>, vector<16x128xf32>
    tpu.vector_store %arg30[%c0_133, %c0_134], %127 {strides = array<i32>} : memref<16x128xf32, #tpu.memory_space<vmem>>, vector<16x128xf32>,
    %c0_135 = arith.constant 0 : index
    %c0_136 = arith.constant 0 : index
    %129 = vector.load %arg8[%c0_135, %c0_136] : memref<8x16xf32, #tpu.memory_space<vmem>>, vector<8x16xf32>
    %c0_137 = arith.constant 0 : index
    %c0_138 = arith.constant 0 : index
    %130 = vector.load %arg28[%c0_137, %c0_138] : memref<16x128xf32, #tpu.memory_space<vmem>>, vector<16x128xf32>
    %cst_139 = arith.constant dense<0.000000e+00> : vector<8x128xf32>
    %131 = tpu.matmul %129, %130, %cst_139 {dimension_numbers = #tpu.dot_dimension_numbers<[1], [0], [0], [1], [0, 0, 1, 1], [], []>} : vector<8x16xf32>, vector<16x128xf32>, vector<8x128xf32> -> vector<8x128xf32>
    %c0_140 = arith.constant 0 : index
    %c0_141 = arith.constant 0 : index
    %132 = vector.load %arg25[%c0_140, %c0_141] : memref<128x128xf32, #tpu.memory_space<vmem>>, vector<128x128xf32>
    %cst_142 = arith.constant dense<0.000000e+00> : vector<8x128xf32>
    %133 = tpu.matmul %131, %132, %cst_142 {dimension_numbers = #tpu.dot_dimension_numbers<[1], [0], [0], [1], [0, 0, 1, 1], [], []>} : vector<8x128xf32>, vector<128x128xf32>, vector<8x128xf32> -> vector<8x128xf32>
    %c0_143 = arith.constant 0 : index
    %c0_144 = arith.constant 0 : index
    %134 = vector.load %arg26[%c0_143, %c0_144] : memref<1x128xf32, #tpu.memory_space<vmem>>, vector<1x128xf32>
    %135 = vector.broadcast %134 : vector<1x128xf32> to vector<8x128xf32>
    %136 = arith.addf %133, %135 : vector<8x128xf32>
    %c0_145 = arith.constant 0 : index
    %c0_146 = arith.constant 0 : index
    %137 = vector.load %arg27[%c0_145, %c0_146] : memref<8x128xf32, #tpu.memory_space<vmem>>, vector<8x128xf32>
    tpu.vector_store %arg27[%c0_145, %c0_146], %136 {strides = array<i32>} : memref<8x128xf32, #tpu.memory_space<vmem>>, vector<8x128xf32>,
    return
  }
}

</mosaic_0001>

<llo_original>
// kernel: hetero_forward.1
$region0: #{hetero_forward.1}
  #allocation0 [shape = 'u32[]', space=smem, size = 0x4, offset = 0x4, fixed_abs, tag = 'smem constant byte address 0x4 - core index']
  #allocation1 [shape = 'u32[144,128]{1,0:T(1,128)}', space=vmem, size = 0x12000, scoped, tag = 'internal scratch']
  #allocation2 [shape = 'f32[16,128]{1,0:T(8,128)}', space=vmem, size = 0x2000, scoped, tag = 'scratch operand']
  #allocation3 [shape = 'f32[8,128]{1,0:T(8,128)}', space=vmem, size = 0x1000, scoped, tag = 'scratch operand']
  #allocation4 [shape = 'f32[16,128]{1,0:T(8,128)}', space=vmem, size = 0x2000, scoped, tag = 'scratch operand']
  %s0 = inlined_call_operand.vmem [shape: f32[16,128], index: 0, kind: input, shape index: {}]
  %s1 = inlined_call_operand.vmem [shape: f32[8,128], index: 1, kind: input, shape index: {}]
  %s2 = inlined_call_operand.vmem [shape: f32[16,128], index: 2, kind: input, shape index: {}]
  %s3 = inlined_call_operand.vmem [shape: f32[16,16], index: 3, kind: input, shape index: {}]
  %s4 = inlined_call_operand.vmem [shape: f32[16,8], index: 4, kind: input, shape index: {}]
  %s5 = inlined_call_operand.vmem [shape: f32[16,16], index: 5, kind: input, shape index: {}]
  %s6 = inlined_call_operand.vmem [shape: f32[8,8], index: 6, kind: input, shape index: {}]
  %s7 = inlined_call_operand.vmem [shape: f32[16,16], index: 7, kind: input, shape index: {}]
  %s8 = inlined_call_operand.vmem [shape: f32[8,16], index: 8, kind: input, shape index: {}]
  %s9 = inlined_call_operand.vmem [shape: f32[128,128], index: 9, kind: input, shape index: {}]
  %s10 = inlined_call_operand.vmem [shape: f32[1,128], index: 10, kind: input, shape index: {}]
  %s11 = inlined_call_operand.vmem [shape: f32[128,128], index: 11, kind: input, shape index: {}]
  %s12 = inlined_call_operand.vmem [shape: f32[1,128], index: 12, kind: input, shape index: {}]
  %s13 = inlined_call_operand.vmem [shape: f32[128,128], index: 13, kind: input, shape index: {}]
  %s14 = inlined_call_operand.vmem [shape: f32[1,128], index: 14, kind: input, shape index: {}]
  %s15 = inlined_call_operand.vmem [shape: f32[256,128], index: 15, kind: input, shape index: {}]
  %s16 = inlined_call_operand.vmem [shape: f32[1,128], index: 16, kind: input, shape index: {}]
  %s17 = inlined_call_operand.vmem [shape: f32[256,128], index: 17, kind: input, shape index: {}]
  %s18 = inlined_call_operand.vmem [shape: f32[1,128], index: 18, kind: input, shape index: {}]
  %s19 = inlined_call_operand.vmem [shape: f32[256,128], index: 19, kind: input, shape index: {}]
  %s20 = inlined_call_operand.vmem [shape: f32[1,128], index: 20, kind: input, shape index: {}]
  %s21 = inlined_call_operand.vmem [shape: f32[256,128], index: 21, kind: input, shape index: {}]
  %s22 = inlined_call_operand.vmem [shape: f32[1,128], index: 22, kind: input, shape index: {}]
  %s23 = inlined_call_operand.vmem [shape: f32[256,128], index: 23, kind: input, shape index: {}]
  %s24 = inlined_call_operand.vmem [shape: f32[1,128], index: 24, kind: input, shape index: {}]
  %s25 = inlined_call_operand.vmem [shape: f32[128,128], index: 25, kind: input, shape index: {}]
  %s26 = inlined_call_operand.vmem [shape: f32[1,128], index: 26, kind: input, shape index: {}]
  %s27 = inlined_call_operand.vmem [shape: f32[8,128], index: 27, kind: output, shape index: {}]
  %s28 = sld [smem:[#allocation0]]
  $region118: #{hetero_forward.1} parent=0
    _
  %s30 = ssub.s32 1, %s28
  %s31 = scalar_select 0, %s30, %s28
  // Predicated region
  $region2: #{hetero_forward.1} parent=0 // pred_check
    _
  $region3: #{hetero_forward.1} parent=0 // pred_check_branch
    %33 = sbr.rel (0) target = $region5
  $region4: #{hetero_forward.1} parent=0 // pred_region
    _
  $region5: #{hetero_forward.1} parent=0 // pred_fallthru
    _
  // Predicated region
  $region6: #{hetero_forward.1} parent=0 // pred_check
    _
  $region7: #{hetero_forward.1} parent=0 // pred_check_branch
    %35 = sbr.rel (0) target = $region9
  $region8: #{hetero_forward.1} parent=0 // pred_region
    _
  $region9: #{hetero_forward.1} parent=0 // pred_fallthru
    _
  // Predicated region
  $region10: #{hetero_forward.1} parent=0 // pred_check
    _
  $region11: #{hetero_forward.1} parent=0 // pred_check_branch
    %37 = sbr.rel (0) target = $region13
  $region12: #{hetero_forward.1} parent=0 // pred_region
    _
  $region13: #{hetero_forward.1} parent=0 // pred_fallthru
    _
  // Predicated region
  $region14: #{hetero_forward.1} parent=0 // pred_check
    _
  $region15: #{hetero_forward.1} parent=0 // pred_check_branch
    %39 = sbr.rel (0) target = $region17
  $region16: #{hetero_forward.1} parent=0 // pred_region
    _
  $region17: #{hetero_forward.1} parent=0 // pred_fallthru
    _
  // Predicated region
  $region18: #{hetero_forward.1} parent=0 // pred_check
    _
  $region19: #{hetero_forward.1} parent=0 // pred_check_branch
    %41 = sbr.rel (0) target = $region21
  $region20: #{hetero_forward.1} parent=0 // pred_region
    _
  $region21: #{hetero_forward.1} parent=0 // pred_fallthru
    _
  // Predicated region
  $region22: #{hetero_forward.1} parent=0 // pred_check
    _
  $region23: #{hetero_forward.1} parent=0 // pred_check_branch
    %43 = sbr.rel (0) target = $region25
  $region24: #{hetero_forward.1} parent=0 // pred_region
    _
  $region25: #{hetero_forward.1} parent=0 // pred_fallthru
    _
  // Predicated region
  $region26: #{hetero_forward.1} parent=0 // pred_check
    _
  $region27: #{hetero_forward.1} parent=0 // pred_check_branch
    %45 = sbr.rel (0) target = $region29
  $region28: #{hetero_forward.1} parent=0 // pred_region
    _
  $region29: #{hetero_forward.1} parent=0 // pred_fallthru
    _
  // Predicated region
  $region30: #{hetero_forward.1} parent=0 // pred_check
    _
  $region31: #{hetero_forward.1} parent=0 // pred_check_branch
    %47 = sbr.rel (0) target = $region33
  $region32: #{hetero_forward.1} parent=0 // pred_region
    _
  $region33: #{hetero_forward.1} parent=0 // pred_fallthru
    _
  // Predicated region
  $region34: #{hetero_forward.1} parent=0 // pred_check
    _
  $region35: #{hetero_forward.1} parent=0 // pred_check_branch
    %49 = sbr.rel (0) target = $region37
  $region36: #{hetero_forward.1} parent=0 // pred_region
    _
  $region37: #{hetero_forward.1} parent=0 // pred_fallthru
    _
  // Predicated region
  $region38: #{hetero_forward.1} parent=0 // pred_check
    _
  $region39: #{hetero_forward.1} parent=0 // pred_check_branch
    %51 = sbr.rel (0) target = $region41
  $region40: #{hetero_forward.1} parent=0 // pred_region
    _
  $region41: #{hetero_forward.1} parent=0 // pred_fallthru
    _
  // Predicated region
  $region42: #{hetero_forward.1} parent=0 // pred_check
    _
  $region43: #{hetero_forward.1} parent=0 // pred_check_branch
    %53 = sbr.rel (0) target = $region45
  $region44: #{hetero_forward.1} parent=0 // pred_region
    _
  $region45: #{hetero_forward.1} parent=0 // pred_fallthru
    _
  // Predicated region
  $region46: #{hetero_forward.1} parent=0 // pred_check
    _
  $region47: #{hetero_forward.1} parent=0 // pred_check_branch
    %55 = sbr.rel (0) target = $region49
  $region48: #{hetero_forward.1} parent=0 // pred_region
    _
  $region49: #{hetero_forward.1} parent=0 // pred_fallthru
    _
  // Predicated region
  $region50: #{hetero_forward.1} parent=0 // pred_check
    _
  $region51: #{hetero_forward.1} parent=0 // pred_check_branch
    %57 = sbr.rel (0) target = $region53
  $region52: #{hetero_forward.1} parent=0 // pred_region
    _
  $region53: #{hetero_forward.1} parent=0 // pred_fallthru
    _
  // Predicated region
  $region54: #{hetero_forward.1} parent=0 // pred_check
    _
  $region55: #{hetero_forward.1} parent=0 // pred_check_branch
    %59 = sbr.rel (0) target = $region57
  $region56: #{hetero_forward.1} parent=0 // pred_region
    _
  $region57: #{hetero_forward.1} parent=0 // pred_fallthru
    _
  // Predicated region
  $region58: #{hetero_forward.1} parent=0 // pred_check
    _
  $region59: #{hetero_forward.1} parent=0 // pred_check_branch
    %61 = sbr.rel (0) target = $region61
  $region60: #{hetero_forward.1} parent=0 // pred_region
    _
  $region61: #{hetero_forward.1} parent=0 // pred_fallthru
    _
  // Predicated region
  $region62: #{hetero_forward.1} parent=0 // pred_check
    _
  $region63: #{hetero_forward.1} parent=0 // pred_check_branch
    %63 = sbr.rel (0) target = $region65
  $region64: #{hetero_forward.1} parent=0 // pred_region
    _
  $region65: #{hetero_forward.1} parent=0 // pred_fallthru
    _
  // Predicated region
  $region66: #{hetero_forward.1} parent=0 // pred_check
    _
  $region67: #{hetero_forward.1} parent=0 // pred_check_branch
    %65 = sbr.rel (0) target = $region69
  $region68: #{hetero_forward.1} parent=0 // pred_region
    _
  $region69: #{hetero_forward.1} parent=0 // pred_fallthru
    _
  // Predicated region
  $region70: #{hetero_forward.1} parent=0 // pred_check
    _
  $region71: #{hetero_forward.1} parent=0 // pred_check_branch
    %67 = sbr.rel (0) target = $region73
  $region72: #{hetero_forward.1} parent=0 // pred_region
    _
  $region73: #{hetero_forward.1} parent=0 // pred_fallthru
    _
  // Predicated region
  $region74: #{hetero_forward.1} parent=0 // pred_check
    _
  $region75: #{hetero_forward.1} parent=0 // pred_check_branch
    %69 = sbr.rel (0) target = $region77
  $region76: #{hetero_forward.1} parent=0 // pred_region
    _
  $region77: #{hetero_forward.1} parent=0 // pred_fallthru
    _
  // Predicated region
  $region78: #{hetero_forward.1} parent=0 // pred_check
    _
  $region79: #{hetero_forward.1} parent=0 // pred_check_branch
    %71 = sbr.rel (0) target = $region81
  $region80: #{hetero_forward.1} parent=0 // pred_region
    _
  $region81: #{hetero_forward.1} parent=0 // pred_fallthru
    _
  // Predicated region
  $region82: #{hetero_forward.1} parent=0 // pred_check
    _
  $region83: #{hetero_forward.1} parent=0 // pred_check_branch
    %73 = sbr.rel (0) target = $region85
  $region84: #{hetero_forward.1} parent=0 // pred_region
    _
  $region85: #{hetero_forward.1} parent=0 // pred_fallthru
    _
  // Predicated region
  $region86: #{hetero_forward.1} parent=0 // pred_check
    _
  $region87: #{hetero_forward.1} parent=0 // pred_check_branch
    %75 = sbr.rel (0) target = $region89
  $region88: #{hetero_forward.1} parent=0 // pred_region
    _
  $region89: #{hetero_forward.1} parent=0 // pred_fallthru
    _
  // Predicated region
  $region90: #{hetero_forward.1} parent=0 // pred_check
    _
  $region91: #{hetero_forward.1} parent=0 // pred_check_branch
    %77 = sbr.rel (0) target = $region93
  $region92: #{hetero_forward.1} parent=0 // pred_region
    _
  $region93: #{hetero_forward.1} parent=0 // pred_fallthru
    _
  // Predicated region
  $region94: #{hetero_forward.1} parent=0 // pred_check
    _
  $region95: #{hetero_forward.1} parent=0 // pred_check_branch
    %79 = sbr.rel (0) target = $region97
  $region96: #{hetero_forward.1} parent=0 // pred_region
    _
  $region97: #{hetero_forward.1} parent=0 // pred_fallthru
    _
  // Predicated region
  $region98: #{hetero_forward.1} parent=0 // pred_check
    _
  $region99: #{hetero_forward.1} parent=0 // pred_check_branch
    %81 = sbr.rel (0) target = $region101
  $region100: #{hetero_forward.1} parent=0 // pred_region
    _
  $region101: #{hetero_forward.1} parent=0 // pred_fallthru
    _
  // Predicated region
  $region102: #{hetero_forward.1} parent=0 // pred_check
    _
  $region103: #{hetero_forward.1} parent=0 // pred_check_branch
    %83 = sbr.rel (0) target = $region105
  $region104: #{hetero_forward.1} parent=0 // pred_region
    _
  $region105: #{hetero_forward.1} parent=0 // pred_fallthru
    _
  // Predicated region
  $region106: #{hetero_forward.1} parent=0 // pred_check
    _
  $region107: #{hetero_forward.1} parent=0 // pred_check_branch
    %85 = sbr.rel (0) target = $region109
  $region108: #{hetero_forward.1} parent=0 // pred_region
    _
  $region109: #{hetero_forward.1} parent=0 // pred_fallthru
    _
  %v86 = vld [vmem:[%s0] sm:$0xff]
  %v87 = vld [vmem:[%s0 + $0x8] sm:$0xff]
  %v88 = vld [vmem:[%s9] sm:$0xff]
  %v89 = vld [vmem:[%s9 + $0x8] sm:$0xff]
  %v90 = vld [vmem:[%s9 + $0x10] sm:$0xff]
  %v91 = vld [vmem:[%s9 + $0x18] sm:$0xff]
  %v92 = vld [vmem:[%s9 + $0x20] sm:$0xff]
  %v93 = vld [vmem:[%s9 + $0x28] sm:$0xff]
  %v94 = vld [vmem:[%s9 + $0x30] sm:$0xff]
  %v95 = vld [vmem:[%s9 + $0x38] sm:$0xff]
  %v96 = vld [vmem:[%s9 + $0x40] sm:$0xff]
  %v97 = vld [vmem:[%s9 + $0x48] sm:$0xff]
  %v98 = vld [vmem:[%s9 + $0x50] sm:$0xff]
  %v99 = vld [vmem:[%s9 + $0x58] sm:$0xff]
  %v100 = vld [vmem:[%s9 + $0x60] sm:$0xff]
  %v101 = vld [vmem:[%s9 + $0x68] sm:$0xff]
  %v102 = vld [vmem:[%s9 + $0x70] sm:$0xff]
  %v103 = vld [vmem:[%s9 + $0x78] sm:$0xff]
  %v104 = vld [vmem:[%s10] sm:$0x1]
  %v106 = vlaneseq
  %v107 = vshrl.u32 %v106, 7
  %v108 = vsub.s32 0, %v107
  %v109 = vrot.slane %v104, %v108
  %111 = vmatprep.subr.mxu0 0.0
  %112 = vmatpush1.msra.mxu0 %v88
  %113 = vmatprep.subr.mxu0 0.0
  %114 = vmatpush1.msra.mxu0 %v89
  %115 = vmatprep.subr.mxu0 0.0
  %116 = vmatpush1.msra.mxu0 %v90
  %117 = vmatprep.subr.mxu0 0.0
  %118 = vmatpush1.msra.mxu0 %v91
  %119 = vmatprep.subr.mxu0 0.0
  %120 = vmatpush1.msra.mxu0 %v92
  %121 = vmatprep.subr.mxu0 0.0
  %122 = vmatpush1.msra.mxu0 %v93
  %123 = vmatprep.subr.mxu0 0.0
  %124 = vmatpush1.msra.mxu0 %v94
  %125 = vmatprep.subr.mxu0 0.0
  %126 = vmatpush1.msra.mxu0 %v95
  %127 = vmatprep.subr.mxu0 0.0
  %128 = vmatpush1.msra.mxu0 %v96
  %129 = vmatprep.subr.mxu0 0.0
  %130 = vmatpush1.msra.mxu0 %v97
  %131 = vmatprep.subr.mxu0 0.0
  %132 = vmatpush1.msra.mxu0 %v98
  %133 = vmatprep.subr.mxu0 0.0
  %134 = vmatpush1.msra.mxu0 %v99
  %135 = vmatprep.subr.mxu0 0.0
  %136 = vmatpush1.msra.mxu0 %v100
  %137 = vmatprep.subr.mxu0 0.0
  %138 = vmatpush1.msra.mxu0 %v101
  %139 = vmatprep.subr.mxu0 0.0
  %140 = vmatpush1.msra.mxu0 %v102
  %141 = vmatprep.subr.mxu0 0.0
  %142 = vmatpush1.msra.mxu0 %v103
  %143 = vmatprep.subr.mxu0 0.0
  %144 = vmatpush1.msra.mxu0 0.0
  %145 = vmatprep.subr.mxu0 0.0
  %146 = vmatpush1.msra.mxu0 0.0
  %147 = vmatprep.subr.mxu0 0.0
  %148 = vmatpush1.msra.mxu0 0.0
  %149 = vmatprep.subr.mxu0 0.0
  %150 = vmatpush1.msra.mxu0 0.0
  %151 = vmatprep.subr.mxu0 0.0
  %152 = vmatpush1.msra.mxu0 0.0
  %153 = vmatprep.subr.mxu0 0.0
  %154 = vmatpush1.msra.mxu0 0.0
  %155 = vmatprep.subr.mxu0 0.0
  %156 = vmatpush1.msra.mxu0 0.0
  %157 = vmatprep.subr.mxu0 0.0
  %158 = vmatpush1.msra.mxu0 0.0
  %159 = vmatprep.subr.mxu0 0.0
  %160 = vmatpush1.msra.mxu0 0.0
  %161 = vmatprep.subr.mxu0 0.0
  %162 = vmatpush1.msra.mxu0 0.0
  %163 = vmatprep.subr.mxu0 0.0
  %164 = vmatpush1.msra.mxu0 0.0
  %165 = vmatprep.subr.mxu0 0.0
  %166 = vmatpush1.msra.mxu0 0.0
  %167 = vmatprep.subr.mxu0 0.0
  %168 = vmatpush1.msra.mxu0 0.0
  %169 = vmatprep.subr.mxu0 0.0
  %170 = vmatpush1.msra.mxu0 0.0
  %171 = vmatprep.subr.mxu0 0.0
  %172 = vmatpush1.msra.mxu0 0.0
  %173 = vmatprep.subr.mxu0 0.0
  %174 = vmatpush1.msra.mxu0 0.0
  %175 = vmatprep.mubr.f32.mxu0 0.0
  %176 = vmatmul.mubr.f32.gmra.mrb[0].mxu0 %v86
  %v177 = vpop.f32.mrb[0].mxu0
  %v178 = vadd.f32 %v109, %v177
  %v179 = vpop.f32.mrb[0].mxu0
  %180 = vmatprep.mubr.f32.mxu0 0.0
  %181 = vmatmul.mubr.f32.gmra.mrb[0].mxu0 %v87
  %v182 = vpop.f32.mrb[0].mxu0
  %v183 = vadd.f32 %v109, %v182
  %v184 = vpop.f32.mrb[0].mxu0
  %185 = vdwg.mxu0
  %186 = vst [vmem:[#allocation2] sm:$0xff] %v178
  %187 = vst [vmem:[#allocation2 + $0x8] sm:$0xff] %v183
  %v188 = vld [vmem:[%s1] sm:$0xff]
  %v189 = vld [vmem:[%s11] sm:$0xff]
  %v190 = vld [vmem:[%s11 + $0x8] sm:$0xff]
  %v191 = vld [vmem:[%s11 + $0x10] sm:$0xff]
  %v192 = vld [vmem:[%s11 + $0x18] sm:$0xff]
  %v193 = vld [vmem:[%s11 + $0x20] sm:$0xff]
  %v194 = vld [vmem:[%s11 + $0x28] sm:$0xff]
  %v195 = vld [vmem:[%s11 + $0x30] sm:$0xff]
  %v196 = vld [vmem:[%s11 + $0x38] sm:$0xff]
  %v197 = vld [vmem:[%s11 + $0x40] sm:$0xff]
  %v198 = vld [vmem:[%s11 + $0x48] sm:$0xff]
  %v199 = vld [vmem:[%s11 + $0x50] sm:$0xff]
  %v200 = vld [vmem:[%s11 + $0x58] sm:$0xff]
  %v201 = vld [vmem:[%s11 + $0x60] sm:$0xff]
  %v202 = vld [vmem:[%s11 + $0x68] sm:$0xff]
  %v203 = vld [vmem:[%s11 + $0x70] sm:$0xff]
  %v204 = vld [vmem:[%s11 + $0x78] sm:$0xff]
  %v205 = vld [vmem:[%s12] sm:$0x1]
  %v207 = vlaneseq
  %v208 = vshrl.u32 %v207, 7
  %v209 = vsub.s32 0, %v208
  %v210 = vrot.slane %v205, %v209
  %212 = vmatprep.subr.mxu0 0.0
  %213 = vmatpush1.msra.mxu0 %v189
  %214 = vmatprep.subr.mxu0 0.0
  %215 = vmatpush1.msra.mxu0 %v190
  %216 = vmatprep.subr.mxu0 0.0
  %217 = vmatpush1.msra.mxu0 %v191
  %218 = vmatprep.subr.mxu0 0.0
  %219 = vmatpush1.msra.mxu0 %v192
  %220 = vmatprep.subr.mxu0 0.0
  %221 = vmatpush1.msra.mxu0 %v193
  %222 = vmatprep.subr.mxu0 0.0
  %223 = vmatpush1.msra.mxu0 %v194
  %224 = vmatprep.subr.mxu0 0.0
  %225 = vmatpush1.msra.mxu0 %v195
  %226 = vmatprep.subr.mxu0 0.0
  %227 = vmatpush1.msra.mxu0 %v196
  %228 = vmatprep.subr.mxu0 0.0
  %229 = vmatpush1.msra.mxu0 %v197
  %230 = vmatprep.subr.mxu0 0.0
  %231 = vmatpush1.msra.mxu0 %v198
  %232 = vmatprep.subr.mxu0 0.0
  %233 = vmatpush1.msra.mxu0 %v199
  %234 = vmatprep.subr.mxu0 0.0
  %235 = vmatpush1.msra.mxu0 %v200
  %236 = vmatprep.subr.mxu0 0.0
  %237 = vmatpush1.msra.mxu0 %v201
  %238 = vmatprep.subr.mxu0 0.0
  %239 = vmatpush1.msra.mxu0 %v202
  %240 = vmatprep.subr.mxu0 0.0
  %241 = vmatpush1.msra.mxu0 %v203
  %242 = vmatprep.subr.mxu0 0.0
  %243 = vmatpush1.msra.mxu0 %v204
  %244 = vmatprep.subr.mxu0 0.0
  %245 = vmatpush1.msra.mxu0 0.0
  %246 = vmatprep.subr.mxu0 0.0
  %247 = vmatpush1.msra.mxu0 0.0
  %248 = vmatprep.subr.mxu0 0.0
  %249 = vmatpush1.msra.mxu0 0.0
  %250 = vmatprep.subr.mxu0 0.0
  %251 = vmatpush1.msra.mxu0 0.0
  %252 = vmatprep.subr.mxu0 0.0
  %253 = vmatpush1.msra.mxu0 0.0
  %254 = vmatprep.subr.mxu0 0.0
  %255 = vmatpush1.msra.mxu0 0.0
  %256 = vmatprep.subr.mxu0 0.0
  %257 = vmatpush1.msra.mxu0 0.0
  %258 = vmatprep.subr.mxu0 0.0
  %259 = vmatpush1.msra.mxu0 0.0
  %260 = vmatprep.subr.mxu0 0.0
  %261 = vmatpush1.msra.mxu0 0.0
  %262 = vmatprep.subr.mxu0 0.0
  %263 = vmatpush1.msra.mxu0 0.0
  %264 = vmatprep.subr.mxu0 0.0
  %265 = vmatpush1.msra.mxu0 0.0
  %266 = vmatprep.subr.mxu0 0.0
  %267 = vmatpush1.msra.mxu0 0.0
  %268 = vmatprep.subr.mxu0 0.0
  %269 = vmatpush1.msra.mxu0 0.0
  %270 = vmatprep.subr.mxu0 0.0
  %271 = vmatpush1.msra.mxu0 0.0
  %272 = vmatprep.subr.mxu0 0.0
  %273 = vmatpush1.msra.mxu0 0.0
  %274 = vmatprep.subr.mxu0 0.0
  %275 = vmatpush1.msra.mxu0 0.0
  %276 = vmatprep.mubr.f32.mxu0 0.0
  %277 = vmatmul.mubr.f32.gmra.mrb[0].mxu0 %v188
  %v278 = vpop.f32.mrb[0].mxu0
  %v279 = vadd.f32 %v210, %v278
  %v280 = vpop.f32.mrb[0].mxu0
  %281 = vdwg.mxu0
  %282 = vst [vmem:[#allocation3] sm:$0xff] %v279
  %v283 = vld [vmem:[%s2] sm:$0xff]
  %v284 = vld [vmem:[%s2 + $0x8] sm:$0xff]
  %v285 = vld [vmem:[%s13] sm:$0xff]
  %v286 = vld [vmem:[%s13 + $0x8] sm:$0xff]
  %v287 = vld [vmem:[%s13 + $0x10] sm:$0xff]
  %v288 = vld [vmem:[%s13 + $0x18] sm:$0xff]
  %v289 = vld [vmem:[%s13 + $0x20] sm:$0xff]
  %v290 = vld [vmem:[%s13 + $0x28] sm:$0xff]
  %v291 = vld [vmem:[%s13 + $0x30] sm:$0xff]
  %v292 = vld [vmem:[%s13 + $0x38] sm:$0xff]
  %v293 = vld [vmem:[%s13 + $0x40] sm:$0xff]
  %v294 = vld [vmem:[%s13 + $0x48] sm:$0xff]
  %v295 = vld [vmem:[%s13 + $0x50] sm:$0xff]
  %v296 = vld [vmem:[%s13 + $0x58] sm:$0xff]
  %v297 = vld [vmem:[%s13 + $0x60] sm:$0xff]
  %v298 = vld [vmem:[%s13 + $0x68] sm:$0xff]
  %v299 = vld [vmem:[%s13 + $0x70] sm:$0xff]
  %v300 = vld [vmem:[%s13 + $0x78] sm:$0xff]
  %v301 = vld [vmem:[%s14] sm:$0x1]
  %v303 = vlaneseq
  %v304 = vshrl.u32 %v303, 7
  %v305 = vsub.s32 0, %v304
  %v306 = vrot.slane %v301, %v305
  %308 = vmatprep.subr.mxu0 0.0
  %309 = vmatpush1.msra.mxu0 %v285
  %310 = vmatprep.subr.mxu0 0.0
  %311 = vmatpush1.msra.mxu0 %v286
  %312 = vmatprep.subr.mxu0 0.0
  %313 = vmatpush1.msra.mxu0 %v287
  %314 = vmatprep.subr.mxu0 0.0
  %315 = vmatpush1.msra.mxu0 %v288
  %316 = vmatprep.subr.mxu0 0.0
  %317 = vmatpush1.msra.mxu0 %v289
  %318 = vmatprep.subr.mxu0 0.0
  %319 = vmatpush1.msra.mxu0 %v290
  %320 = vmatprep.subr.mxu0 0.0
  %321 = vmatpush1.msra.mxu0 %v291
  %322 = vmatprep.subr.mxu0 0.0
  %323 = vmatpush1.msra.mxu0 %v292
  %324 = vmatprep.subr.mxu0 0.0
  %325 = vmatpush1.msra.mxu0 %v293
  %326 = vmatprep.subr.mxu0 0.0
  %327 = vmatpush1.msra.mxu0 %v294
  %328 = vmatprep.subr.mxu0 0.0
  %329 = vmatpush1.msra.mxu0 %v295
  %330 = vmatprep.subr.mxu0 0.0
  %331 = vmatpush1.msra.mxu0 %v296
  %332 = vmatprep.subr.mxu0 0.0
  %333 = vmatpush1.msra.mxu0 %v297
  %334 = vmatprep.subr.mxu0 0.0
  %335 = vmatpush1.msra.mxu0 %v298
  %336 = vmatprep.subr.mxu0 0.0
  %337 = vmatpush1.msra.mxu0 %v299
  %338 = vmatprep.subr.mxu0 0.0
  %339 = vmatpush1.msra.mxu0 %v300
  %340 = vmatprep.subr.mxu0 0.0
  %341 = vmatpush1.msra.mxu0 0.0
  %342 = vmatprep.subr.mxu0 0.0
  %343 = vmatpush1.msra.mxu0 0.0
  %344 = vmatprep.subr.mxu0 0.0
  %345 = vmatpush1.msra.mxu0 0.0
  %346 = vmatprep.subr.mxu0 0.0
  %347 = vmatpush1.msra.mxu0 0.0
  %348 = vmatprep.subr.mxu0 0.0
  %349 = vmatpush1.msra.mxu0 0.0
  %350 = vmatprep.subr.mxu0 0.0
  %351 = vmatpush1.msra.mxu0 0.0
  %352 = vmatprep.subr.mxu0 0.0
  %353 = vmatpush1.msra.mxu0 0.0
  %354 = vmatprep.subr.mxu0 0.0
  %355 = vmatpush1.msra.mxu0 0.0
  %356 = vmatprep.subr.mxu0 0.0
  %357 = vmatpush1.msra.mxu0 0.0
  %358 = vmatprep.subr.mxu0 0.0
  %359 = vmatpush1.msra.mxu0 0.0
  %360 = vmatprep.subr.mxu0 0.0
  %361 = vmatpush1.msra.mxu0 0.0
  %362 = vmatprep.subr.mxu0 0.0
  %363 = vmatpush1.msra.mxu0 0.0
  %364 = vmatprep.subr.mxu0 0.0
  %365 = vmatpush1.msra.mxu0 0.0
  %366 = vmatprep.subr.mxu0 0.0
  %367 = vmatpush1.msra.mxu0 0.0
  %368 = vmatprep.subr.mxu0 0.0
  %369 = vmatpush1.msra.mxu0 0.0
  %370 = vmatprep.subr.mxu0 0.0
  %371 = vmatpush1.msra.mxu0 0.0
  %372 = vmatprep.mubr.f32.mxu0 0.0
  %373 = vmatmul.mubr.f32.gmra.mrb[0].mxu0 %v283
  %v374 = vpop.f32.mrb[0].mxu0
  %v375 = vadd.f32 %v306, %v374
  %v376 = vpop.f32.mrb[0].mxu0
  %377 = vmatprep.mubr.f32.mxu0 0.0
  %378 = vmatmul.mubr.f32.gmra.mrb[0].mxu0 %v284
  %v379 = vpop.f32.mrb[0].mxu0
  %v380 = vadd.f32 %v306, %v379
  %v381 = vpop.f32.mrb[0].mxu0
  %382 = vdwg.mxu0
  %383 = vst [vmem:[#allocation4] sm:$0xff] %v375
  %384 = vst [vmem:[#allocation4 + $0x8] sm:$0xff] %v380
  %v385 = vld [vmem:[#allocation2] sm:$0xff]
  %v386 = vld [vmem:[#allocation2 + $0x8] sm:$0xff]
  %v387 = vld [vmem:[#allocation3] sm:$0xff]
  %v388 = vld [vmem:[#allocation4] sm:$0xff]
  %v389 = vld [vmem:[#allocation4 + $0x8] sm:$0xff]
  %v390 = vld [vmem:[%s3] sm:$0xff]
  %v391 = vld [vmem:[%s3 + $0x8] sm:$0xff]
  %vm392 = vcmask 130048
  %v394 = vsel %vm392, %v390, 0
  %v397 = vsel %vm392, %v391, 0
  %399 = vmatprep.subr.mxu0 0.0
  %400 = vmatpush1.msra.mxu0 %v385
  %401 = vmatprep.subr.mxu0 0.0
  %402 = vmatpush1.msra.mxu0 %v386
  %403 = vmatprep.subr.mxu0 0.0
  %404 = vmatpush1.msra.mxu0 0.0
  %405 = vmatprep.subr.mxu0 0.0
  %406 = vmatpush1.msra.mxu0 0.0
  %407 = vmatprep.subr.mxu0 0.0
  %408 = vmatpush1.msra.mxu0 0.0
  %409 = vmatprep.subr.mxu0 0.0
  %410 = vmatpush1.msra.mxu0 0.0
  %411 = vmatprep.subr.mxu0 0.0
  %412 = vmatpush1.msra.mxu0 0.0
  %413 = vmatprep.subr.mxu0 0.0
  %414 = vmatpush1.msra.mxu0 0.0
  %415 = vmatprep.subr.mxu0 0.0
  %416 = vmatpush1.msra.mxu0 0.0
  %417 = vmatprep.subr.mxu0 0.0
  %418 = vmatpush1.msra.mxu0 0.0
  %419 = vmatprep.subr.mxu0 0.0
  %420 = vmatpush1.msra.mxu0 0.0
  %421 = vmatprep.subr.mxu0 0.0
  %422 = vmatpush1.msra.mxu0 0.0
  %423 = vmatprep.subr.mxu0 0.0
  %424 = vmatpush1.msra.mxu0 0.0
  %425 = vmatprep.subr.mxu0 0.0
  %426 = vmatpush1.msra.mxu0 0.0
  %427 = vmatprep.subr.mxu0 0.0
  %428 = vmatpush1.msra.mxu0 0.0
  %429 = vmatprep.subr.mxu0 0.0
  %430 = vmatpush1.msra.mxu0 0.0
  %431 = vmatprep.subr.mxu0 0.0
  %432 = vmatpush1.msra.mxu0 0.0
  %433 = vmatprep.subr.mxu0 0.0
  %434 = vmatpush1.msra.mxu0 0.0
  %435 = vmatprep.subr.mxu0 0.0
  %436 = vmatpush1.msra.mxu0 0.0
  %437 = vmatprep.subr.mxu0 0.0
  %438 = vmatpush1.msra.mxu0 0.0
  %439 = vmatprep.subr.mxu0 0.0
  %440 = vmatpush1.msra.mxu0 0.0
  %441 = vmatprep.subr.mxu0 0.0
  %442 = vmatpush1.msra.mxu0 0.0
  %443 = vmatprep.subr.mxu0 0.0
  %444 = vmatpush1.msra.mxu0 0.0
  %445 = vmatprep.subr.mxu0 0.0
  %446 = vmatpush1.msra.mxu0 0.0
  %447 = vmatprep.subr.mxu0 0.0
  %448 = vmatpush1.msra.mxu0 0.0
  %449 = vmatprep.subr.mxu0 0.0
  %450 = vmatpush1.msra.mxu0 0.0
  %451 = vmatprep.subr.mxu0 0.0
  %452 = vmatpush1.msra.mxu0 0.0
  %453 = vmatprep.subr.mxu0 0.0
  %454 = vmatpush1.msra.mxu0 0.0
  %455 = vmatprep.subr.mxu0 0.0
  %456 = vmatpush1.msra.mxu0 0.0
  %457 = vmatprep.subr.mxu0 0.0
  %458 = vmatpush1.msra.mxu0 0.0
  %459 = vmatprep.subr.mxu0 0.0
  %460 = vmatpush1.msra.mxu0 0.0
  %461 = vmatprep.subr.mxu0 0.0
  %462 = vmatpush1.msra.mxu0 0.0
  %463 = vmatprep.mubr.f32.mxu0 0.0
  %464 = vmatmul.mubr.f32.gmra.mrb[0].mxu0 %v394
  %v465 = vpop.f32.mrb[0].mxu0
  %v466 = vadd.f32 0.0, %v465
  %v467 = vpop.f32.mrb[0].mxu0
  %468 = vmatprep.mubr.f32.mxu0 0.0
  %469 = vmatmul.mubr.f32.gmra.mrb[0].mxu0 %v397
  %v470 = vpop.f32.mrb[0].mxu0
  %v471 = vadd.f32 0.0, %v470
  %v472 = vpop.f32.mrb[0].mxu0
  %473 = vdwg.mxu0
  %v474 = vld [vmem:[%s15] sm:$0xff]
  %v475 = vld [vmem:[%s15 + $0x8] sm:$0xff]
  %v476 = vld [vmem:[%s15 + $0x10] sm:$0xff]
  %v477 = vld [vmem:[%s15 + $0x18] sm:$0xff]
  %v478 = vld [vmem:[%s15 + $0x20] sm:$0xff]
  %v479 = vld [vmem:[%s15 + $0x28] sm:$0xff]
  %v480 = vld [vmem:[%s15 + $0x30] sm:$0xff]
  %v481 = vld [vmem:[%s15 + $0x38] sm:$0xff]
  %v482 = vld [vmem:[%s15 + $0x40] sm:$0xff]
  %v483 = vld [vmem:[%s15 + $0x48] sm:$0xff]
  %v484 = vld [vmem:[%s15 + $0x50] sm:$0xff]
  %v485 = vld [vmem:[%s15 + $0x58] sm:$0xff]
  %v486 = vld [vmem:[%s15 + $0x60] sm:$0xff]
  %v487 = vld [vmem:[%s15 + $0x68] sm:$0xff]
  %v488 = vld [vmem:[%s15 + $0x70] sm:$0xff]
  %v489 = vld [vmem:[%s15 + $0x78] sm:$0xff]
  %v490 = vld [vmem:[%s15 + $0x80] sm:$0xff]
  %v491 = vld [vmem:[%s15 + $0x88] sm:$0xff]
  %v492 = vld [vmem:[%s15 + $0x90] sm:$0xff]
  %v493 = vld [vmem:[%s15 + $0x98] sm:$0xff]
  %v494 = vld [vmem:[%s15 + $0xa0] sm:$0xff]
  %v495 = vld [vmem:[%s15 + $0xa8] sm:$0xff]
  %v496 = vld [vmem:[%s15 + $0xb0] sm:$0xff]
  %v497 = vld [vmem:[%s15 + $0xb8] sm:$0xff]
  %v498 = vld [vmem:[%s15 + $0xc0] sm:$0xff]
  %v499 = vld [vmem:[%s15 + $0xc8] sm:$0xff]
  %v500 = vld [vmem:[%s15 + $0xd0] sm:$0xff]
  %v501 = vld [vmem:[%s15 + $0xd8] sm:$0xff]
  %v502 = vld [vmem:[%s15 + $0xe0] sm:$0xff]
  %v503 = vld [vmem:[%s15 + $0xe8] sm:$0xff]
  %v504 = vld [vmem:[%s15 + $0xf0] sm:$0xff]
  %v505 = vld [vmem:[%s15 + $0xf8] sm:$0xff]
  %v506 = vld [vmem:[%s16] sm:$0x1]
  %v508 = vlaneseq
  %v509 = vshrl.u32 %v508, 7
  %v510 = vsub.s32 0, %v509
  %v511 = vrot.slane %v506, %v510
  %513 = vmatprep.subr.mxu0 0.0
  %514 = vmatpush1.msra.mxu0 %v474
  %515 = vmatprep.subr.mxu0 0.0
  %516 = vmatpush1.msra.mxu0 %v475
  %517 = vmatprep.subr.mxu0 0.0
  %518 = vmatpush1.msra.mxu0 %v476
  %519 = vmatprep.subr.mxu0 0.0
  %520 = vmatpush1.msra.mxu0 %v477
  %521 = vmatprep.subr.mxu0 0.0
  %522 = vmatpush1.msra.mxu0 %v478
  %523 = vmatprep.subr.mxu0 0.0
  %524 = vmatpush1.msra.mxu0 %v479
  %525 = vmatprep.subr.mxu0 0.0
  %526 = vmatpush1.msra.mxu0 %v480
  %527 = vmatprep.subr.mxu0 0.0
  %528 = vmatpush1.msra.mxu0 %v481
  %529 = vmatprep.subr.mxu0 0.0
  %530 = vmatpush1.msra.mxu0 %v482
  %531 = vmatprep.subr.mxu0 0.0
  %532 = vmatpush1.msra.mxu0 %v483
  %533 = vmatprep.subr.mxu0 0.0
  %534 = vmatpush1.msra.mxu0 %v484
  %535 = vmatprep.subr.mxu0 0.0
  %536 = vmatpush1.msra.mxu0 %v485
  %537 = vmatprep.subr.mxu0 0.0
  %538 = vmatpush1.msra.mxu0 %v486
  %539 = vmatprep.subr.mxu0 0.0
  %540 = vmatpush1.msra.mxu0 %v487
  %541 = vmatprep.subr.mxu0 0.0
  %542 = vmatpush1.msra.mxu0 %v488
  %543 = vmatprep.subr.mxu0 0.0
  %544 = vmatpush1.msra.mxu0 %v489
  %545 = vmatprep.subr.mxu0 0.0
  %546 = vmatpush1.msra.mxu0 %v490
  %547 = vmatprep.subr.mxu0 0.0
  %548 = vmatpush1.msra.mxu0 %v491
  %549 = vmatprep.subr.mxu0 0.0
  %550 = vmatpush1.msra.mxu0 %v492
  %551 = vmatprep.subr.mxu0 0.0
  %552 = vmatpush1.msra.mxu0 %v493
  %553 = vmatprep.subr.mxu0 0.0
  %554 = vmatpush1.msra.mxu0 %v494
  %555 = vmatprep.subr.mxu0 0.0
  %556 = vmatpush1.msra.mxu0 %v495
  %557 = vmatprep.subr.mxu0 0.0
  %558 = vmatpush1.msra.mxu0 %v496
  %559 = vmatprep.subr.mxu0 0.0
  %560 = vmatpush1.msra.mxu0 %v497
  %561 = vmatprep.subr.mxu0 0.0
  %562 = vmatpush1.msra.mxu0 %v498
  %563 = vmatprep.subr.mxu0 0.0
  %564 = vmatpush1.msra.mxu0 %v499
  %565 = vmatprep.subr.mxu0 0.0
  %566 = vmatpush1.msra.mxu0 %v500
  %567 = vmatprep.subr.mxu0 0.0
  %568 = vmatpush1.msra.mxu0 %v501
  %569 = vmatprep.subr.mxu0 0.0
  %570 = vmatpush1.msra.mxu0 %v502
  %571 = vmatprep.subr.mxu0 0.0
  %572 = vmatpush1.msra.mxu0 %v503
  %573 = vmatprep.subr.mxu0 0.0
  %574 = vmatpush1.msra.mxu0 %v504
  %575 = vmatprep.subr.mxu0 0.0
  %576 = vmatpush1.msra.mxu0 %v505
  %577 = vmatprep.mubr.f32.mxu0 %v466
  %578 = vmatmul.mubr.f32.gmra.mrb[0].mxu0 %v385
  %v579 = vpop.f32.mrb[0].mxu0
  %v580 = vadd.f32 %v511, %v579
  %v581 = vpop.f32.mrb[0].mxu0
  %582 = vmatprep.mubr.f32.mxu0 %v471
  %583 = vmatmul.mubr.f32.gmra.mrb[0].mxu0 %v386
  %v584 = vpop.f32.mrb[0].mxu0
  %v585 = vadd.f32 %v511, %v584
  %v586 = vpop.f32.mrb[0].mxu0
  %587 = vdwg.mxu0
  %v588 = vld [vmem:[%s4] sm:$0xff]
  %v589 = vld [vmem:[%s4 + $0x8] sm:$0xff]
  %vm590 = vcmask 64512
  %v592 = vsel %vm590, %v588, 0
  %v595 = vsel %vm590, %v589, 0
  %597 = vmatprep.subr.mxu0 0.0
  %598 = vmatpush1.msra.mxu0 %v387
  %599 = vmatprep.subr.mxu0 0.0
  %600 = vmatpush1.msra.mxu0 0.0
  %601 = vmatprep.subr.mxu0 0.0
  %602 = vmatpush1.msra.mxu0 0.0
  %603 = vmatprep.subr.mxu0 0.0
  %604 = vmatpush1.msra.mxu0 0.0
  %605 = vmatprep.subr.mxu0 0.0
  %606 = vmatpush1.msra.mxu0 0.0
  %607 = vmatprep.subr.mxu0 0.0
  %608 = vmatpush1.msra.mxu0 0.0
  %609 = vmatprep.subr.mxu0 0.0
  %610 = vmatpush1.msra.mxu0 0.0
  %611 = vmatprep.subr.mxu0 0.0
  %612 = vmatpush1.msra.mxu0 0.0
  %613 = vmatprep.subr.mxu0 0.0
  %614 = vmatpush1.msra.mxu0 0.0
  %615 = vmatprep.subr.mxu0 0.0
  %616 = vmatpush1.msra.mxu0 0.0
  %617 = vmatprep.subr.mxu0 0.0
  %618 = vmatpush1.msra.mxu0 0.0
  %619 = vmatprep.subr.mxu0 0.0
  %620 = vmatpush1.msra.mxu0 0.0
  %621 = vmatprep.subr.mxu0 0.0
  %622 = vmatpush1.msra.mxu0 0.0
  %623 = vmatprep.subr.mxu0 0.0
  %624 = vmatpush1.msra.mxu0 0.0
  %625 = vmatprep.subr.mxu0 0.0
  %626 = vmatpush1.msra.mxu0 0.0
  %627 = vmatprep.subr.mxu0 0.0
  %628 = vmatpush1.msra.mxu0 0.0
  %629 = vmatprep.subr.mxu0 0.0
  %630 = vmatpush1.msra.mxu0 0.0
  %631 = vmatprep.subr.mxu0 0.0
  %632 = vmatpush1.msra.mxu0 0.0
  %633 = vmatprep.subr.mxu0 0.0
  %634 = vmatpush1.msra.mxu0 0.0
  %635 = vmatprep.subr.mxu0 0.0
  %636 = vmatpush1.msra.mxu0 0.0
  %637 = vmatprep.subr.mxu0 0.0
  %638 = vmatpush1.msra.mxu0 0.0
  %639 = vmatprep.subr.mxu0 0.0
  %640 = vmatpush1.msra.mxu0 0.0
  %641 = vmatprep.subr.mxu0 0.0
  %642 = vmatpush1.msra.mxu0 0.0
  %643 = vmatprep.subr.mxu0 0.0
  %644 = vmatpush1.msra.mxu0 0.0
  %645 = vmatprep.subr.mxu0 0.0
  %646 = vmatpush1.msra.mxu0 0.0
  %647 = vmatprep.subr.mxu0 0.0
  %648 = vmatpush1.msra.mxu0 0.0
  %649 = vmatprep.subr.mxu0 0.0
  %650 = vmatpush1.msra.mxu0 0.0
  %651 = vmatprep.subr.mxu0 0.0
  %652 = vmatpush1.msra.mxu0 0.0
  %653 = vmatprep.subr.mxu0 0.0
  %654 = vmatpush1.msra.mxu0 0.0
  %655 = vmatprep.subr.mxu0 0.0
  %656 = vmatpush1.msra.mxu0 0.0
  %657 = vmatprep.subr.mxu0 0.0
  %658 = vmatpush1.msra.mxu0 0.0
  %659 = vmatprep.subr.mxu0 0.0
  %660 = vmatpush1.msra.mxu0 0.0
  %661 = vmatprep.mubr.f32.mxu0 0.0
  %662 = vmatmul.mubr.f32.gmra.mrb[0].mxu0 %v592
  %v663 = vpop.f32.mrb[0].mxu0
  %v664 = vadd.f32 0.0, %v663
  %v665 = vpop.f32.mrb[0].mxu0
  %666 = vmatprep.mubr.f32.mxu0 0.0
  %667 = vmatmul.mubr.f32.gmra.mrb[0].mxu0 %v595
  %v668 = vpop.f32.mrb[0].mxu0
  %v669 = vadd.f32 0.0, %v668
  %v670 = vpop.f32.mrb[0].mxu0
  %671 = vdwg.mxu0
  %v672 = vld [vmem:[%s17] sm:$0xff]
  %v673 = vld [vmem:[%s17 + $0x8] sm:$0xff]
  %v674 = vld [vmem:[%s17 + $0x10] sm:$0xff]
  %v675 = vld [vmem:[%s17 + $0x18] sm:$0xff]
  %v676 = vld [vmem:[%s17 + $0x20] sm:$0xff]
  %v677 = vld [vmem:[%s17 + $0x28] sm:$0xff]
  %v678 = vld [vmem:[%s17 + $0x30] sm:$0xff]
  %v679 = vld [vmem:[%s17 + $0x38] sm:$0xff]
  %v680 = vld [vmem:[%s17 + $0x40] sm:$0xff]
  %v681 = vld [vmem:[%s17 + $0x48] sm:$0xff]
  %v682 = vld [vmem:[%s17 + $0x50] sm:$0xff]
  %v683 = vld [vmem:[%s17 + $0x58] sm:$0xff]
  %v684 = vld [vmem:[%s17 + $0x60] sm:$0xff]
  %v685 = vld [vmem:[%s17 + $0x68] sm:$0xff]
  %v686 = vld [vmem:[%s17 + $0x70] sm:$0xff]
  %v687 = vld [vmem:[%s17 + $0x78] sm:$0xff]
  %v688 = vld [vmem:[%s17 + $0x80] sm:$0xff]
  %v689 = vld [vmem:[%s17 + $0x88] sm:$0xff]
  %v690 = vld [vmem:[%s17 + $0x90] sm:$0xff]
  %v691 = vld [vmem:[%s17 + $0x98] sm:$0xff]
  %v692 = vld [vmem:[%s17 + $0xa0] sm:$0xff]
  %v693 = vld [vmem:[%s17 + $0xa8] sm:$0xff]
  %v694 = vld [vmem:[%s17 + $0xb0] sm:$0xff]
  %v695 = vld [vmem:[%s17 + $0xb8] sm:$0xff]
  %v696 = vld [vmem:[%s17 + $0xc0] sm:$0xff]
  %v697 = vld [vmem:[%s17 + $0xc8] sm:$0xff]
  %v698 = vld [vmem:[%s17 + $0xd0] sm:$0xff]
  %v699 = vld [vmem:[%s17 + $0xd8] sm:$0xff]
  %v700 = vld [vmem:[%s17 + $0xe0] sm:$0xff]
  %v701 = vld [vmem:[%s17 + $0xe8] sm:$0xff]
  %v702 = vld [vmem:[%s17 + $0xf0] sm:$0xff]
  %v703 = vld [vmem:[%s17 + $0xf8] sm:$0xff]
  %v704 = vld [vmem:[%s18] sm:$0x1]
  %v706 = vlaneseq
  %v707 = vshrl.u32 %v706, 7
  %v708 = vsub.s32 0, %v707
  %v709 = vrot.slane %v704, %v708
  %711 = vmatprep.subr.mxu0 0.0
  %712 = vmatpush1.msra.mxu0 %v672
  %713 = vmatprep.subr.mxu0 0.0
  %714 = vmatpush1.msra.mxu0 %v673
  %715 = vmatprep.subr.mxu0 0.0
  %716 = vmatpush1.msra.mxu0 %v674
  %717 = vmatprep.subr.mxu0 0.0
  %718 = vmatpush1.msra.mxu0 %v675
  %719 = vmatprep.subr.mxu0 0.0
  %720 = vmatpush1.msra.mxu0 %v676
  %721 = vmatprep.subr.mxu0 0.0
  %722 = vmatpush1.msra.mxu0 %v677
  %723 = vmatprep.subr.mxu0 0.0
  %724 = vmatpush1.msra.mxu0 %v678
  %725 = vmatprep.subr.mxu0 0.0
  %726 = vmatpush1.msra.mxu0 %v679
  %727 = vmatprep.subr.mxu0 0.0
  %728 = vmatpush1.msra.mxu0 %v680
  %729 = vmatprep.subr.mxu0 0.0
  %730 = vmatpush1.msra.mxu0 %v681
  %731 = vmatprep.subr.mxu0 0.0
  %732 = vmatpush1.msra.mxu0 %v682
  %733 = vmatprep.subr.mxu0 0.0
  %734 = vmatpush1.msra.mxu0 %v683
  %735 = vmatprep.subr.mxu0 0.0
  %736 = vmatpush1.msra.mxu0 %v684
  %737 = vmatprep.subr.mxu0 0.0
  %738 = vmatpush1.msra.mxu0 %v685
  %739 = vmatprep.subr.mxu0 0.0
  %740 = vmatpush1.msra.mxu0 %v686
  %741 = vmatprep.subr.mxu0 0.0
  %742 = vmatpush1.msra.mxu0 %v687
  %743 = vmatprep.subr.mxu0 0.0
  %744 = vmatpush1.msra.mxu0 %v688
  %745 = vmatprep.subr.mxu0 0.0
  %746 = vmatpush1.msra.mxu0 %v689
  %747 = vmatprep.subr.mxu0 0.0
  %748 = vmatpush1.msra.mxu0 %v690
  %749 = vmatprep.subr.mxu0 0.0
  %750 = vmatpush1.msra.mxu0 %v691
  %751 = vmatprep.subr.mxu0 0.0
  %752 = vmatpush1.msra.mxu0 %v692
  %753 = vmatprep.subr.mxu0 0.0
  %754 = vmatpush1.msra.mxu0 %v693
  %755 = vmatprep.subr.mxu0 0.0
  %756 = vmatpush1.msra.mxu0 %v694
  %757 = vmatprep.subr.mxu0 0.0
  %758 = vmatpush1.msra.mxu0 %v695
  %759 = vmatprep.subr.mxu0 0.0
  %760 = vmatpush1.msra.mxu0 %v696
  %761 = vmatprep.subr.mxu0 0.0
  %762 = vmatpush1.msra.mxu0 %v697
  %763 = vmatprep.subr.mxu0 0.0
  %764 = vmatpush1.msra.mxu0 %v698
  %765 = vmatprep.subr.mxu0 0.0
  %766 = vmatpush1.msra.mxu0 %v699
  %767 = vmatprep.subr.mxu0 0.0
  %768 = vmatpush1.msra.mxu0 %v700
  %769 = vmatprep.subr.mxu0 0.0
  %770 = vmatpush1.msra.mxu0 %v701
  %771 = vmatprep.subr.mxu0 0.0
  %772 = vmatpush1.msra.mxu0 %v702
  %773 = vmatprep.subr.mxu0 0.0
  %774 = vmatpush1.msra.mxu0 %v703
  %775 = vmatprep.mubr.f32.mxu0 %v664
  %776 = vmatmul.mubr.f32.gmra.mrb[0].mxu0 %v385
  %v777 = vpop.f32.mrb[0].mxu0
  %v778 = vadd.f32 %v709, %v777
  %v779 = vpop.f32.mrb[0].mxu0
  %780 = vmatprep.mubr.f32.mxu0 %v669
  %781 = vmatmul.mubr.f32.gmra.mrb[0].mxu0 %v386
  %v782 = vpop.f32.mrb[0].mxu0
  %v783 = vadd.f32 %v709, %v782
  %v784 = vpop.f32.mrb[0].mxu0
  %785 = vdwg.mxu0
  %v786 = vadd.f32 %v580, %v778
  %v787 = vadd.f32 %v585, %v783
  %v788 = vld [vmem:[%s5] sm:$0xff]
  %v789 = vld [vmem:[%s5 + $0x8] sm:$0xff]
  %v791 = vsel %vm392, %v788, 0
  %v794 = vsel %vm392, %v789, 0
  %796 = vmatprep.subr.mxu0 0.0
  %797 = vmatpush1.msra.mxu0 %v388
  %798 = vmatprep.subr.mxu0 0.0
  %799 = vmatpush1.msra.mxu0 %v389
  %800 = vmatprep.subr.mxu0 0.0
  %801 = vmatpush1.msra.mxu0 0.0
  %802 = vmatprep.subr.mxu0 0.0
  %803 = vmatpush1.msra.mxu0 0.0
  %804 = vmatprep.subr.mxu0 0.0
  %805 = vmatpush1.msra.mxu0 0.0
  %806 = vmatprep.subr.mxu0 0.0
  %807 = vmatpush1.msra.mxu0 0.0
  %808 = vmatprep.subr.mxu0 0.0
  %809 = vmatpush1.msra.mxu0 0.0
  %810 = vmatprep.subr.mxu0 0.0
  %811 = vmatpush1.msra.mxu0 0.0
  %812 = vmatprep.subr.mxu0 0.0
  %813 = vmatpush1.msra.mxu0 0.0
  %814 = vmatprep.subr.mxu0 0.0
  %815 = vmatpush1.msra.mxu0 0.0
  %816 = vmatprep.subr.mxu0 0.0
  %817 = vmatpush1.msra.mxu0 0.0
  %818 = vmatprep.subr.mxu0 0.0
  %819 = vmatpush1.msra.mxu0 0.0
  %820 = vmatprep.subr.mxu0 0.0
  %821 = vmatpush1.msra.mxu0 0.0
  %822 = vmatprep.subr.mxu0 0.0
  %823 = vmatpush1.msra.mxu0 0.0
  %824 = vmatprep.subr.mxu0 0.0
  %825 = vmatpush1.msra.mxu0 0.0
  %826 = vmatprep.subr.mxu0 0.0
  %827 = vmatpush1.msra.mxu0 0.0
  %828 = vmatprep.subr.mxu0 0.0
  %829 = vmatpush1.msra.mxu0 0.0
  %830 = vmatprep.subr.mxu0 0.0
  %831 = vmatpush1.msra.mxu0 0.0
  %832 = vmatprep.subr.mxu0 0.0
  %833 = vmatpush1.msra.mxu0 0.0
  %834 = vmatprep.subr.mxu0 0.0
  %835 = vmatpush1.msra.mxu0 0.0
  %836 = vmatprep.subr.mxu0 0.0
  %837 = vmatpush1.msra.mxu0 0.0
  %838 = vmatprep.subr.mxu0 0.0
  %839 = vmatpush1.msra.mxu0 0.0
  %840 = vmatprep.subr.mxu0 0.0
  %841 = vmatpush1.msra.mxu0 0.0
  %842 = vmatprep.subr.mxu0 0.0
  %843 = vmatpush1.msra.mxu0 0.0
  %844 = vmatprep.subr.mxu0 0.0
  %845 = vmatpush1.msra.mxu0 0.0
  %846 = vmatprep.subr.mxu0 0.0
  %847 = vmatpush1.msra.mxu0 0.0
  %848 = vmatprep.subr.mxu0 0.0
  %849 = vmatpush1.msra.mxu0 0.0
  %850 = vmatprep.subr.mxu0 0.0
  %851 = vmatpush1.msra.mxu0 0.0
  %852 = vmatprep.subr.mxu0 0.0
  %853 = vmatpush1.msra.mxu0 0.0
  %854 = vmatprep.subr.mxu0 0.0
  %855 = vmatpush1.msra.mxu0 0.0
  %856 = vmatprep.subr.mxu0 0.0
  %857 = vmatpush1.msra.mxu0 0.0
  %858 = vmatprep.subr.mxu0 0.0
  %859 = vmatpush1.msra.mxu0 0.0
  %860 = vmatprep.mubr.f32.mxu0 0.0
  %861 = vmatmul.mubr.f32.gmra.mrb[0].mxu0 %v791
  %v862 = vpop.f32.mrb[0].mxu0
  %v863 = vadd.f32 0.0, %v862
  %v864 = vpop.f32.mrb[0].mxu0
  %865 = vmatprep.mubr.f32.mxu0 0.0
  %866 = vmatmul.mubr.f32.gmra.mrb[0].mxu0 %v794
  %v867 = vpop.f32.mrb[0].mxu0
  %v868 = vadd.f32 0.0, %v867
  %v869 = vpop.f32.mrb[0].mxu0
  %870 = vdwg.mxu0
  %v871 = vld [vmem:[%s19] sm:$0xff]
  %v872 = vld [vmem:[%s19 + $0x8] sm:$0xff]
  %v873 = vld [vmem:[%s19 + $0x10] sm:$0xff]
  %v874 = vld [vmem:[%s19 + $0x18] sm:$0xff]
  %v875 = vld [vmem:[%s19 + $0x20] sm:$0xff]
  %v876 = vld [vmem:[%s19 + $0x28] sm:$0xff]
  %v877 = vld [vmem:[%s19 + $0x30] sm:$0xff]
  %v878 = vld [vmem:[%s19 + $0x38] sm:$0xff]
  %v879 = vld [vmem:[%s19 + $0x40] sm:$0xff]
  %v880 = vld [vmem:[%s19 + $0x48] sm:$0xff]
  %v881 = vld [vmem:[%s19 + $0x50] sm:$0xff]
  %v882 = vld [vmem:[%s19 + $0x58] sm:$0xff]
  %v883 = vld [vmem:[%s19 + $0x60] sm:$0xff]
  %v884 = vld [vmem:[%s19 + $0x68] sm:$0xff]
  %v885 = vld [vmem:[%s19 + $0x70] sm:$0xff]
  %v886 = vld [vmem:[%s19 + $0x78] sm:$0xff]
  %v887 = vld [vmem:[%s19 + $0x80] sm:$0xff]
  %v888 = vld [vmem:[%s19 + $0x88] sm:$0xff]
  %v889 = vld [vmem:[%s19 + $0x90] sm:$0xff]
  %v890 = vld [vmem:[%s19 + $0x98] sm:$0xff]
  %v891 = vld [vmem:[%s19 + $0xa0] sm:$0xff]
  %v892 = vld [vmem:[%s19 + $0xa8] sm:$0xff]
  %v893 = vld [vmem:[%s19 + $0xb0] sm:$0xff]
  %v894 = vld [vmem:[%s19 + $0xb8] sm:$0xff]
  %v895 = vld [vmem:[%s19 + $0xc0] sm:$0xff]
  %v896 = vld [vmem:[%s19 + $0xc8] sm:$0xff]
  %v897 = vld [vmem:[%s19 + $0xd0] sm:$0xff]
  %v898 = vld [vmem:[%s19 + $0xd8] sm:$0xff]
  %v899 = vld [vmem:[%s19 + $0xe0] sm:$0xff]
  %v900 = vld [vmem:[%s19 + $0xe8] sm:$0xff]
  %v901 = vld [vmem:[%s19 + $0xf0] sm:$0xff]
  %v902 = vld [vmem:[%s19 + $0xf8] sm:$0xff]
  %v903 = vld [vmem:[%s20] sm:$0x1]
  %v905 = vlaneseq
  %v906 = vshrl.u32 %v905, 7
  %v907 = vsub.s32 0, %v906
  %v908 = vrot.slane %v903, %v907
  %910 = vmatprep.subr.mxu0 0.0
  %911 = vmatpush1.msra.mxu0 %v871
  %912 = vmatprep.subr.mxu0 0.0
  %913 = vmatpush1.msra.mxu0 %v872
  %914 = vmatprep.subr.mxu0 0.0
  %915 = vmatpush1.msra.mxu0 %v873
  %916 = vmatprep.subr.mxu0 0.0
  %917 = vmatpush1.msra.mxu0 %v874
  %918 = vmatprep.subr.mxu0 0.0
  %919 = vmatpush1.msra.mxu0 %v875
  %920 = vmatprep.subr.mxu0 0.0
  %921 = vmatpush1.msra.mxu0 %v876
  %922 = vmatprep.subr.mxu0 0.0
  %923 = vmatpush1.msra.mxu0 %v877
  %924 = vmatprep.subr.mxu0 0.0
  %925 = vmatpush1.msra.mxu0 %v878
  %926 = vmatprep.subr.mxu0 0.0
  %927 = vmatpush1.msra.mxu0 %v879
  %928 = vmatprep.subr.mxu0 0.0
  %929 = vmatpush1.msra.mxu0 %v880
  %930 = vmatprep.subr.mxu0 0.0
  %931 = vmatpush1.msra.mxu0 %v881
  %932 = vmatprep.subr.mxu0 0.0
  %933 = vmatpush1.msra.mxu0 %v882
  %934 = vmatprep.subr.mxu0 0.0
  %935 = vmatpush1.msra.mxu0 %v883
  %936 = vmatprep.subr.mxu0 0.0
  %937 = vmatpush1.msra.mxu0 %v884
  %938 = vmatprep.subr.mxu0 0.0
  %939 = vmatpush1.msra.mxu0 %v885
  %940 = vmatprep.subr.mxu0 0.0
  %941 = vmatpush1.msra.mxu0 %v886
  %942 = vmatprep.subr.mxu0 0.0
  %943 = vmatpush1.msra.mxu0 %v887
  %944 = vmatprep.subr.mxu0 0.0
  %945 = vmatpush1.msra.mxu0 %v888
  %946 = vmatprep.subr.mxu0 0.0
  %947 = vmatpush1.msra.mxu0 %v889
  %948 = vmatprep.subr.mxu0 0.0
  %949 = vmatpush1.msra.mxu0 %v890
  %950 = vmatprep.subr.mxu0 0.0
  %951 = vmatpush1.msra.mxu0 %v891
  %952 = vmatprep.subr.mxu0 0.0
  %953 = vmatpush1.msra.mxu0 %v892
  %954 = vmatprep.subr.mxu0 0.0
  %955 = vmatpush1.msra.mxu0 %v893
  %956 = vmatprep.subr.mxu0 0.0
  %957 = vmatpush1.msra.mxu0 %v894
  %958 = vmatprep.subr.mxu0 0.0
  %959 = vmatpush1.msra.mxu0 %v895
  %960 = vmatprep.subr.mxu0 0.0
  %961 = vmatpush1.msra.mxu0 %v896
  %962 = vmatprep.subr.mxu0 0.0
  %963 = vmatpush1.msra.mxu0 %v897
  %964 = vmatprep.subr.mxu0 0.0
  %965 = vmatpush1.msra.mxu0 %v898
  %966 = vmatprep.subr.mxu0 0.0
  %967 = vmatpush1.msra.mxu0 %v899
  %968 = vmatprep.subr.mxu0 0.0
  %969 = vmatpush1.msra.mxu0 %v900
  %970 = vmatprep.subr.mxu0 0.0
  %971 = vmatpush1.msra.mxu0 %v901
  %972 = vmatprep.subr.mxu0 0.0
  %973 = vmatpush1.msra.mxu0 %v902
  %974 = vmatprep.mubr.f32.mxu0 %v863
  %975 = vmatmul.mubr.f32.gmra.mrb[0].mxu0 %v385
  %v976 = vpop.f32.mrb[0].mxu0
  %v977 = vadd.f32 %v908, %v976
  %v978 = vpop.f32.mrb[0].mxu0
  %979 = vmatprep.mubr.f32.mxu0 %v868
  %980 = vmatmul.mubr.f32.gmra.mrb[0].mxu0 %v386
  %v981 = vpop.f32.mrb[0].mxu0
  %v982 = vadd.f32 %v908, %v981
  %v983 = vpop.f32.mrb[0].mxu0
  %984 = vdwg.mxu0
  %v985 = vadd.f32 %v786, %v977
  %v986 = vadd.f32 %v787, %v982
  %v987 = vld [vmem:[%s6] sm:$0xff]
  %v989 = vsel %vm590, %v987, 0
  %991 = vmatprep.subr.mxu0 0.0
  %992 = vmatpush1.msra.mxu0 %v387
  %993 = vmatprep.subr.mxu0 0.0
  %994 = vmatpush1.msra.mxu0 0.0
  %995 = vmatprep.subr.mxu0 0.0
  %996 = vmatpush1.msra.mxu0 0.0
  %997 = vmatprep.subr.mxu0 0.0
  %998 = vmatpush1.msra.mxu0 0.0
  %999 = vmatprep.subr.mxu0 0.0
  %1000 = vmatpush1.msra.mxu0 0.0
  %1001 = vmatprep.subr.mxu0 0.0
  %1002 = vmatpush1.msra.mxu0 0.0
  %1003 = vmatprep.subr.mxu0 0.0
  %1004 = vmatpush1.msra.mxu0 0.0
  %1005 = vmatprep.subr.mxu0 0.0
  %1006 = vmatpush1.msra.mxu0 0.0
  %1007 = vmatprep.subr.mxu0 0.0
  %1008 = vmatpush1.msra.mxu0 0.0
  %1009 = vmatprep.subr.mxu0 0.0
  %1010 = vmatpush1.msra.mxu0 0.0
  %1011 = vmatprep.subr.mxu0 0.0
  %1012 = vmatpush1.msra.mxu0 0.0
  %1013 = vmatprep.subr.mxu0 0.0
  %1014 = vmatpush1.msra.mxu0 0.0
  %1015 = vmatprep.subr.mxu0 0.0
  %1016 = vmatpush1.msra.mxu0 0.0
  %1017 = vmatprep.subr.mxu0 0.0
  %1018 = vmatpush1.msra.mxu0 0.0
  %1019 = vmatprep.subr.mxu0 0.0
  %1020 = vmatpush1.msra.mxu0 0.0
  %1021 = vmatprep.subr.mxu0 0.0
  %1022 = vmatpush1.msra.mxu0 0.0
  %1023 = vmatprep.subr.mxu0 0.0
  %1024 = vmatpush1.msra.mxu0 0.0
  %1025 = vmatprep.subr.mxu0 0.0
  %1026 = vmatpush1.msra.mxu0 0.0
  %1027 = vmatprep.subr.mxu0 0.0
  %1028 = vmatpush1.msra.mxu0 0.0
  %1029 = vmatprep.subr.mxu0 0.0
  %1030 = vmatpush1.msra.mxu0 0.0
  %1031 = vmatprep.subr.mxu0 0.0
  %1032 = vmatpush1.msra.mxu0 0.0
  %1033 = vmatprep.subr.mxu0 0.0
  %1034 = vmatpush1.msra.mxu0 0.0
  %1035 = vmatprep.subr.mxu0 0.0
  %1036 = vmatpush1.msra.mxu0 0.0
  %1037 = vmatprep.subr.mxu0 0.0
  %1038 = vmatpush1.msra.mxu0 0.0
  %1039 = vmatprep.subr.mxu0 0.0
  %1040 = vmatpush1.msra.mxu0 0.0
  %1041 = vmatprep.subr.mxu0 0.0
  %1042 = vmatpush1.msra.mxu0 0.0
  %1043 = vmatprep.subr.mxu0 0.0
  %1044 = vmatpush1.msra.mxu0 0.0
  %1045 = vmatprep.subr.mxu0 0.0
  %1046 = vmatpush1.msra.mxu0 0.0
  %1047 = vmatprep.subr.mxu0 0.0
  %1048 = vmatpush1.msra.mxu0 0.0
  %1049 = vmatprep.subr.mxu0 0.0
  %1050 = vmatpush1.msra.mxu0 0.0
  %1051 = vmatprep.subr.mxu0 0.0
  %1052 = vmatpush1.msra.mxu0 0.0
  %1053 = vmatprep.subr.mxu0 0.0
  %1054 = vmatpush1.msra.mxu0 0.0
  %1055 = vmatprep.mubr.f32.mxu0 0.0
  %1056 = vmatmul.mubr.f32.gmra.mrb[0].mxu0 %v989
  %v1057 = vpop.f32.mrb[0].mxu0
  %v1058 = vadd.f32 0.0, %v1057
  %v1059 = vpop.f32.mrb[0].mxu0
  %1060 = vdwg.mxu0
  %v1061 = vld [vmem:[%s21] sm:$0xff]
  %v1062 = vld [vmem:[%s21 + $0x8] sm:$0xff]
  %v1063 = vld [vmem:[%s21 + $0x10] sm:$0xff]
  %v1064 = vld [vmem:[%s21 + $0x18] sm:$0xff]
  %v1065 = vld [vmem:[%s21 + $0x20] sm:$0xff]
  %v1066 = vld [vmem:[%s21 + $0x28] sm:$0xff]
  %v1067 = vld [vmem:[%s21 + $0x30] sm:$0xff]
  %v1068 = vld [vmem:[%s21 + $0x38] sm:$0xff]
  %v1069 = vld [vmem:[%s21 + $0x40] sm:$0xff]
  %v1070 = vld [vmem:[%s21 + $0x48] sm:$0xff]
  %v1071 = vld [vmem:[%s21 + $0x50] sm:$0xff]
  %v1072 = vld [vmem:[%s21 + $0x58] sm:$0xff]
  %v1073 = vld [vmem:[%s21 + $0x60] sm:$0xff]
  %v1074 = vld [vmem:[%s21 + $0x68] sm:$0xff]
  %v1075 = vld [vmem:[%s21 + $0x70] sm:$0xff]
  %v1076 = vld [vmem:[%s21 + $0x78] sm:$0xff]
  %v1077 = vld [vmem:[%s21 + $0x80] sm:$0xff]
  %v1078 = vld [vmem:[%s21 + $0x88] sm:$0xff]
  %v1079 = vld [vmem:[%s21 + $0x90] sm:$0xff]
  %v1080 = vld [vmem:[%s21 + $0x98] sm:$0xff]
  %v1081 = vld [vmem:[%s21 + $0xa0] sm:$0xff]
  %v1082 = vld [vmem:[%s21 + $0xa8] sm:$0xff]
  %v1083 = vld [vmem:[%s21 + $0xb0] sm:$0xff]
  %v1084 = vld [vmem:[%s21 + $0xb8] sm:$0xff]
  %v1085 = vld [vmem:[%s21 + $0xc0] sm:$0xff]
  %v1086 = vld [vmem:[%s21 + $0xc8] sm:$0xff]
  %v1087 = vld [vmem:[%s21 + $0xd0] sm:$0xff]
  %v1088 = vld [vmem:[%s21 + $0xd8] sm:$0xff]
  %v1089 = vld [vmem:[%s21 + $0xe0] sm:$0xff]
  %v1090 = vld [vmem:[%s21 + $0xe8] sm:$0xff]
  %v1091 = vld [vmem:[%s21 + $0xf0] sm:$0xff]
  %v1092 = vld [vmem:[%s21 + $0xf8] sm:$0xff]
  %v1093 = vld [vmem:[%s22] sm:$0x1]
  %v1095 = vlaneseq
  %v1096 = vshrl.u32 %v1095, 7
  %v1097 = vsub.s32 0, %v1096
  %v1098 = vrot.slane %v1093, %v1097
  %1100 = vmatprep.subr.mxu0 0.0
  %1101 = vmatpush1.msra.mxu0 %v1061
  %1102 = vmatprep.subr.mxu0 0.0
  %1103 = vmatpush1.msra.mxu0 %v1062
  %1104 = vmatprep.subr.mxu0 0.0
  %1105 = vmatpush1.msra.mxu0 %v1063
  %1106 = vmatprep.subr.mxu0 0.0
  %1107 = vmatpush1.msra.mxu0 %v1064
  %1108 = vmatprep.subr.mxu0 0.0
  %1109 = vmatpush1.msra.mxu0 %v1065
  %1110 = vmatprep.subr.mxu0 0.0
  %1111 = vmatpush1.msra.mxu0 %v1066
  %1112 = vmatprep.subr.mxu0 0.0
  %1113 = vmatpush1.msra.mxu0 %v1067
  %1114 = vmatprep.subr.mxu0 0.0
  %1115 = vmatpush1.msra.mxu0 %v1068
  %1116 = vmatprep.subr.mxu0 0.0
  %1117 = vmatpush1.msra.mxu0 %v1069
  %1118 = vmatprep.subr.mxu0 0.0
  %1119 = vmatpush1.msra.mxu0 %v1070
  %1120 = vmatprep.subr.mxu0 0.0
  %1121 = vmatpush1.msra.mxu0 %v1071
  %1122 = vmatprep.subr.mxu0 0.0
  %1123 = vmatpush1.msra.mxu0 %v1072
  %1124 = vmatprep.subr.mxu0 0.0
  %1125 = vmatpush1.msra.mxu0 %v1073
  %1126 = vmatprep.subr.mxu0 0.0
  %1127 = vmatpush1.msra.mxu0 %v1074
  %1128 = vmatprep.subr.mxu0 0.0
  %1129 = vmatpush1.msra.mxu0 %v1075
  %1130 = vmatprep.subr.mxu0 0.0
  %1131 = vmatpush1.msra.mxu0 %v1076
  %1132 = vmatprep.subr.mxu0 0.0
  %1133 = vmatpush1.msra.mxu0 %v1077
  %1134 = vmatprep.subr.mxu0 0.0
  %1135 = vmatpush1.msra.mxu0 %v1078
  %1136 = vmatprep.subr.mxu0 0.0
  %1137 = vmatpush1.msra.mxu0 %v1079
  %1138 = vmatprep.subr.mxu0 0.0
  %1139 = vmatpush1.msra.mxu0 %v1080
  %1140 = vmatprep.subr.mxu0 0.0
  %1141 = vmatpush1.msra.mxu0 %v1081
  %1142 = vmatprep.subr.mxu0 0.0
  %1143 = vmatpush1.msra.mxu0 %v1082
  %1144 = vmatprep.subr.mxu0 0.0
  %1145 = vmatpush1.msra.mxu0 %v1083
  %1146 = vmatprep.subr.mxu0 0.0
  %1147 = vmatpush1.msra.mxu0 %v1084
  %1148 = vmatprep.subr.mxu0 0.0
  %1149 = vmatpush1.msra.mxu0 %v1085
  %1150 = vmatprep.subr.mxu0 0.0
  %1151 = vmatpush1.msra.mxu0 %v1086
  %1152 = vmatprep.subr.mxu0 0.0
  %1153 = vmatpush1.msra.mxu0 %v1087
  %1154 = vmatprep.subr.mxu0 0.0
  %1155 = vmatpush1.msra.mxu0 %v1088
  %1156 = vmatprep.subr.mxu0 0.0
  %1157 = vmatpush1.msra.mxu0 %v1089
  %1158 = vmatprep.subr.mxu0 0.0
  %1159 = vmatpush1.msra.mxu0 %v1090
  %1160 = vmatprep.subr.mxu0 0.0
  %1161 = vmatpush1.msra.mxu0 %v1091
  %1162 = vmatprep.subr.mxu0 0.0
  %1163 = vmatpush1.msra.mxu0 %v1092
  %1164 = vmatprep.mubr.f32.mxu0 %v1058
  %1165 = vmatmul.mubr.f32.gmra.mrb[0].mxu0 %v387
  %v1166 = vpop.f32.mrb[0].mxu0
  %v1167 = vadd.f32 %v1098, %v1166
  %v1168 = vpop.f32.mrb[0].mxu0
  %1169 = vdwg.mxu0
  %v1170 = vld [vmem:[%s7] sm:$0xff]
  %v1171 = vld [vmem:[%s7 + $0x8] sm:$0xff]
  %v1173 = vsel %vm392, %v1170, 0
  %v1176 = vsel %vm392, %v1171, 0
  %1178 = vmatprep.subr.mxu0 0.0
  %1179 = vmatpush1.msra.mxu0 %v388
  %1180 = vmatprep.subr.mxu0 0.0
  %1181 = vmatpush1.msra.mxu0 %v389
  %1182 = vmatprep.subr.mxu0 0.0
  %1183 = vmatpush1.msra.mxu0 0.0
  %1184 = vmatprep.subr.mxu0 0.0
  %1185 = vmatpush1.msra.mxu0 0.0
  %1186 = vmatprep.subr.mxu0 0.0
  %1187 = vmatpush1.msra.mxu0 0.0
  %1188 = vmatprep.subr.mxu0 0.0
  %1189 = vmatpush1.msra.mxu0 0.0
  %1190 = vmatprep.subr.mxu0 0.0
  %1191 = vmatpush1.msra.mxu0 0.0
  %1192 = vmatprep.subr.mxu0 0.0
  %1193 = vmatpush1.msra.mxu0 0.0
  %1194 = vmatprep.subr.mxu0 0.0
  %1195 = vmatpush1.msra.mxu0 0.0
  %1196 = vmatprep.subr.mxu0 0.0
  %1197 = vmatpush1.msra.mxu0 0.0
  %1198 = vmatprep.subr.mxu0 0.0
  %1199 = vmatpush1.msra.mxu0 0.0
  %1200 = vmatprep.subr.mxu0 0.0
  %1201 = vmatpush1.msra.mxu0 0.0
  %1202 = vmatprep.subr.mxu0 0.0
  %1203 = vmatpush1.msra.mxu0 0.0
  %1204 = vmatprep.subr.mxu0 0.0
  %1205 = vmatpush1.msra.mxu0 0.0
  %1206 = vmatprep.subr.mxu0 0.0
  %1207 = vmatpush1.msra.mxu0 0.0
  %1208 = vmatprep.subr.mxu0 0.0
  %1209 = vmatpush1.msra.mxu0 0.0
  %1210 = vmatprep.subr.mxu0 0.0
  %1211 = vmatpush1.msra.mxu0 0.0
  %1212 = vmatprep.subr.mxu0 0.0
  %1213 = vmatpush1.msra.mxu0 0.0
  %1214 = vmatprep.subr.mxu0 0.0
  %1215 = vmatpush1.msra.mxu0 0.0
  %1216 = vmatprep.subr.mxu0 0.0
  %1217 = vmatpush1.msra.mxu0 0.0
  %1218 = vmatprep.subr.mxu0 0.0
  %1219 = vmatpush1.msra.mxu0 0.0
  %1220 = vmatprep.subr.mxu0 0.0
  %1221 = vmatpush1.msra.mxu0 0.0
  %1222 = vmatprep.subr.mxu0 0.0
  %1223 = vmatpush1.msra.mxu0 0.0
  %1224 = vmatprep.subr.mxu0 0.0
  %1225 = vmatpush1.msra.mxu0 0.0
  %1226 = vmatprep.subr.mxu0 0.0
  %1227 = vmatpush1.msra.mxu0 0.0
  %1228 = vmatprep.subr.mxu0 0.0
  %1229 = vmatpush1.msra.mxu0 0.0
  %1230 = vmatprep.subr.mxu0 0.0
  %1231 = vmatpush1.msra.mxu0 0.0
  %1232 = vmatprep.subr.mxu0 0.0
  %1233 = vmatpush1.msra.mxu0 0.0
  %1234 = vmatprep.subr.mxu0 0.0
  %1235 = vmatpush1.msra.mxu0 0.0
  %1236 = vmatprep.subr.mxu0 0.0
  %1237 = vmatpush1.msra.mxu0 0.0
  %1238 = vmatprep.subr.mxu0 0.0
  %1239 = vmatpush1.msra.mxu0 0.0
  %1240 = vmatprep.subr.mxu0 0.0
  %1241 = vmatpush1.msra.mxu0 0.0
  %1242 = vmatprep.mubr.f32.mxu0 0.0
  %1243 = vmatmul.mubr.f32.gmra.mrb[0].mxu0 %v1173
  %v1244 = vpop.f32.mrb[0].mxu0
  %v1245 = vadd.f32 0.0, %v1244
  %v1246 = vpop.f32.mrb[0].mxu0
  %1247 = vmatprep.mubr.f32.mxu0 0.0
  %1248 = vmatmul.mubr.f32.gmra.mrb[0].mxu0 %v1176
  %v1249 = vpop.f32.mrb[0].mxu0
  %v1250 = vadd.f32 0.0, %v1249
  %v1251 = vpop.f32.mrb[0].mxu0
  %1252 = vdwg.mxu0
  %v1253 = vld [vmem:[%s23] sm:$0xff]
  %v1254 = vld [vmem:[%s23 + $0x8] sm:$0xff]
  %v1255 = vld [vmem:[%s23 + $0x10] sm:$0xff]
  %v1256 = vld [vmem:[%s23 + $0x18] sm:$0xff]
  %v1257 = vld [vmem:[%s23 + $0x20] sm:$0xff]
  %v1258 = vld [vmem:[%s23 + $0x28] sm:$0xff]
  %v1259 = vld [vmem:[%s23 + $0x30] sm:$0xff]
  %v1260 = vld [vmem:[%s23 + $0x38] sm:$0xff]
  %v1261 = vld [vmem:[%s23 + $0x40] sm:$0xff]
  %v1262 = vld [vmem:[%s23 + $0x48] sm:$0xff]
  %v1263 = vld [vmem:[%s23 + $0x50] sm:$0xff]
  %v1264 = vld [vmem:[%s23 + $0x58] sm:$0xff]
  %v1265 = vld [vmem:[%s23 + $0x60] sm:$0xff]
  %v1266 = vld [vmem:[%s23 + $0x68] sm:$0xff]
  %v1267 = vld [vmem:[%s23 + $0x70] sm:$0xff]
  %v1268 = vld [vmem:[%s23 + $0x78] sm:$0xff]
  %v1269 = vld [vmem:[%s23 + $0x80] sm:$0xff]
  %v1270 = vld [vmem:[%s23 + $0x88] sm:$0xff]
  %v1271 = vld [vmem:[%s23 + $0x90] sm:$0xff]
  %v1272 = vld [vmem:[%s23 + $0x98] sm:$0xff]
  %v1273 = vld [vmem:[%s23 + $0xa0] sm:$0xff]
  %v1274 = vld [vmem:[%s23 + $0xa8] sm:$0xff]
  %v1275 = vld [vmem:[%s23 + $0xb0] sm:$0xff]
  %v1276 = vld [vmem:[%s23 + $0xb8] sm:$0xff]
  %v1277 = vld [vmem:[%s23 + $0xc0] sm:$0xff]
  %v1278 = vld [vmem:[%s23 + $0xc8] sm:$0xff]
  %v1279 = vld [vmem:[%s23 + $0xd0] sm:$0xff]
  %v1280 = vld [vmem:[%s23 + $0xd8] sm:$0xff]
  %v1281 = vld [vmem:[%s23 + $0xe0] sm:$0xff]
  %v1282 = vld [vmem:[%s23 + $0xe8] sm:$0xff]
  %v1283 = vld [vmem:[%s23 + $0xf0] sm:$0xff]
  %v1284 = vld [vmem:[%s23 + $0xf8] sm:$0xff]
  %v1285 = vld [vmem:[%s24] sm:$0x1]
  %v1287 = vlaneseq
  %v1288 = vshrl.u32 %v1287, 7
  %v1289 = vsub.s32 0, %v1288
  %v1290 = vrot.slane %v1285, %v1289
  %1292 = vmatprep.subr.mxu0 0.0
  %1293 = vmatpush1.msra.mxu0 %v1253
  %1294 = vmatprep.subr.mxu0 0.0
  %1295 = vmatpush1.msra.mxu0 %v1254
  %1296 = vmatprep.subr.mxu0 0.0
  %1297 = vmatpush1.msra.mxu0 %v1255
  %1298 = vmatprep.subr.mxu0 0.0
  %1299 = vmatpush1.msra.mxu0 %v1256
  %1300 = vmatprep.subr.mxu0 0.0
  %1301 = vmatpush1.msra.mxu0 %v1257
  %1302 = vmatprep.subr.mxu0 0.0
  %1303 = vmatpush1.msra.mxu0 %v1258
  %1304 = vmatprep.subr.mxu0 0.0
  %1305 = vmatpush1.msra.mxu0 %v1259
  %1306 = vmatprep.subr.mxu0 0.0
  %1307 = vmatpush1.msra.mxu0 %v1260
  %1308 = vmatprep.subr.mxu0 0.0
  %1309 = vmatpush1.msra.mxu0 %v1261
  %1310 = vmatprep.subr.mxu0 0.0
  %1311 = vmatpush1.msra.mxu0 %v1262
  %1312 = vmatprep.subr.mxu0 0.0
  %1313 = vmatpush1.msra.mxu0 %v1263
  %1314 = vmatprep.subr.mxu0 0.0
  %1315 = vmatpush1.msra.mxu0 %v1264
  %1316 = vmatprep.subr.mxu0 0.0
  %1317 = vmatpush1.msra.mxu0 %v1265
  %1318 = vmatprep.subr.mxu0 0.0
  %1319 = vmatpush1.msra.mxu0 %v1266
  %1320 = vmatprep.subr.mxu0 0.0
  %1321 = vmatpush1.msra.mxu0 %v1267
  %1322 = vmatprep.subr.mxu0 0.0
  %1323 = vmatpush1.msra.mxu0 %v1268
  %1324 = vmatprep.subr.mxu0 0.0
  %1325 = vmatpush1.msra.mxu0 %v1269
  %1326 = vmatprep.subr.mxu0 0.0
  %1327 = vmatpush1.msra.mxu0 %v1270
  %1328 = vmatprep.subr.mxu0 0.0
  %1329 = vmatpush1.msra.mxu0 %v1271
  %1330 = vmatprep.subr.mxu0 0.0
  %1331 = vmatpush1.msra.mxu0 %v1272
  %1332 = vmatprep.subr.mxu0 0.0
  %1333 = vmatpush1.msra.mxu0 %v1273
  %1334 = vmatprep.subr.mxu0 0.0
  %1335 = vmatpush1.msra.mxu0 %v1274
  %1336 = vmatprep.subr.mxu0 0.0
  %1337 = vmatpush1.msra.mxu0 %v1275
  %1338 = vmatprep.subr.mxu0 0.0
  %1339 = vmatpush1.msra.mxu0 %v1276
  %1340 = vmatprep.subr.mxu0 0.0
  %1341 = vmatpush1.msra.mxu0 %v1277
  %1342 = vmatprep.subr.mxu0 0.0
  %1343 = vmatpush1.msra.mxu0 %v1278
  %1344 = vmatprep.subr.mxu0 0.0
  %1345 = vmatpush1.msra.mxu0 %v1279
  %1346 = vmatprep.subr.mxu0 0.0
  %1347 = vmatpush1.msra.mxu0 %v1280
  %1348 = vmatprep.subr.mxu0 0.0
  %1349 = vmatpush1.msra.mxu0 %v1281
  %1350 = vmatprep.subr.mxu0 0.0
  %1351 = vmatpush1.msra.mxu0 %v1282
  %1352 = vmatprep.subr.mxu0 0.0
  %1353 = vmatpush1.msra.mxu0 %v1283
  %1354 = vmatprep.subr.mxu0 0.0
  %1355 = vmatpush1.msra.mxu0 %v1284
  %1356 = vmatprep.mubr.f32.mxu0 %v1245
  %1357 = vmatmul.mubr.f32.gmra.mrb[0].mxu0 %v388
  %v1358 = vpop.f32.mrb[0].mxu0
  %v1359 = vadd.f32 %v1290, %v1358
  %v1360 = vpop.f32.mrb[0].mxu0
  %1361 = vmatprep.mubr.f32.mxu0 %v1250
  %1362 = vmatmul.mubr.f32.gmra.mrb[0].mxu0 %v389
  %v1363 = vpop.f32.mrb[0].mxu0
  %v1364 = vadd.f32 %v1290, %v1363
  %v1365 = vpop.f32.mrb[0].mxu0
  %1366 = vdwg.mxu0
  %v1367 = vmax.f32 %v985, 0.0
  %v1368 = vmax.f32 %v986, 0.0
  %1369 = vst [vmem:[#allocation2] sm:$0xff] %v1367
  %1370 = vst [vmem:[#allocation2 + $0x8] sm:$0xff] %v1368
  %v1371 = vmax.f32 %v1167, 0.0
  %1372 = vst [vmem:[#allocation3] sm:$0xff] %v1371
  %v1373 = vmax.f32 %v1359, 0.0
  %v1374 = vmax.f32 %v1364, 0.0
  %1375 = vst [vmem:[#allocation4] sm:$0xff] %v1373
  %1376 = vst [vmem:[#allocation4 + $0x8] sm:$0xff] %v1374
  %v1377 = vld [vmem:[#allocation2] sm:$0xff]
  %v1378 = vld [vmem:[#allocation2 + $0x8] sm:$0xff]
  %v1379 = vld [vmem:[#allocation3] sm:$0xff]
  %v1380 = vld [vmem:[#allocation4] sm:$0xff]
  %v1381 = vld [vmem:[#allocation4 + $0x8] sm:$0xff]
  %v1382 = vld [vmem:[%s3] sm:$0xff]
  %v1383 = vld [vmem:[%s3 + $0x8] sm:$0xff]
  %v1385 = vsel %vm392, %v1382, 0
  %v1388 = vsel %vm392, %v1383, 0
  %1390 = vmatprep.subr.mxu0 0.0
  %1391 = vmatpush1.msra.mxu0 %v1377
  %1392 = vmatprep.subr.mxu0 0.0
  %1393 = vmatpush1.msra.mxu0 %v1378
  %1394 = vmatprep.subr.mxu0 0.0
  %1395 = vmatpush1.msra.mxu0 0.0
  %1396 = vmatprep.subr.mxu0 0.0
  %1397 = vmatpush1.msra.mxu0 0.0
  %1398 = vmatprep.subr.mxu0 0.0
  %1399 = vmatpush1.msra.mxu0 0.0
  %1400 = vmatprep.subr.mxu0 0.0
  %1401 = vmatpush1.msra.mxu0 0.0
  %1402 = vmatprep.subr.mxu0 0.0
  %1403 = vmatpush1.msra.mxu0 0.0
  %1404 = vmatprep.subr.mxu0 0.0
  %1405 = vmatpush1.msra.mxu0 0.0
  %1406 = vmatprep.subr.mxu0 0.0
  %1407 = vmatpush1.msra.mxu0 0.0
  %1408 = vmatprep.subr.mxu0 0.0
  %1409 = vmatpush1.msra.mxu0 0.0
  %1410 = vmatprep.subr.mxu0 0.0
  %1411 = vmatpush1.msra.mxu0 0.0
  %1412 = vmatprep.subr.mxu0 0.0
  %1413 = vmatpush1.msra.mxu0 0.0
  %1414 = vmatprep.subr.mxu0 0.0
  %1415 = vmatpush1.msra.mxu0 0.0
  %1416 = vmatprep.subr.mxu0 0.0
  %1417 = vmatpush1.msra.mxu0 0.0
  %1418 = vmatprep.subr.mxu0 0.0
  %1419 = vmatpush1.msra.mxu0 0.0
  %1420 = vmatprep.subr.mxu0 0.0
  %1421 = vmatpush1.msra.mxu0 0.0
  %1422 = vmatprep.subr.mxu0 0.0
  %1423 = vmatpush1.msra.mxu0 0.0
  %1424 = vmatprep.subr.mxu0 0.0
  %1425 = vmatpush1.msra.mxu0 0.0
  %1426 = vmatprep.subr.mxu0 0.0
  %1427 = vmatpush1.msra.mxu0 0.0
  %1428 = vmatprep.subr.mxu0 0.0
  %1429 = vmatpush1.msra.mxu0 0.0
  %1430 = vmatprep.subr.mxu0 0.0
  %1431 = vmatpush1.msra.mxu0 0.0
  %1432 = vmatprep.subr.mxu0 0.0
  %1433 = vmatpush1.msra.mxu0 0.0
  %1434 = vmatprep.subr.mxu0 0.0
  %1435 = vmatpush1.msra.mxu0 0.0
  %1436 = vmatprep.subr.mxu0 0.0
  %1437 = vmatpush1.msra.mxu0 0.0
  %1438 = vmatprep.subr.mxu0 0.0
  %1439 = vmatpush1.msra.mxu0 0.0
  %1440 = vmatprep.subr.mxu0 0.0
  %1441 = vmatpush1.msra.mxu0 0.0
  %1442 = vmatprep.subr.mxu0 0.0
  %1443 = vmatpush1.msra.mxu0 0.0
  %1444 = vmatprep.subr.mxu0 0.0
  %1445 = vmatpush1.msra.mxu0 0.0
  %1446 = vmatprep.subr.mxu0 0.0
  %1447 = vmatpush1.msra.mxu0 0.0
  %1448 = vmatprep.subr.mxu0 0.0
  %1449 = vmatpush1.msra.mxu0 0.0
  %1450 = vmatprep.subr.mxu0 0.0
  %1451 = vmatpush1.msra.mxu0 0.0
  %1452 = vmatprep.subr.mxu0 0.0
  %1453 = vmatpush1.msra.mxu0 0.0
  %1454 = vmatprep.mubr.f32.mxu0 0.0
  %1455 = vmatmul.mubr.f32.gmra.mrb[0].mxu0 %v1385
  %v1456 = vpop.f32.mrb[0].mxu0
  %v1457 = vadd.f32 0.0, %v1456
  %v1458 = vpop.f32.mrb[0].mxu0
  %1459 = vmatprep.mubr.f32.mxu0 0.0
  %1460 = vmatmul.mubr.f32.gmra.mrb[0].mxu0 %v1388
  %v1461 = vpop.f32.mrb[0].mxu0
  %v1462 = vadd.f32 0.0, %v1461
  %v1463 = vpop.f32.mrb[0].mxu0
  %1464 = vdwg.mxu0
  %v1465 = vld [vmem:[%s15] sm:$0xff]
  %v1466 = vld [vmem:[%s15 + $0x8] sm:$0xff]
  %v1467 = vld [vmem:[%s15 + $0x10] sm:$0xff]
  %v1468 = vld [vmem:[%s15 + $0x18] sm:$0xff]
  %v1469 = vld [vmem:[%s15 + $0x20] sm:$0xff]
  %v1470 = vld [vmem:[%s15 + $0x28] sm:$0xff]
  %v1471 = vld [vmem:[%s15 + $0x30] sm:$0xff]
  %v1472 = vld [vmem:[%s15 + $0x38] sm:$0xff]
  %v1473 = vld [vmem:[%s15 + $0x40] sm:$0xff]
  %v1474 = vld [vmem:[%s15 + $0x48] sm:$0xff]
  %v1475 = vld [vmem:[%s15 + $0x50] sm:$0xff]
  %v1476 = vld [vmem:[%s15 + $0x58] sm:$0xff]
  %v1477 = vld [vmem:[%s15 + $0x60] sm:$0xff]
  %v1478 = vld [vmem:[%s15 + $0x68] sm:$0xff]
  %v1479 = vld [vmem:[%s15 + $0x70] sm:$0xff]
  %v1480 = vld [vmem:[%s15 + $0x78] sm:$0xff]
  %v1481 = vld [vmem:[%s15 + $0x80] sm:$0xff]
  %v1482 = vld [vmem:[%s15 + $0x88] sm:$0xff]
  %v1483 = vld [vmem:[%s15 + $0x90] sm:$0xff]
  %v1484 = vld [vmem:[%s15 + $0x98] sm:$0xff]
  %v1485 = vld [vmem:[%s15 + $0xa0] sm:$0xff]
  %v1486 = vld [vmem:[%s15 + $0xa8] sm:$0xff]
  %v1487 = vld [vmem:[%s15 + $0xb0] sm:$0xff]
  %v1488 = vld [vmem:[%s15 + $0xb8] sm:$0xff]
  %v1489 = vld [vmem:[%s15 + $0xc0] sm:$0xff]
  %v1490 = vld [vmem:[%s15 + $0xc8] sm:$0xff]
  %v1491 = vld [vmem:[%s15 + $0xd0] sm:$0xff]
  %v1492 = vld [vmem:[%s15 + $0xd8] sm:$0xff]
  %v1493 = vld [vmem:[%s15 + $0xe0] sm:$0xff]
  %v1494 = vld [vmem:[%s15 + $0xe8] sm:$0xff]
  %v1495 = vld [vmem:[%s15 + $0xf0] sm:$0xff]
  %v1496 = vld [vmem:[%s15 + $0xf8] sm:$0xff]
  %v1497 = vld [vmem:[%s16] sm:$0x1]
  %v1499 = vlaneseq
  %v1500 = vshrl.u32 %v1499, 7
  %v1501 = vsub.s32 0, %v1500
  %v1502 = vrot.slane %v1497, %v1501
  %1504 = vmatprep.subr.mxu0 0.0
  %1505 = vmatpush1.msra.mxu0 %v1465
  %1506 = vmatprep.subr.mxu0 0.0
  %1507 = vmatpush1.msra.mxu0 %v1466
  %1508 = vmatprep.subr.mxu0 0.0
  %1509 = vmatpush1.msra.mxu0 %v1467
  %1510 = vmatprep.subr.mxu0 0.0
  %1511 = vmatpush1.msra.mxu0 %v1468
  %1512 = vmatprep.subr.mxu0 0.0
  %1513 = vmatpush1.msra.mxu0 %v1469
  %1514 = vmatprep.subr.mxu0 0.0
  %1515 = vmatpush1.msra.mxu0 %v1470
  %1516 = vmatprep.subr.mxu0 0.0
  %1517 = vmatpush1.msra.mxu0 %v1471
  %1518 = vmatprep.subr.mxu0 0.0
  %1519 = vmatpush1.msra.mxu0 %v1472
  %1520 = vmatprep.subr.mxu0 0.0
  %1521 = vmatpush1.msra.mxu0 %v1473
  %1522 = vmatprep.subr.mxu0 0.0
  %1523 = vmatpush1.msra.mxu0 %v1474
  %1524 = vmatprep.subr.mxu0 0.0
  %1525 = vmatpush1.msra.mxu0 %v1475
  %1526 = vmatprep.subr.mxu0 0.0
  %1527 = vmatpush1.msra.mxu0 %v1476
  %1528 = vmatprep.subr.mxu0 0.0
  %1529 = vmatpush1.msra.mxu0 %v1477
  %1530 = vmatprep.subr.mxu0 0.0
  %1531 = vmatpush1.msra.mxu0 %v1478
  %1532 = vmatprep.subr.mxu0 0.0
  %1533 = vmatpush1.msra.mxu0 %v1479
  %1534 = vmatprep.subr.mxu0 0.0
  %1535 = vmatpush1.msra.mxu0 %v1480
  %1536 = vmatprep.subr.mxu0 0.0
  %1537 = vmatpush1.msra.mxu0 %v1481
  %1538 = vmatprep.subr.mxu0 0.0
  %1539 = vmatpush1.msra.mxu0 %v1482
  %1540 = vmatprep.subr.mxu0 0.0
  %1541 = vmatpush1.msra.mxu0 %v1483
  %1542 = vmatprep.subr.mxu0 0.0
  %1543 = vmatpush1.msra.mxu0 %v1484
  %1544 = vmatprep.subr.mxu0 0.0
  %1545 = vmatpush1.msra.mxu0 %v1485
  %1546 = vmatprep.subr.mxu0 0.0
  %1547 = vmatpush1.msra.mxu0 %v1486
  %1548 = vmatprep.subr.mxu0 0.0
  %1549 = vmatpush1.msra.mxu0 %v1487
  %1550 = vmatprep.subr.mxu0 0.0
  %1551 = vmatpush1.msra.mxu0 %v1488
  %1552 = vmatprep.subr.mxu0 0.0
  %1553 = vmatpush1.msra.mxu0 %v1489
  %1554 = vmatprep.subr.mxu0 0.0
  %1555 = vmatpush1.msra.mxu0 %v1490
  %1556 = vmatprep.subr.mxu0 0.0
  %1557 = vmatpush1.msra.mxu0 %v1491
  %1558 = vmatprep.subr.mxu0 0.0
  %1559 = vmatpush1.msra.mxu0 %v1492
  %1560 = vmatprep.subr.mxu0 0.0
  %1561 = vmatpush1.msra.mxu0 %v1493
  %1562 = vmatprep.subr.mxu0 0.0
  %1563 = vmatpush1.msra.mxu0 %v1494
  %1564 = vmatprep.subr.mxu0 0.0
  %1565 = vmatpush1.msra.mxu0 %v1495
  %1566 = vmatprep.subr.mxu0 0.0
  %1567 = vmatpush1.msra.mxu0 %v1496
  %1568 = vmatprep.mubr.f32.mxu0 %v1457
  %1569 = vmatmul.mubr.f32.gmra.mrb[0].mxu0 %v1377
  %v1570 = vpop.f32.mrb[0].mxu0
  %v1571 = vadd.f32 %v1502, %v1570
  %v1572 = vpop.f32.mrb[0].mxu0
  %1573 = vmatprep.mubr.f32.mxu0 %v1462
  %1574 = vmatmul.mubr.f32.gmra.mrb[0].mxu0 %v1378
  %v1575 = vpop.f32.mrb[0].mxu0
  %v1576 = vadd.f32 %v1502, %v1575
  %v1577 = vpop.f32.mrb[0].mxu0
  %1578 = vdwg.mxu0
  %v1579 = vld [vmem:[%s4] sm:$0xff]
  %v1580 = vld [vmem:[%s4 + $0x8] sm:$0xff]
  %v1582 = vsel %vm590, %v1579, 0
  %v1585 = vsel %vm590, %v1580, 0
  %1587 = vmatprep.subr.mxu0 0.0
  %1588 = vmatpush1.msra.mxu0 %v1379
  %1589 = vmatprep.subr.mxu0 0.0
  %1590 = vmatpush1.msra.mxu0 0.0
  %1591 = vmatprep.subr.mxu0 0.0
  %1592 = vmatpush1.msra.mxu0 0.0
  %1593 = vmatprep.subr.mxu0 0.0
  %1594 = vmatpush1.msra.mxu0 0.0
  %1595 = vmatprep.subr.mxu0 0.0
  %1596 = vmatpush1.msra.mxu0 0.0
  %1597 = vmatprep.subr.mxu0 0.0
  %1598 = vmatpush1.msra.mxu0 0.0
  %1599 = vmatprep.subr.mxu0 0.0
  %1600 = vmatpush1.msra.mxu0 0.0
  %1601 = vmatprep.subr.mxu0 0.0
  %1602 = vmatpush1.msra.mxu0 0.0
  %1603 = vmatprep.subr.mxu0 0.0
  %1604 = vmatpush1.msra.mxu0 0.0
  %1605 = vmatprep.subr.mxu0 0.0
  %1606 = vmatpush1.msra.mxu0 0.0
  %1607 = vmatprep.subr.mxu0 0.0
  %1608 = vmatpush1.msra.mxu0 0.0
  %1609 = vmatprep.subr.mxu0 0.0
  %1610 = vmatpush1.msra.mxu0 0.0
  %1611 = vmatprep.subr.mxu0 0.0
  %1612 = vmatpush1.msra.mxu0 0.0
  %1613 = vmatprep.subr.mxu0 0.0
  %1614 = vmatpush1.msra.mxu0 0.0
  %1615 = vmatprep.subr.mxu0 0.0
  %1616 = vmatpush1.msra.mxu0 0.0
  %1617 = vmatprep.subr.mxu0 0.0
  %1618 = vmatpush1.msra.mxu0 0.0
  %1619 = vmatprep.subr.mxu0 0.0
  %1620 = vmatpush1.msra.mxu0 0.0
  %1621 = vmatprep.subr.mxu0 0.0
  %1622 = vmatpush1.msra.mxu0 0.0
  %1623 = vmatprep.subr.mxu0 0.0
  %1624 = vmatpush1.msra.mxu0 0.0
  %1625 = vmatprep.subr.mxu0 0.0
  %1626 = vmatpush1.msra.mxu0 0.0
  %1627 = vmatprep.subr.mxu0 0.0
  %1628 = vmatpush1.msra.mxu0 0.0
  %1629 = vmatprep.subr.mxu0 0.0
  %1630 = vmatpush1.msra.mxu0 0.0
  %1631 = vmatprep.subr.mxu0 0.0
  %1632 = vmatpush1.msra.mxu0 0.0
  %1633 = vmatprep.subr.mxu0 0.0
  %1634 = vmatpush1.msra.mxu0 0.0
  %1635 = vmatprep.subr.mxu0 0.0
  %1636 = vmatpush1.msra.mxu0 0.0
  %1637 = vmatprep.subr.mxu0 0.0
  %1638 = vmatpush1.msra.mxu0 0.0
  %1639 = vmatprep.subr.mxu0 0.0
  %1640 = vmatpush1.msra.mxu0 0.0
  %1641 = vmatprep.subr.mxu0 0.0
  %1642 = vmatpush1.msra.mxu0 0.0
  %1643 = vmatprep.subr.mxu0 0.0
  %1644 = vmatpush1.msra.mxu0 0.0
  %1645 = vmatprep.subr.mxu0 0.0
  %1646 = vmatpush1.msra.mxu0 0.0
  %1647 = vmatprep.subr.mxu0 0.0
  %1648 = vmatpush1.msra.mxu0 0.0
  %1649 = vmatprep.subr.mxu0 0.0
  %1650 = vmatpush1.msra.mxu0 0.0
  %1651 = vmatprep.mubr.f32.mxu0 0.0
  %1652 = vmatmul.mubr.f32.gmra.mrb[0].mxu0 %v1582
  %v1653 = vpop.f32.mrb[0].mxu0
  %v1654 = vadd.f32 0.0, %v1653
  %v1655 = vpop.f32.mrb[0].mxu0
  %1656 = vmatprep.mubr.f32.mxu0 0.0
  %1657 = vmatmul.mubr.f32.gmra.mrb[0].mxu0 %v1585
  %v1658 = vpop.f32.mrb[0].mxu0
  %v1659 = vadd.f32 0.0, %v1658
  %v1660 = vpop.f32.mrb[0].mxu0
  %1661 = vdwg.mxu0
  %v1662 = vld [vmem:[%s17] sm:$0xff]
  %v1663 = vld [vmem:[%s17 + $0x8] sm:$0xff]
  %v1664 = vld [vmem:[%s17 + $0x10] sm:$0xff]
  %v1665 = vld [vmem:[%s17 + $0x18] sm:$0xff]
  %v1666 = vld [vmem:[%s17 + $0x20] sm:$0xff]
  %v1667 = vld [vmem:[%s17 + $0x28] sm:$0xff]
  %v1668 = vld [vmem:[%s17 + $0x30] sm:$0xff]
  %v1669 = vld [vmem:[%s17 + $0x38] sm:$0xff]
  %v1670 = vld [vmem:[%s17 + $0x40] sm:$0xff]
  %v1671 = vld [vmem:[%s17 + $0x48] sm:$0xff]
  %v1672 = vld [vmem:[%s17 + $0x50] sm:$0xff]
  %v1673 = vld [vmem:[%s17 + $0x58] sm:$0xff]
  %v1674 = vld [vmem:[%s17 + $0x60] sm:$0xff]
  %v1675 = vld [vmem:[%s17 + $0x68] sm:$0xff]
  %v1676 = vld [vmem:[%s17 + $0x70] sm:$0xff]
  %v1677 = vld [vmem:[%s17 + $0x78] sm:$0xff]
  %v1678 = vld [vmem:[%s17 + $0x80] sm:$0xff]
  %v1679 = vld [vmem:[%s17 + $0x88] sm:$0xff]
  %v1680 = vld [vmem:[%s17 + $0x90] sm:$0xff]
  %v1681 = vld [vmem:[%s17 + $0x98] sm:$0xff]
  %v1682 = vld [vmem:[%s17 + $0xa0] sm:$0xff]
  %v1683 = vld [vmem:[%s17 + $0xa8] sm:$0xff]
  %v1684 = vld [vmem:[%s17 + $0xb0] sm:$0xff]
  %v1685 = vld [vmem:[%s17 + $0xb8] sm:$0xff]
  %v1686 = vld [vmem:[%s17 + $0xc0] sm:$0xff]
  %v1687 = vld [vmem:[%s17 + $0xc8] sm:$0xff]
  %v1688 = vld [vmem:[%s17 + $0xd0] sm:$0xff]
  %v1689 = vld [vmem:[%s17 + $0xd8] sm:$0xff]
  %v1690 = vld [vmem:[%s17 + $0xe0] sm:$0xff]
  %v1691 = vld [vmem:[%s17 + $0xe8] sm:$0xff]
  %v1692 = vld [vmem:[%s17 + $0xf0] sm:$0xff]
  %v1693 = vld [vmem:[%s17 + $0xf8] sm:$0xff]
  %v1694 = vld [vmem:[%s18] sm:$0x1]
  %v1696 = vlaneseq
  %v1697 = vshrl.u32 %v1696, 7
  %v1698 = vsub.s32 0, %v1697
  %v1699 = vrot.slane %v1694, %v1698
  %1701 = vmatprep.subr.mxu0 0.0
  %1702 = vmatpush1.msra.mxu0 %v1662
  %1703 = vmatprep.subr.mxu0 0.0
  %1704 = vmatpush1.msra.mxu0 %v1663
  %1705 = vmatprep.subr.mxu0 0.0
  %1706 = vmatpush1.msra.mxu0 %v1664
  %1707 = vmatprep.subr.mxu0 0.0
  %1708 = vmatpush1.msra.mxu0 %v1665
  %1709 = vmatprep.subr.mxu0 0.0
  %1710 = vmatpush1.msra.mxu0 %v1666
  %1711 = vmatprep.subr.mxu0 0.0
  %1712 = vmatpush1.msra.mxu0 %v1667
  %1713 = vmatprep.subr.mxu0 0.0
  %1714 = vmatpush1.msra.mxu0 %v1668
  %1715 = vmatprep.subr.mxu0 0.0
  %1716 = vmatpush1.msra.mxu0 %v1669
  %1717 = vmatprep.subr.mxu0 0.0
  %1718 = vmatpush1.msra.mxu0 %v1670
  %1719 = vmatprep.subr.mxu0 0.0
  %1720 = vmatpush1.msra.mxu0 %v1671
  %1721 = vmatprep.subr.mxu0 0.0
  %1722 = vmatpush1.msra.mxu0 %v1672
  %1723 = vmatprep.subr.mxu0 0.0
  %1724 = vmatpush1.msra.mxu0 %v1673
  %1725 = vmatprep.subr.mxu0 0.0
  %1726 = vmatpush1.msra.mxu0 %v1674
  %1727 = vmatprep.subr.mxu0 0.0
  %1728 = vmatpush1.msra.mxu0 %v1675
  %1729 = vmatprep.subr.mxu0 0.0
  %1730 = vmatpush1.msra.mxu0 %v1676
  %1731 = vmatprep.subr.mxu0 0.0
  %1732 = vmatpush1.msra.mxu0 %v1677
  %1733 = vmatprep.subr.mxu0 0.0
  %1734 = vmatpush1.msra.mxu0 %v1678
  %1735 = vmatprep.subr.mxu0 0.0
  %1736 = vmatpush1.msra.mxu0 %v1679
  %1737 = vmatprep.subr.mxu0 0.0
  %1738 = vmatpush1.msra.mxu0 %v1680
  %1739 = vmatprep.subr.mxu0 0.0
  %1740 = vmatpush1.msra.mxu0 %v1681
  %1741 = vmatprep.subr.mxu0 0.0
  %1742 = vmatpush1.msra.mxu0 %v1682
  %1743 = vmatprep.subr.mxu0 0.0
  %1744 = vmatpush1.msra.mxu0 %v1683
  %1745 = vmatprep.subr.mxu0 0.0
  %1746 = vmatpush1.msra.mxu0 %v1684
  %1747 = vmatprep.subr.mxu0 0.0
  %1748 = vmatpush1.msra.mxu0 %v1685
  %1749 = vmatprep.subr.mxu0 0.0
  %1750 = vmatpush1.msra.mxu0 %v1686
  %1751 = vmatprep.subr.mxu0 0.0
  %1752 = vmatpush1.msra.mxu0 %v1687
  %1753 = vmatprep.subr.mxu0 0.0
  %1754 = vmatpush1.msra.mxu0 %v1688
  %1755 = vmatprep.subr.mxu0 0.0
  %1756 = vmatpush1.msra.mxu0 %v1689
  %1757 = vmatprep.subr.mxu0 0.0
  %1758 = vmatpush1.msra.mxu0 %v1690
  %1759 = vmatprep.subr.mxu0 0.0
  %1760 = vmatpush1.msra.mxu0 %v1691
  %1761 = vmatprep.subr.mxu0 0.0
  %1762 = vmatpush1.msra.mxu0 %v1692
  %1763 = vmatprep.subr.mxu0 0.0
  %1764 = vmatpush1.msra.mxu0 %v1693
  %1765 = vmatprep.mubr.f32.mxu0 %v1654
  %1766 = vmatmul.mubr.f32.gmra.mrb[0].mxu0 %v1377
  %v1767 = vpop.f32.mrb[0].mxu0
  %v1768 = vadd.f32 %v1699, %v1767
  %v1769 = vpop.f32.mrb[0].mxu0
  %1770 = vmatprep.mubr.f32.mxu0 %v1659
  %1771 = vmatmul.mubr.f32.gmra.mrb[0].mxu0 %v1378
  %v1772 = vpop.f32.mrb[0].mxu0
  %v1773 = vadd.f32 %v1699, %v1772
  %v1774 = vpop.f32.mrb[0].mxu0
  %1775 = vdwg.mxu0
  %v1776 = vadd.f32 %v1571, %v1768
  %v1777 = vadd.f32 %v1576, %v1773
  %v1778 = vld [vmem:[%s5] sm:$0xff]
  %v1779 = vld [vmem:[%s5 + $0x8] sm:$0xff]
  %v1781 = vsel %vm392, %v1778, 0
  %v1784 = vsel %vm392, %v1779, 0
  %1786 = vmatprep.subr.mxu0 0.0
  %1787 = vmatpush1.msra.mxu0 %v1380
  %1788 = vmatprep.subr.mxu0 0.0
  %1789 = vmatpush1.msra.mxu0 %v1381
  %1790 = vmatprep.subr.mxu0 0.0
  %1791 = vmatpush1.msra.mxu0 0.0
  %1792 = vmatprep.subr.mxu0 0.0
  %1793 = vmatpush1.msra.mxu0 0.0
  %1794 = vmatprep.subr.mxu0 0.0
  %1795 = vmatpush1.msra.mxu0 0.0
  %1796 = vmatprep.subr.mxu0 0.0
  %1797 = vmatpush1.msra.mxu0 0.0
  %1798 = vmatprep.subr.mxu0 0.0
  %1799 = vmatpush1.msra.mxu0 0.0
  %1800 = vmatprep.subr.mxu0 0.0
  %1801 = vmatpush1.msra.mxu0 0.0
  %1802 = vmatprep.subr.mxu0 0.0
  %1803 = vmatpush1.msra.mxu0 0.0
  %1804 = vmatprep.subr.mxu0 0.0
  %1805 = vmatpush1.msra.mxu0 0.0
  %1806 = vmatprep.subr.mxu0 0.0
  %1807 = vmatpush1.msra.mxu0 0.0
  %1808 = vmatprep.subr.mxu0 0.0
  %1809 = vmatpush1.msra.mxu0 0.0
  %1810 = vmatprep.subr.mxu0 0.0
  %1811 = vmatpush1.msra.mxu0 0.0
  %1812 = vmatprep.subr.mxu0 0.0
  %1813 = vmatpush1.msra.mxu0 0.0
  %1814 = vmatprep.subr.mxu0 0.0
  %1815 = vmatpush1.msra.mxu0 0.0
  %1816 = vmatprep.subr.mxu0 0.0
  %1817 = vmatpush1.msra.mxu0 0.0
  %1818 = vmatprep.subr.mxu0 0.0
  %1819 = vmatpush1.msra.mxu0 0.0
  %1820 = vmatprep.subr.mxu0 0.0
  %1821 = vmatpush1.msra.mxu0 0.0
  %1822 = vmatprep.subr.mxu0 0.0
  %1823 = vmatpush1.msra.mxu0 0.0
  %1824 = vmatprep.subr.mxu0 0.0
  %1825 = vmatpush1.msra.mxu0 0.0
  %1826 = vmatprep.subr.mxu0 0.0
  %1827 = vmatpush1.msra.mxu0 0.0
  %1828 = vmatprep.subr.mxu0 0.0
  %1829 = vmatpush1.msra.mxu0 0.0
  %1830 = vmatprep.subr.mxu0 0.0
  %1831 = vmatpush1.msra.mxu0 0.0
  %1832 = vmatprep.subr.mxu0 0.0
  %1833 = vmatpush1.msra.mxu0 0.0
  %1834 = vmatprep.subr.mxu0 0.0
  %1835 = vmatpush1.msra.mxu0 0.0
  %1836 = vmatprep.subr.mxu0 0.0
  %1837 = vmatpush1.msra.mxu0 0.0
  %1838 = vmatprep.subr.mxu0 0.0
  %1839 = vmatpush1.msra.mxu0 0.0
  %1840 = vmatprep.subr.mxu0 0.0
  %1841 = vmatpush1.msra.mxu0 0.0
  %1842 = vmatprep.subr.mxu0 0.0
  %1843 = vmatpush1.msra.mxu0 0.0
  %1844 = vmatprep.subr.mxu0 0.0
  %1845 = vmatpush1.msra.mxu0 0.0
  %1846 = vmatprep.subr.mxu0 0.0
  %1847 = vmatpush1.msra.mxu0 0.0
  %1848 = vmatprep.subr.mxu0 0.0
  %1849 = vmatpush1.msra.mxu0 0.0
  %1850 = vmatprep.mubr.f32.mxu0 0.0
  %1851 = vmatmul.mubr.f32.gmra.mrb[0].mxu0 %v1781
  %v1852 = vpop.f32.mrb[0].mxu0
  %v1853 = vadd.f32 0.0, %v1852
  %v1854 = vpop.f32.mrb[0].mxu0
  %1855 = vmatprep.mubr.f32.mxu0 0.0
  %1856 = vmatmul.mubr.f32.gmra.mrb[0].mxu0 %v1784
  %v1857 = vpop.f32.mrb[0].mxu0
  %v1858 = vadd.f32 0.0, %v1857
  %v1859 = vpop.f32.mrb[0].mxu0
  %1860 = vdwg.mxu0
  %v1861 = vld [vmem:[%s19] sm:$0xff]
  %v1862 = vld [vmem:[%s19 + $0x8] sm:$0xff]
  %v1863 = vld [vmem:[%s19 + $0x10] sm:$0xff]
  %v1864 = vld [vmem:[%s19 + $0x18] sm:$0xff]
  %v1865 = vld [vmem:[%s19 + $0x20] sm:$0xff]
  %v1866 = vld [vmem:[%s19 + $0x28] sm:$0xff]
  %v1867 = vld [vmem:[%s19 + $0x30] sm:$0xff]
  %v1868 = vld [vmem:[%s19 + $0x38] sm:$0xff]
  %v1869 = vld [vmem:[%s19 + $0x40] sm:$0xff]
  %v1870 = vld [vmem:[%s19 + $0x48] sm:$0xff]
  %v1871 = vld [vmem:[%s19 + $0x50] sm:$0xff]
  %v1872 = vld [vmem:[%s19 + $0x58] sm:$0xff]
  %v1873 = vld [vmem:[%s19 + $0x60] sm:$0xff]
  %v1874 = vld [vmem:[%s19 + $0x68] sm:$0xff]
  %v1875 = vld [vmem:[%s19 + $0x70] sm:$0xff]
  %v1876 = vld [vmem:[%s19 + $0x78] sm:$0xff]
  %v1877 = vld [vmem:[%s19 + $0x80] sm:$0xff]
  %v1878 = vld [vmem:[%s19 + $0x88] sm:$0xff]
  %v1879 = vld [vmem:[%s19 + $0x90] sm:$0xff]
  %v1880 = vld [vmem:[%s19 + $0x98] sm:$0xff]
  %v1881 = vld [vmem:[%s19 + $0xa0] sm:$0xff]
  %v1882 = vld [vmem:[%s19 + $0xa8] sm:$0xff]
  %v1883 = vld [vmem:[%s19 + $0xb0] sm:$0xff]
  %v1884 = vld [vmem:[%s19 + $0xb8] sm:$0xff]
  %v1885 = vld [vmem:[%s19 + $0xc0] sm:$0xff]
  %v1886 = vld [vmem:[%s19 + $0xc8] sm:$0xff]
  %v1887 = vld [vmem:[%s19 + $0xd0] sm:$0xff]
  %v1888 = vld [vmem:[%s19 + $0xd8] sm:$0xff]
  %v1889 = vld [vmem:[%s19 + $0xe0] sm:$0xff]
  %v1890 = vld [vmem:[%s19 + $0xe8] sm:$0xff]
  %v1891 = vld [vmem:[%s19 + $0xf0] sm:$0xff]
  %v1892 = vld [vmem:[%s19 + $0xf8] sm:$0xff]
  %v1893 = vld [vmem:[%s20] sm:$0x1]
  %v1895 = vlaneseq
  %v1896 = vshrl.u32 %v1895, 7
  %v1897 = vsub.s32 0, %v1896
  %v1898 = vrot.slane %v1893, %v1897
  %1900 = vmatprep.subr.mxu0 0.0
  %1901 = vmatpush1.msra.mxu0 %v1861
  %1902 = vmatprep.subr.mxu0 0.0
  %1903 = vmatpush1.msra.mxu0 %v1862
  %1904 = vmatprep.subr.mxu0 0.0
  %1905 = vmatpush1.msra.mxu0 %v1863
  %1906 = vmatprep.subr.mxu0 0.0
  %1907 = vmatpush1.msra.mxu0 %v1864
  %1908 = vmatprep.subr.mxu0 0.0
  %1909 = vmatpush1.msra.mxu0 %v1865
  %1910 = vmatprep.subr.mxu0 0.0
  %1911 = vmatpush1.msra.mxu0 %v1866
  %1912 = vmatprep.subr.mxu0 0.0
  %1913 = vmatpush1.msra.mxu0 %v1867
  %1914 = vmatprep.subr.mxu0 0.0
  %1915 = vmatpush1.msra.mxu0 %v1868
  %1916 = vmatprep.subr.mxu0 0.0
  %1917 = vmatpush1.msra.mxu0 %v1869
  %1918 = vmatprep.subr.mxu0 0.0
  %1919 = vmatpush1.msra.mxu0 %v1870
  %1920 = vmatprep.subr.mxu0 0.0
  %1921 = vmatpush1.msra.mxu0 %v1871
  %1922 = vmatprep.subr.mxu0 0.0
  %1923 = vmatpush1.msra.mxu0 %v1872
  %1924 = vmatprep.subr.mxu0 0.0
  %1925 = vmatpush1.msra.mxu0 %v1873
  %1926 = vmatprep.subr.mxu0 0.0
  %1927 = vmatpush1.msra.mxu0 %v1874
  %1928 = vmatprep.subr.mxu0 0.0
  %1929 = vmatpush1.msra.mxu0 %v1875
  %1930 = vmatprep.subr.mxu0 0.0
  %1931 = vmatpush1.msra.mxu0 %v1876
  %1932 = vmatprep.subr.mxu0 0.0
  %1933 = vmatpush1.msra.mxu0 %v1877
  %1934 = vmatprep.subr.mxu0 0.0
  %1935 = vmatpush1.msra.mxu0 %v1878
  %1936 = vmatprep.subr.mxu0 0.0
  %1937 = vmatpush1.msra.mxu0 %v1879
  %1938 = vmatprep.subr.mxu0 0.0
  %1939 = vmatpush1.msra.mxu0 %v1880
  %1940 = vmatprep.subr.mxu0 0.0
  %1941 = vmatpush1.msra.mxu0 %v1881
  %1942 = vmatprep.subr.mxu0 0.0
  %1943 = vmatpush1.msra.mxu0 %v1882
  %1944 = vmatprep.subr.mxu0 0.0
  %1945 = vmatpush1.msra.mxu0 %v1883
  %1946 = vmatprep.subr.mxu0 0.0
  %1947 = vmatpush1.msra.mxu0 %v1884
  %1948 = vmatprep.subr.mxu0 0.0
  %1949 = vmatpush1.msra.mxu0 %v1885
  %1950 = vmatprep.subr.mxu0 0.0
  %1951 = vmatpush1.msra.mxu0 %v1886
  %1952 = vmatprep.subr.mxu0 0.0
  %1953 = vmatpush1.msra.mxu0 %v1887
  %1954 = vmatprep.subr.mxu0 0.0
  %1955 = vmatpush1.msra.mxu0 %v1888
  %1956 = vmatprep.subr.mxu0 0.0
  %1957 = vmatpush1.msra.mxu0 %v1889
  %1958 = vmatprep.subr.mxu0 0.0
  %1959 = vmatpush1.msra.mxu0 %v1890
  %1960 = vmatprep.subr.mxu0 0.0
  %1961 = vmatpush1.msra.mxu0 %v1891
  %1962 = vmatprep.subr.mxu0 0.0
  %1963 = vmatpush1.msra.mxu0 %v1892
  %1964 = vmatprep.mubr.f32.mxu0 %v1853
  %1965 = vmatmul.mubr.f32.gmra.mrb[0].mxu0 %v1377
  %v1966 = vpop.f32.mrb[0].mxu0
  %v1967 = vadd.f32 %v1898, %v1966
  %v1968 = vpop.f32.mrb[0].mxu0
  %1969 = vmatprep.mubr.f32.mxu0 %v1858
  %1970 = vmatmul.mubr.f32.gmra.mrb[0].mxu0 %v1378
  %v1971 = vpop.f32.mrb[0].mxu0
  %v1972 = vadd.f32 %v1898, %v1971
  %v1973 = vpop.f32.mrb[0].mxu0
  %1974 = vdwg.mxu0
  %v1975 = vadd.f32 %v1776, %v1967
  %v1976 = vadd.f32 %v1777, %v1972
  %v1977 = vld [vmem:[%s6] sm:$0xff]
  %v1979 = vsel %vm590, %v1977, 0
  %1981 = vmatprep.subr.mxu0 0.0
  %1982 = vmatpush1.msra.mxu0 %v1379
  %1983 = vmatprep.subr.mxu0 0.0
  %1984 = vmatpush1.msra.mxu0 0.0
  %1985 = vmatprep.subr.mxu0 0.0
  %1986 = vmatpush1.msra.mxu0 0.0
  %1987 = vmatprep.subr.mxu0 0.0
  %1988 = vmatpush1.msra.mxu0 0.0
  %1989 = vmatprep.subr.mxu0 0.0
  %1990 = vmatpush1.msra.mxu0 0.0
  %1991 = vmatprep.subr.mxu0 0.0
  %1992 = vmatpush1.msra.mxu0 0.0
  %1993 = vmatprep.subr.mxu0 0.0
  %1994 = vmatpush1.msra.mxu0 0.0
  %1995 = vmatprep.subr.mxu0 0.0
  %1996 = vmatpush1.msra.mxu0 0.0
  %1997 = vmatprep.subr.mxu0 0.0
  %1998 = vmatpush1.msra.mxu0 0.0
  %1999 = vmatprep.subr.mxu0 0.0
  %2000 = vmatpush1.msra.mxu0 0.0
  %2001 = vmatprep.subr.mxu0 0.0
  %2002 = vmatpush1.msra.mxu0 0.0
  %2003 = vmatprep.subr.mxu0 0.0
  %2004 = vmatpush1.msra.mxu0 0.0
  %2005 = vmatprep.subr.mxu0 0.0
  %2006 = vmatpush1.msra.mxu0 0.0
  %2007 = vmatprep.subr.mxu0 0.0
  %2008 = vmatpush1.msra.mxu0 0.0
  %2009 = vmatprep.subr.mxu0 0.0
  %2010 = vmatpush1.msra.mxu0 0.0
  %2011 = vmatprep.subr.mxu0 0.0
  %2012 = vmatpush1.msra.mxu0 0.0
  %2013 = vmatprep.subr.mxu0 0.0
  %2014 = vmatpush1.msra.mxu0 0.0
  %2015 = vmatprep.subr.mxu0 0.0
  %2016 = vmatpush1.msra.mxu0 0.0
  %2017 = vmatprep.subr.mxu0 0.0
  %2018 = vmatpush1.msra.mxu0 0.0
  %2019 = vmatprep.subr.mxu0 0.0
  %2020 = vmatpush1.msra.mxu0 0.0
  %2021 = vmatprep.subr.mxu0 0.0
  %2022 = vmatpush1.msra.mxu0 0.0
  %2023 = vmatprep.subr.mxu0 0.0
  %2024 = vmatpush1.msra.mxu0 0.0
  %2025 = vmatprep.subr.mxu0 0.0
  %2026 = vmatpush1.msra.mxu0 0.0
  %2027 = vmatprep.subr.mxu0 0.0
  %2028 = vmatpush1.msra.mxu0 0.0
  %2029 = vmatprep.subr.mxu0 0.0
  %2030 = vmatpush1.msra.mxu0 0.0
  %2031 = vmatprep.subr.mxu0 0.0
  %2032 = vmatpush1.msra.mxu0 0.0
  %2033 = vmatprep.subr.mxu0 0.0
  %2034 = vmatpush1.msra.mxu0 0.0
  %2035 = vmatprep.subr.mxu0 0.0
  %2036 = vmatpush1.msra.mxu0 0.0
  %2037 = vmatprep.subr.mxu0 0.0
  %2038 = vmatpush1.msra.mxu0 0.0
  %2039 = vmatprep.subr.mxu0 0.0
  %2040 = vmatpush1.msra.mxu0 0.0
  %2041 = vmatprep.subr.mxu0 0.0
  %2042 = vmatpush1.msra.mxu0 0.0
  %2043 = vmatprep.subr.mxu0 0.0
  %2044 = vmatpush1.msra.mxu0 0.0
  %2045 = vmatprep.mubr.f32.mxu0 0.0
  %2046 = vmatmul.mubr.f32.gmra.mrb[0].mxu0 %v1979
  %v2047 = vpop.f32.mrb[0].mxu0
  %v2048 = vadd.f32 0.0, %v2047
  %v2049 = vpop.f32.mrb[0].mxu0
  %2050 = vdwg.mxu0
  %v2051 = vld [vmem:[%s21] sm:$0xff]
  %v2052 = vld [vmem:[%s21 + $0x8] sm:$0xff]
  %v2053 = vld [vmem:[%s21 + $0x10] sm:$0xff]
  %v2054 = vld [vmem:[%s21 + $0x18] sm:$0xff]
  %v2055 = vld [vmem:[%s21 + $0x20] sm:$0xff]
  %v2056 = vld [vmem:[%s21 + $0x28] sm:$0xff]
  %v2057 = vld [vmem:[%s21 + $0x30] sm:$0xff]
  %v2058 = vld [vmem:[%s21 + $0x38] sm:$0xff]
  %v2059 = vld [vmem:[%s21 + $0x40] sm:$0xff]
  %v2060 = vld [vmem:[%s21 + $0x48] sm:$0xff]
  %v2061 = vld [vmem:[%s21 + $0x50] sm:$0xff]
  %v2062 = vld [vmem:[%s21 + $0x58] sm:$0xff]
  %v2063 = vld [vmem:[%s21 + $0x60] sm:$0xff]
  %v2064 = vld [vmem:[%s21 + $0x68] sm:$0xff]
  %v2065 = vld [vmem:[%s21 + $0x70] sm:$0xff]
  %v2066 = vld [vmem:[%s21 + $0x78] sm:$0xff]
  %v2067 = vld [vmem:[%s21 + $0x80] sm:$0xff]
  %v2068 = vld [vmem:[%s21 + $0x88] sm:$0xff]
  %v2069 = vld [vmem:[%s21 + $0x90] sm:$0xff]
  %v2070 = vld [vmem:[%s21 + $0x98] sm:$0xff]
  %v2071 = vld [vmem:[%s21 + $0xa0] sm:$0xff]
  %v2072 = vld [vmem:[%s21 + $0xa8] sm:$0xff]
  %v2073 = vld [vmem:[%s21 + $0xb0] sm:$0xff]
  %v2074 = vld [vmem:[%s21 + $0xb8] sm:$0xff]
  %v2075 = vld [vmem:[%s21 + $0xc0] sm:$0xff]
  %v2076 = vld [vmem:[%s21 + $0xc8] sm:$0xff]
  %v2077 = vld [vmem:[%s21 + $0xd0] sm:$0xff]
  %v2078 = vld [vmem:[%s21 + $0xd8] sm:$0xff]
  %v2079 = vld [vmem:[%s21 + $0xe0] sm:$0xff]
  %v2080 = vld [vmem:[%s21 + $0xe8] sm:$0xff]
  %v2081 = vld [vmem:[%s21 + $0xf0] sm:$0xff]
  %v2082 = vld [vmem:[%s21 + $0xf8] sm:$0xff]
  %v2083 = vld [vmem:[%s22] sm:$0x1]
  %v2085 = vlaneseq
  %v2086 = vshrl.u32 %v2085, 7
  %v2087 = vsub.s32 0, %v2086
  %v2088 = vrot.slane %v2083, %v2087
  %2090 = vmatprep.subr.mxu0 0.0
  %2091 = vmatpush1.msra.mxu0 %v2051
  %2092 = vmatprep.subr.mxu0 0.0
  %2093 = vmatpush1.msra.mxu0 %v2052
  %2094 = vmatprep.subr.mxu0 0.0
  %2095 = vmatpush1.msra.mxu0 %v2053
  %2096 = vmatprep.subr.mxu0 0.0
  %2097 = vmatpush1.msra.mxu0 %v2054
  %2098 = vmatprep.subr.mxu0 0.0
  %2099 = vmatpush1.msra.mxu0 %v2055
  %2100 = vmatprep.subr.mxu0 0.0
  %2101 = vmatpush1.msra.mxu0 %v2056
  %2102 = vmatprep.subr.mxu0 0.0
  %2103 = vmatpush1.msra.mxu0 %v2057
  %2104 = vmatprep.subr.mxu0 0.0
  %2105 = vmatpush1.msra.mxu0 %v2058
  %2106 = vmatprep.subr.mxu0 0.0
  %2107 = vmatpush1.msra.mxu0 %v2059
  %2108 = vmatprep.subr.mxu0 0.0
  %2109 = vmatpush1.msra.mxu0 %v2060
  %2110 = vmatprep.subr.mxu0 0.0
  %2111 = vmatpush1.msra.mxu0 %v2061
  %2112 = vmatprep.subr.mxu0 0.0
  %2113 = vmatpush1.msra.mxu0 %v2062
  %2114 = vmatprep.subr.mxu0 0.0
  %2115 = vmatpush1.msra.mxu0 %v2063
  %2116 = vmatprep.subr.mxu0 0.0
  %2117 = vmatpush1.msra.mxu0 %v2064
  %2118 = vmatprep.subr.mxu0 0.0
  %2119 = vmatpush1.msra.mxu0 %v2065
  %2120 = vmatprep.subr.mxu0 0.0
  %2121 = vmatpush1.msra.mxu0 %v2066
  %2122 = vmatprep.subr.mxu0 0.0
  %2123 = vmatpush1.msra.mxu0 %v2067
  %2124 = vmatprep.subr.mxu0 0.0
  %2125 = vmatpush1.msra.mxu0 %v2068
  %2126 = vmatprep.subr.mxu0 0.0
  %2127 = vmatpush1.msra.mxu0 %v2069
  %2128 = vmatprep.subr.mxu0 0.0
  %2129 = vmatpush1.msra.mxu0 %v2070
  %2130 = vmatprep.subr.mxu0 0.0
  %2131 = vmatpush1.msra.mxu0 %v2071
  %2132 = vmatprep.subr.mxu0 0.0
  %2133 = vmatpush1.msra.mxu0 %v2072
  %2134 = vmatprep.subr.mxu0 0.0
  %2135 = vmatpush1.msra.mxu0 %v2073
  %2136 = vmatprep.subr.mxu0 0.0
  %2137 = vmatpush1.msra.mxu0 %v2074
  %2138 = vmatprep.subr.mxu0 0.0
  %2139 = vmatpush1.msra.mxu0 %v2075
  %2140 = vmatprep.subr.mxu0 0.0
  %2141 = vmatpush1.msra.mxu0 %v2076
  %2142 = vmatprep.subr.mxu0 0.0
  %2143 = vmatpush1.msra.mxu0 %v2077
  %2144 = vmatprep.subr.mxu0 0.0
  %2145 = vmatpush1.msra.mxu0 %v2078
  %2146 = vmatprep.subr.mxu0 0.0
  %2147 = vmatpush1.msra.mxu0 %v2079
  %2148 = vmatprep.subr.mxu0 0.0
  %2149 = vmatpush1.msra.mxu0 %v2080
  %2150 = vmatprep.subr.mxu0 0.0
  %2151 = vmatpush1.msra.mxu0 %v2081
  %2152 = vmatprep.subr.mxu0 0.0
  %2153 = vmatpush1.msra.mxu0 %v2082
  %2154 = vmatprep.mubr.f32.mxu0 %v2048
  %2155 = vmatmul.mubr.f32.gmra.mrb[0].mxu0 %v1379
  %v2156 = vpop.f32.mrb[0].mxu0
  %v2157 = vadd.f32 %v2088, %v2156
  %v2158 = vpop.f32.mrb[0].mxu0
  %2159 = vdwg.mxu0
  %v2160 = vld [vmem:[%s7] sm:$0xff]
  %v2161 = vld [vmem:[%s7 + $0x8] sm:$0xff]
  %v2163 = vsel %vm392, %v2160, 0
  %v2166 = vsel %vm392, %v2161, 0
  %2168 = vmatprep.subr.mxu0 0.0
  %2169 = vmatpush1.msra.mxu0 %v1380
  %2170 = vmatprep.subr.mxu0 0.0
  %2171 = vmatpush1.msra.mxu0 %v1381
  %2172 = vmatprep.subr.mxu0 0.0
  %2173 = vmatpush1.msra.mxu0 0.0
  %2174 = vmatprep.subr.mxu0 0.0
  %2175 = vmatpush1.msra.mxu0 0.0
  %2176 = vmatprep.subr.mxu0 0.0
  %2177 = vmatpush1.msra.mxu0 0.0
  %2178 = vmatprep.subr.mxu0 0.0
  %2179 = vmatpush1.msra.mxu0 0.0
  %2180 = vmatprep.subr.mxu0 0.0
  %2181 = vmatpush1.msra.mxu0 0.0
  %2182 = vmatprep.subr.mxu0 0.0
  %2183 = vmatpush1.msra.mxu0 0.0
  %2184 = vmatprep.subr.mxu0 0.0
  %2185 = vmatpush1.msra.mxu0 0.0
  %2186 = vmatprep.subr.mxu0 0.0
  %2187 = vmatpush1.msra.mxu0 0.0
  %2188 = vmatprep.subr.mxu0 0.0
  %2189 = vmatpush1.msra.mxu0 0.0
  %2190 = vmatprep.subr.mxu0 0.0
  %2191 = vmatpush1.msra.mxu0 0.0
  %2192 = vmatprep.subr.mxu0 0.0
  %2193 = vmatpush1.msra.mxu0 0.0
  %2194 = vmatprep.subr.mxu0 0.0
  %2195 = vmatpush1.msra.mxu0 0.0
  %2196 = vmatprep.subr.mxu0 0.0
  %2197 = vmatpush1.msra.mxu0 0.0
  %2198 = vmatprep.subr.mxu0 0.0
  %2199 = vmatpush1.msra.mxu0 0.0
  %2200 = vmatprep.subr.mxu0 0.0
  %2201 = vmatpush1.msra.mxu0 0.0
  %2202 = vmatprep.subr.mxu0 0.0
  %2203 = vmatpush1.msra.mxu0 0.0
  %2204 = vmatprep.subr.mxu0 0.0
  %2205 = vmatpush1.msra.mxu0 0.0
  %2206 = vmatprep.subr.mxu0 0.0
  %2207 = vmatpush1.msra.mxu0 0.0
  %2208 = vmatprep.subr.mxu0 0.0
  %2209 = vmatpush1.msra.mxu0 0.0
  %2210 = vmatprep.subr.mxu0 0.0
  %2211 = vmatpush1.msra.mxu0 0.0
  %2212 = vmatprep.subr.mxu0 0.0
  %2213 = vmatpush1.msra.mxu0 0.0
  %2214 = vmatprep.subr.mxu0 0.0
  %2215 = vmatpush1.msra.mxu0 0.0
  %2216 = vmatprep.subr.mxu0 0.0
  %2217 = vmatpush1.msra.mxu0 0.0
  %2218 = vmatprep.subr.mxu0 0.0
  %2219 = vmatpush1.msra.mxu0 0.0
  %2220 = vmatprep.subr.mxu0 0.0
  %2221 = vmatpush1.msra.mxu0 0.0
  %2222 = vmatprep.subr.mxu0 0.0
  %2223 = vmatpush1.msra.mxu0 0.0
  %2224 = vmatprep.subr.mxu0 0.0
  %2225 = vmatpush1.msra.mxu0 0.0
  %2226 = vmatprep.subr.mxu0 0.0
  %2227 = vmatpush1.msra.mxu0 0.0
  %2228 = vmatprep.subr.mxu0 0.0
  %2229 = vmatpush1.msra.mxu0 0.0
  %2230 = vmatprep.subr.mxu0 0.0
  %2231 = vmatpush1.msra.mxu0 0.0
  %2232 = vmatprep.mubr.f32.mxu0 0.0
  %2233 = vmatmul.mubr.f32.gmra.mrb[0].mxu0 %v2163
  %v2234 = vpop.f32.mrb[0].mxu0
  %v2235 = vadd.f32 0.0, %v2234
  %v2236 = vpop.f32.mrb[0].mxu0
  %2237 = vmatprep.mubr.f32.mxu0 0.0
  %2238 = vmatmul.mubr.f32.gmra.mrb[0].mxu0 %v2166
  %v2239 = vpop.f32.mrb[0].mxu0
  %v2240 = vadd.f32 0.0, %v2239
  %v2241 = vpop.f32.mrb[0].mxu0
  %2242 = vdwg.mxu0
  %v2243 = vld [vmem:[%s23] sm:$0xff]
  %v2244 = vld [vmem:[%s23 + $0x8] sm:$0xff]
  %v2245 = vld [vmem:[%s23 + $0x10] sm:$0xff]
  %v2246 = vld [vmem:[%s23 + $0x18] sm:$0xff]
  %v2247 = vld [vmem:[%s23 + $0x20] sm:$0xff]
  %v2248 = vld [vmem:[%s23 + $0x28] sm:$0xff]
  %v2249 = vld [vmem:[%s23 + $0x30] sm:$0xff]
  %v2250 = vld [vmem:[%s23 + $0x38] sm:$0xff]
  %v2251 = vld [vmem:[%s23 + $0x40] sm:$0xff]
  %v2252 = vld [vmem:[%s23 + $0x48] sm:$0xff]
  %v2253 = vld [vmem:[%s23 + $0x50] sm:$0xff]
  %v2254 = vld [vmem:[%s23 + $0x58] sm:$0xff]
  %v2255 = vld [vmem:[%s23 + $0x60] sm:$0xff]
  %v2256 = vld [vmem:[%s23 + $0x68] sm:$0xff]
  %v2257 = vld [vmem:[%s23 + $0x70] sm:$0xff]
  %v2258 = vld [vmem:[%s23 + $0x78] sm:$0xff]
  %v2259 = vld [vmem:[%s23 + $0x80] sm:$0xff]
  %v2260 = vld [vmem:[%s23 + $0x88] sm:$0xff]
  %v2261 = vld [vmem:[%s23 + $0x90] sm:$0xff]
  %v2262 = vld [vmem:[%s23 + $0x98] sm:$0xff]
  %v2263 = vld [vmem:[%s23 + $0xa0] sm:$0xff]
  %v2264 = vld [vmem:[%s23 + $0xa8] sm:$0xff]
  %v2265 = vld [vmem:[%s23 + $0xb0] sm:$0xff]
  %v2266 = vld [vmem:[%s23 + $0xb8] sm:$0xff]
  %v2267 = vld [vmem:[%s23 + $0xc0] sm:$0xff]
  %v2268 = vld [vmem:[%s23 + $0xc8] sm:$0xff]
  %v2269 = vld [vmem:[%s23 + $0xd0] sm:$0xff]
  %v2270 = vld [vmem:[%s23 + $0xd8] sm:$0xff]
  %v2271 = vld [vmem:[%s23 + $0xe0] sm:$0xff]
  %v2272 = vld [vmem:[%s23 + $0xe8] sm:$0xff]
  %v2273 = vld [vmem:[%s23 + $0xf0] sm:$0xff]
  %v2274 = vld [vmem:[%s23 + $0xf8] sm:$0xff]
  %v2275 = vld [vmem:[%s24] sm:$0x1]
  %v2277 = vlaneseq
  %v2278 = vshrl.u32 %v2277, 7
  %v2279 = vsub.s32 0, %v2278
  %v2280 = vrot.slane %v2275, %v2279
  %2282 = vmatprep.subr.mxu0 0.0
  %2283 = vmatpush1.msra.mxu0 %v2243
  %2284 = vmatprep.subr.mxu0 0.0
  %2285 = vmatpush1.msra.mxu0 %v2244
  %2286 = vmatprep.subr.mxu0 0.0
  %2287 = vmatpush1.msra.mxu0 %v2245
  %2288 = vmatprep.subr.mxu0 0.0
  %2289 = vmatpush1.msra.mxu0 %v2246
  %2290 = vmatprep.subr.mxu0 0.0
  %2291 = vmatpush1.msra.mxu0 %v2247
  %2292 = vmatprep.subr.mxu0 0.0
  %2293 = vmatpush1.msra.mxu0 %v2248
  %2294 = vmatprep.subr.mxu0 0.0
  %2295 = vmatpush1.msra.mxu0 %v2249
  %2296 = vmatprep.subr.mxu0 0.0
  %2297 = vmatpush1.msra.mxu0 %v2250
  %2298 = vmatprep.subr.mxu0 0.0
  %2299 = vmatpush1.msra.mxu0 %v2251
  %2300 = vmatprep.subr.mxu0 0.0
  %2301 = vmatpush1.msra.mxu0 %v2252
  %2302 = vmatprep.subr.mxu0 0.0
  %2303 = vmatpush1.msra.mxu0 %v2253
  %2304 = vmatprep.subr.mxu0 0.0
  %2305 = vmatpush1.msra.mxu0 %v2254
  %2306 = vmatprep.subr.mxu0 0.0
  %2307 = vmatpush1.msra.mxu0 %v2255
  %2308 = vmatprep.subr.mxu0 0.0
  %2309 = vmatpush1.msra.mxu0 %v2256
  %2310 = vmatprep.subr.mxu0 0.0
  %2311 = vmatpush1.msra.mxu0 %v2257
  %2312 = vmatprep.subr.mxu0 0.0
  %2313 = vmatpush1.msra.mxu0 %v2258
  %2314 = vmatprep.subr.mxu0 0.0
  %2315 = vmatpush1.msra.mxu0 %v2259
  %2316 = vmatprep.subr.mxu0 0.0
  %2317 = vmatpush1.msra.mxu0 %v2260
  %2318 = vmatprep.subr.mxu0 0.0
  %2319 = vmatpush1.msra.mxu0 %v2261
  %2320 = vmatprep.subr.mxu0 0.0
  %2321 = vmatpush1.msra.mxu0 %v2262
  %2322 = vmatprep.subr.mxu0 0.0
  %2323 = vmatpush1.msra.mxu0 %v2263
  %2324 = vmatprep.subr.mxu0 0.0
  %2325 = vmatpush1.msra.mxu0 %v2264
  %2326 = vmatprep.subr.mxu0 0.0
  %2327 = vmatpush1.msra.mxu0 %v2265
  %2328 = vmatprep.subr.mxu0 0.0
  %2329 = vmatpush1.msra.mxu0 %v2266
  %2330 = vmatprep.subr.mxu0 0.0
  %2331 = vmatpush1.msra.mxu0 %v2267
  %2332 = vmatprep.subr.mxu0 0.0
  %2333 = vmatpush1.msra.mxu0 %v2268
  %2334 = vmatprep.subr.mxu0 0.0
  %2335 = vmatpush1.msra.mxu0 %v2269
  %2336 = vmatprep.subr.mxu0 0.0
  %2337 = vmatpush1.msra.mxu0 %v2270
  %2338 = vmatprep.subr.mxu0 0.0
  %2339 = vmatpush1.msra.mxu0 %v2271
  %2340 = vmatprep.subr.mxu0 0.0
  %2341 = vmatpush1.msra.mxu0 %v2272
  %2342 = vmatprep.subr.mxu0 0.0
  %2343 = vmatpush1.msra.mxu0 %v2273
  %2344 = vmatprep.subr.mxu0 0.0
  %2345 = vmatpush1.msra.mxu0 %v2274
  %2346 = vmatprep.mubr.f32.mxu0 %v2235
  %2347 = vmatmul.mubr.f32.gmra.mrb[0].mxu0 %v1380
  %v2348 = vpop.f32.mrb[0].mxu0
  %v2349 = vadd.f32 %v2280, %v2348
  %v2350 = vpop.f32.mrb[0].mxu0
  %2351 = vmatprep.mubr.f32.mxu0 %v2240
  %2352 = vmatmul.mubr.f32.gmra.mrb[0].mxu0 %v1381
  %v2353 = vpop.f32.mrb[0].mxu0
  %v2354 = vadd.f32 %v2280, %v2353
  %v2355 = vpop.f32.mrb[0].mxu0
  %2356 = vdwg.mxu0
  %v2357 = vmax.f32 %v1975, 0.0
  %v2358 = vmax.f32 %v1976, 0.0
  %2359 = vst [vmem:[#allocation2] sm:$0xff] %v2357
  %2360 = vst [vmem:[#allocation2 + $0x8] sm:$0xff] %v2358
  %v2361 = vmax.f32 %v2157, 0.0
  %2362 = vst [vmem:[#allocation3] sm:$0xff] %v2361
  %v2363 = vmax.f32 %v2349, 0.0
  %v2364 = vmax.f32 %v2354, 0.0
  %2365 = vst [vmem:[#allocation4] sm:$0xff] %v2363
  %2366 = vst [vmem:[#allocation4 + $0x8] sm:$0xff] %v2364
  %v2367 = vld [vmem:[%s8] sm:$0xff]
  %v2368 = vld [vmem:[#allocation2] sm:$0xff]
  %v2369 = vld [vmem:[#allocation2 + $0x8] sm:$0xff]
  %v2371 = vsel %vm392, %v2367, 0
  %2373 = vmatprep.subr.mxu0 0.0
  %2374 = vmatpush1.msra.mxu0 %v2368
  %2375 = vmatprep.subr.mxu0 0.0
  %2376 = vmatpush1.msra.mxu0 %v2369
  %2377 = vmatprep.subr.mxu0 0.0
  %2378 = vmatpush1.msra.mxu0 0.0
  %2379 = vmatprep.subr.mxu0 0.0
  %2380 = vmatpush1.msra.mxu0 0.0
  %2381 = vmatprep.subr.mxu0 0.0
  %2382 = vmatpush1.msra.mxu0 0.0
  %2383 = vmatprep.subr.mxu0 0.0
  %2384 = vmatpush1.msra.mxu0 0.0
  %2385 = vmatprep.subr.mxu0 0.0
  %2386 = vmatpush1.msra.mxu0 0.0
  %2387 = vmatprep.subr.mxu0 0.0
  %2388 = vmatpush1.msra.mxu0 0.0
  %2389 = vmatprep.subr.mxu0 0.0
  %2390 = vmatpush1.msra.mxu0 0.0
  %2391 = vmatprep.subr.mxu0 0.0
  %2392 = vmatpush1.msra.mxu0 0.0
  %2393 = vmatprep.subr.mxu0 0.0
  %2394 = vmatpush1.msra.mxu0 0.0
  %2395 = vmatprep.subr.mxu0 0.0
  %2396 = vmatpush1.msra.mxu0 0.0
  %2397 = vmatprep.subr.mxu0 0.0
  %2398 = vmatpush1.msra.mxu0 0.0
  %2399 = vmatprep.subr.mxu0 0.0
  %2400 = vmatpush1.msra.mxu0 0.0
  %2401 = vmatprep.subr.mxu0 0.0
  %2402 = vmatpush1.msra.mxu0 0.0
  %2403 = vmatprep.subr.mxu0 0.0
  %2404 = vmatpush1.msra.mxu0 0.0
  %2405 = vmatprep.subr.mxu0 0.0
  %2406 = vmatpush1.msra.mxu0 0.0
  %2407 = vmatprep.subr.mxu0 0.0
  %2408 = vmatpush1.msra.mxu0 0.0
  %2409 = vmatprep.subr.mxu0 0.0
  %2410 = vmatpush1.msra.mxu0 0.0
  %2411 = vmatprep.subr.mxu0 0.0
  %2412 = vmatpush1.msra.mxu0 0.0
  %2413 = vmatprep.subr.mxu0 0.0
  %2414 = vmatpush1.msra.mxu0 0.0
  %2415 = vmatprep.subr.mxu0 0.0
  %2416 = vmatpush1.msra.mxu0 0.0
  %2417 = vmatprep.subr.mxu0 0.0
  %2418 = vmatpush1.msra.mxu0 0.0
  %2419 = vmatprep.subr.mxu0 0.0
  %2420 = vmatpush1.msra.mxu0 0.0
  %2421 = vmatprep.subr.mxu0 0.0
  %2422 = vmatpush1.msra.mxu0 0.0
  %2423 = vmatprep.subr.mxu0 0.0
  %2424 = vmatpush1.msra.mxu0 0.0
  %2425 = vmatprep.subr.mxu0 0.0
  %2426 = vmatpush1.msra.mxu0 0.0
  %2427 = vmatprep.subr.mxu0 0.0
  %2428 = vmatpush1.msra.mxu0 0.0
  %2429 = vmatprep.subr.mxu0 0.0
  %2430 = vmatpush1.msra.mxu0 0.0
  %2431 = vmatprep.subr.mxu0 0.0
  %2432 = vmatpush1.msra.mxu0 0.0
  %2433 = vmatprep.subr.mxu0 0.0
  %2434 = vmatpush1.msra.mxu0 0.0
  %2435 = vmatprep.subr.mxu0 0.0
  %2436 = vmatpush1.msra.mxu0 0.0
  %2437 = vmatprep.mubr.f32.mxu0 0.0
  %2438 = vmatmul.mubr.f32.gmra.mrb[0].mxu0 %v2371
  %v2439 = vpop.f32.mrb[0].mxu0
  %v2440 = vadd.f32 0.0, %v2439
  %v2441 = vpop.f32.mrb[0].mxu0
  %2442 = vdwg.mxu0
  %v2443 = vld [vmem:[%s25] sm:$0xff]
  %v2444 = vld [vmem:[%s25 + $0x8] sm:$0xff]
  %v2445 = vld [vmem:[%s25 + $0x10] sm:$0xff]
  %v2446 = vld [vmem:[%s25 + $0x18] sm:$0xff]
  %v2447 = vld [vmem:[%s25 + $0x20] sm:$0xff]
  %v2448 = vld [vmem:[%s25 + $0x28] sm:$0xff]
  %v2449 = vld [vmem:[%s25 + $0x30] sm:$0xff]
  %v2450 = vld [vmem:[%s25 + $0x38] sm:$0xff]
  %v2451 = vld [vmem:[%s25 + $0x40] sm:$0xff]
  %v2452 = vld [vmem:[%s25 + $0x48] sm:$0xff]
  %v2453 = vld [vmem:[%s25 + $0x50] sm:$0xff]
  %v2454 = vld [vmem:[%s25 + $0x58] sm:$0xff]
  %v2455 = vld [vmem:[%s25 + $0x60] sm:$0xff]
  %v2456 = vld [vmem:[%s25 + $0x68] sm:$0xff]
  %v2457 = vld [vmem:[%s25 + $0x70] sm:$0xff]
  %v2458 = vld [vmem:[%s25 + $0x78] sm:$0xff]
  %v2459 = vld [vmem:[%s26] sm:$0x1]
  %v2461 = vlaneseq
  %v2462 = vshrl.u32 %v2461, 7
  %v2463 = vsub.s32 0, %v2462
  %v2464 = vrot.slane %v2459, %v2463
  %2466 = vmatprep.subr.mxu0 0.0
  %2467 = vmatpush1.msra.mxu0 %v2443
  %2468 = vmatprep.subr.mxu0 0.0
  %2469 = vmatpush1.msra.mxu0 %v2444
  %2470 = vmatprep.subr.mxu0 0.0
  %2471 = vmatpush1.msra.mxu0 %v2445
  %2472 = vmatprep.subr.mxu0 0.0
  %2473 = vmatpush1.msra.mxu0 %v2446
  %2474 = vmatprep.subr.mxu0 0.0
  %2475 = vmatpush1.msra.mxu0 %v2447
  %2476 = vmatprep.subr.mxu0 0.0
  %2477 = vmatpush1.msra.mxu0 %v2448
  %2478 = vmatprep.subr.mxu0 0.0
  %2479 = vmatpush1.msra.mxu0 %v2449
  %2480 = vmatprep.subr.mxu0 0.0
  %2481 = vmatpush1.msra.mxu0 %v2450
  %2482 = vmatprep.subr.mxu0 0.0
  %2483 = vmatpush1.msra.mxu0 %v2451
  %2484 = vmatprep.subr.mxu0 0.0
  %2485 = vmatpush1.msra.mxu0 %v2452
  %2486 = vmatprep.subr.mxu0 0.0
  %2487 = vmatpush1.msra.mxu0 %v2453
  %2488 = vmatprep.subr.mxu0 0.0
  %2489 = vmatpush1.msra.mxu0 %v2454
  %2490 = vmatprep.subr.mxu0 0.0
  %2491 = vmatpush1.msra.mxu0 %v2455
  %2492 = vmatprep.subr.mxu0 0.0
  %2493 = vmatpush1.msra.mxu0 %v2456
  %2494 = vmatprep.subr.mxu0 0.0
  %2495 = vmatpush1.msra.mxu0 %v2457
  %2496 = vmatprep.subr.mxu0 0.0
  %2497 = vmatpush1.msra.mxu0 %v2458
  %2498 = vmatprep.subr.mxu0 0.0
  %2499 = vmatpush1.msra.mxu0 0.0
  %2500 = vmatprep.subr.mxu0 0.0
  %2501 = vmatpush1.msra.mxu0 0.0
  %2502 = vmatprep.subr.mxu0 0.0
  %2503 = vmatpush1.msra.mxu0 0.0
  %2504 = vmatprep.subr.mxu0 0.0
  %2505 = vmatpush1.msra.mxu0 0.0
  %2506 = vmatprep.subr.mxu0 0.0
  %2507 = vmatpush1.msra.mxu0 0.0
  %2508 = vmatprep.subr.mxu0 0.0
  %2509 = vmatpush1.msra.mxu0 0.0
  %2510 = vmatprep.subr.mxu0 0.0
  %2511 = vmatpush1.msra.mxu0 0.0
  %2512 = vmatprep.subr.mxu0 0.0
  %2513 = vmatpush1.msra.mxu0 0.0
  %2514 = vmatprep.subr.mxu0 0.0
  %2515 = vmatpush1.msra.mxu0 0.0
  %2516 = vmatprep.subr.mxu0 0.0
  %2517 = vmatpush1.msra.mxu0 0.0
  %2518 = vmatprep.subr.mxu0 0.0
  %2519 = vmatpush1.msra.mxu0 0.0
  %2520 = vmatprep.subr.mxu0 0.0
  %2521 = vmatpush1.msra.mxu0 0.0
  %2522 = vmatprep.subr.mxu0 0.0
  %2523 = vmatpush1.msra.mxu0 0.0
  %2524 = vmatprep.subr.mxu0 0.0
  %2525 = vmatpush1.msra.mxu0 0.0
  %2526 = vmatprep.subr.mxu0 0.0
  %2527 = vmatpush1.msra.mxu0 0.0
  %2528 = vmatprep.subr.mxu0 0.0
  %2529 = vmatpush1.msra.mxu0 0.0
  %2530 = vmatprep.mubr.f32.mxu0 0.0
  %2531 = vmatmul.mubr.f32.gmra.mrb[0].mxu0 %v2440
  %v2532 = vpop.f32.mrb[0].mxu0
  %v2533 = vadd.f32 %v2464, %v2532
  %v2534 = vpop.f32.mrb[0].mxu0
  %2535 = vdwg.mxu0
  %2536 = vst [vmem:[%s27] sm:$0xff] %v2533
  // Predicated region
  $region110: #{hetero_forward.1} parent=0 // pred_check
    _
  $region111: #{hetero_forward.1} parent=0 // pred_check_branch
    %2538 = sbr.rel (0) target = $region113
  $region112: #{hetero_forward.1} parent=0 // pred_region
    _
  $region113: #{hetero_forward.1} parent=0 // pred_fallthru
    _
  // Predicated region
  $region114: #{hetero_forward.1} parent=0 // pred_check
    _
  $region115: #{hetero_forward.1} parent=0 // pred_check_branch
    %2540 = sbr.rel (0) target = $region117
  $region116: #{hetero_forward.1} parent=0 // pred_region
    _
  $region117: #{hetero_forward.1} parent=0 // pred_fallthru
    _

</llo_original>
